<compile_context>
chip_gen: v7x
topology: tpu7x:2x2x1
jax: 0.10.0
libtpu: 0.0.40
codegen_flags: <defaults>
</compile_context>

<pallas_src>
import functools

import jax
import jax.numpy as jnp
from jax.experimental import pallas as pl
from jax.experimental.pallas import tpu as pltpu


def _layer_norm(v, w, b, eps=1e-6):
    # TODO(synk): eps=1e-6 matches timm ViT; plain nn.LayerNorm default is 1e-5.
    mu = jnp.mean(v, axis=-1, keepdims=True)
    var = jnp.mean((v - mu) ** 2, axis=-1, keepdims=True)
    return (v - mu) * jax.lax.rsqrt(var + eps) * w + b


def _encoder_kernel(x_ref, ln1_w_ref, ln1_b_ref, qkv_w_ref, qkv_b_ref,
                    projw_ref, proj_b_ref, ln2_w_ref, ln2_b_ref,
                    fc1_w_ref, fc1_b_ref, fc2_w_ref, fc2_b_ref, gate_tanh_ref,
                    hidden_ref, attn_ref, *, num_heads, head_group):
    f32 = jnp.float32
    bf16 = jnp.bfloat16

    x = x_ref[0]                                   # (N, D) fp32
    n, dm = x.shape
    dh = dm // num_heads

    # ---- Attention branch --------------------------------------------------
    h = _layer_norm(x, ln1_w_ref[...], ln1_b_ref[...])        # fp32 stats
    # Single full-width QKV matmul (bf16 MXU feed, fp32 accumulate); one
    # downcast of the whole (N, 3D) activation. Q columns/bias pre-scaled by
    # 1/sqrt(dh) in the wrapper.
    qkv = (jnp.dot(h.astype(bf16), qkv_w_ref[...], preferred_element_type=f32)
           + qkv_b_ref[...]).astype(bf16)                     # (N, 3D) bf16

    attn_acc = jnp.zeros((n, dm), f32)             # projected attention output
    cls_row = jnp.zeros((1, n), f32)               # head-summed CLS attention row

    # Lane-aligned head groups (head_group*dh lanes per slice); small bounded
    # Python loop (typically <= num_heads/4 iterations).
    for g0 in range(0, num_heads, head_group):
        gsz = head_group
        lo = g0 * dh
        hi = lo + gsz * dh
        # (N, G*dh) lane-dense slices -> (N, G, dh): one relayout per group
        # instead of three per head.
        q = qkv[:, lo:hi].reshape(n, gsz, dh)
        k = qkv[:, dm + lo:dm + hi].reshape(n, gsz, dh)
        v = qkv[:, 2 * dm + lo:2 * dm + hi].reshape(n, gsz, dh)

        # Batched-over-heads QK^T with fp32 accumulation.
        s = jnp.einsum('qgd,kgd->gqk', q, k, preferred_element_type=f32)
        s_max = jnp.max(s, axis=-1, keepdims=True)
        e = jnp.exp(s - s_max)
        denom = jnp.sum(e, axis=-1, keepdims=True)

        # Exact divide for the returned CLS attention row (only G*N elements).
        cls_row = cls_row + jnp.sum(e[:, 0, :] / denom[:, 0, :],
                                    axis=0, keepdims=True)

        # Approx reciprocal (EUP slot) for the bulk softmax feeding the context.
        p = (e * pl.reciprocal(denom, approx=True)).astype(bf16)

        ctx = jnp.einsum('gqk,kgd->gqd', p, v,
                         preferred_element_type=f32)          # (G, N, dh) fp32

        # Contract each head's context with its slice of the projection weight:
        # full-D lane-dense MXU output, no ctx slab / masked sub-lane stores.
        pw = projw_ref[g0:g0 + gsz]                           # (G, dh, D) bf16
        po = jnp.einsum('gqd,gde->gqe', ctx.astype(bf16), pw,
                        preferred_element_type=f32)           # (G, N, D) fp32
        attn_acc = attn_acc + jnp.sum(po, axis=0)

    attn_ref[0] = cls_row * (1.0 / num_heads)                 # (1, N) lane-dense

    x = x + attn_acc + proj_b_ref[...]                        # residual

    # ---- MLP branch --------------------------------------------------------
    h2 = _layer_norm(x, ln2_w_ref[...], ln2_b_ref[...])
    m = jnp.dot(h2.astype(bf16), fc1_w_ref[...],
                preferred_element_type=f32) + fc1_b_ref[...]
    # TODO(synk): PyTorch nn.GELU uses the exact erf form; tanh approximation
    # used here for robust TPU lowering.
    m = jax.nn.gelu(m, approximate=True).astype(bf16)         # (N, 4D) held bf16
    y = jnp.dot(m, fc2_w_ref[...], preferred_element_type=f32) + fc2_b_ref[...]
    x = x + y                                                  # residual

    # ---- gate (tanh precomputed in wrapper; Dropout/DropPath == identity) ---
    # TODO(synk): could emit hidden in bf16 for v5e HBM-bandwidth savings if
    # downstream consumers allow.
    hidden_ref[0] = x + gate_tanh_ref[...]


def vision_encoder_layer(inputs, params, *, num_heads=8, head_group=None):
    """JAX/Pallas equivalent of VisionEncoderLayer.forward (use_van_attn=False)."""
    x = inputs['visual']['hidden']                 # (B, N, D), N = 1 + num_patches
    B, N, D = x.shape
    assert D % num_heads == 0
    dh = D // num_heads

    # Head-group size: aim for ~256 output lanes per group (v6e/v7x MXU width);
    # degrades gracefully (e.g. 2 heads at dh=64 would still be fine on v5e).
    if head_group is None:
        head_group = min(num_heads, max(1, 256 // dh))
    while num_heads % head_group:
        head_group -= 1

    f32, bf16 = jnp.float32, jnp.bfloat16
    scale = dh ** -0.5

    # Fold 1/sqrt(dh) into the Q columns of the qkv weight AND bias (prep-time, free).
    qkv_w = params['qkv_w'].astype(f32).at[:, :D].multiply(scale).astype(bf16)
    qkv_b = params['qkv_b'].astype(f32).at[:, :D].multiply(scale)

    # Per-head view of the projection weight: (H, dh, D).
    proj_w = params['proj_w'].astype(bf16).reshape(num_heads, dh, D)

    # Hoist tanh(gate) out of the kernel (computed once, not per grid step).
    gate_tanh = jnp.tanh(params['gate'].astype(f32))           # (1, D)

    weight_args = (
        params['ln1_w'], params['ln1_b'], qkv_w, qkv_b,
        proj_w, params['proj_b'], params['ln2_w'], params['ln2_b'],
        params['fc1_w'].astype(bf16), params['fc1_b'],
        params['fc2_w'].astype(bf16), params['fc2_b'], gate_tanh,
    )

    def rep_spec(arr):
        # Grid-invariant block: same block index every step -> fetched once.
        zeros = (0,) * arr.ndim
        imap = lambda b, _z=zeros: _z
        try:    # single-buffer resident weights (default double-buffering wastes VMEM)
            return pl.BlockSpec(arr.shape, imap, pipeline_mode=pl.Buffered(1))
        except TypeError:   # older jax without pipeline_mode kwarg
            return pl.BlockSpec(arr.shape, imap)

    # Generation-aware VMEM budget: <=64 MiB on 128-MiB parts (v5e/v6e),
    # ~48 MiB on the 64-MiB v7x.
    try:
        cap = int(pltpu.get_tpu_info().vmem_capacity_bytes)
        vmem_limit = int(min(64 * 1024 * 1024, cap * 3 // 4))
    except Exception:
        vmem_limit = 48 * 1024 * 1024

    # Advisory cost estimate for XLA scheduling around the custom call.
    flops = int(B * (24 * N * D * D + 4 * N * N * D))
    transcendentals = int(B * (num_heads * N * N + 5 * N * D))
    bytes_accessed = int(
        x.size * x.dtype.itemsize + B * N * D * 4 + B * N * 4
        + sum(int(w.size) * w.dtype.itemsize for w in weight_args))
    cost = pl.CostEstimate(flops=flops, transcendentals=transcendentals,
                           bytes_accessed=bytes_accessed)

    # TODO(synk): on v7x (2 TensorCores) with B<=2, add a second "parallel" grid
    # axis (head groups or N tiles), and for very large N (ViT-L, N=577) tile
    # the attention flash-style to cap the (G,N,N) score buffer.
    hidden, attn_row = pl.pallas_call(
        functools.partial(_encoder_kernel, num_heads=num_heads,
                          head_group=head_group),
        grid=(B,),
        in_specs=[pl.BlockSpec((1, N, D), lambda b: (b, 0, 0))]
                 + [rep_spec(w) for w in weight_args],
        out_specs=(pl.BlockSpec((1, N, D), lambda b: (b, 0, 0)),
                   pl.BlockSpec((1, 1, N), lambda b: (b, 0, 0))),
        out_shape=(jax.ShapeDtypeStruct((B, N, D), jnp.float32),
                   jax.ShapeDtypeStruct((B, 1, N), jnp.float32)),
        compiler_params=pltpu.CompilerParams(
            dimension_semantics=("parallel",),
            vmem_limit_bytes=vmem_limit),
        cost_estimate=cost,
    )(x, *weight_args)

    last_attn = attn_row[:, 0, 1:]                 # drop CLS->CLS column -> (B, N-1)
    visual = {
        'global': hidden[:, 0],
        'local': hidden[:, 1:],
        'hidden': hidden,
        'last_attn': last_attn,
    }
    return {'visual': visual, 'lang': inputs['lang']}


def init_params(key, embed_dim):
    D = embed_dim
    ks = jax.random.split(key, 5)
    std = 0.02
    # Matmul weights stored bf16 (MXU-native); LayerNorm params, biases and the
    # gate stay fp32.
    return {
        'ln1_w': jnp.ones((1, D), jnp.float32),
        'ln1_b': jnp.zeros((1, D), jnp.float32),
        'qkv_w': (jax.random.normal(ks[0], (D, 3 * D)) * std).astype(jnp.bfloat16),
        'qkv_b': jnp.zeros((1, 3 * D), jnp.float32),
        'proj_w': (jax.random.normal(ks[1], (D, D)) * std).astype(jnp.bfloat16),
        'proj_b': jnp.zeros((1, D), jnp.float32),
        'ln2_w': jnp.ones((1, D), jnp.float32),
        'ln2_b': jnp.zeros((1, D), jnp.float32),
        'fc1_w': (jax.random.normal(ks[2], (D, 4 * D)) * std).astype(jnp.bfloat16),
        'fc1_b': jnp.zeros((1, 4 * D), jnp.float32),
        'fc2_w': (jax.random.normal(ks[3], (4 * D, D)) * std).astype(jnp.bfloat16),
        'fc2_b': jnp.zeros((1, D), jnp.float32),
        # gate: nn.Parameter(zeros(1,1,D)) + trunc_normal_(std=0.02) -> small random
        'gate': (jax.random.normal(ks[4], (1, D)) * std).astype(jnp.float32),
    }


if __name__ == "__main__":
    # Small but lane-friendly config: dh = 64 (ViT-typical head dim), N = 17.
    B, patch_num, D, H = 2, 4, 256, 4
    N = 1 + patch_num * patch_num

    key = jax.random.PRNGKey(0)
    k_x, k_p = jax.random.split(key)
    x = jax.random.normal(k_x, (B, N, D), jnp.float32)
    params = init_params(k_p, D)

    inputs = {'visual': {'hidden': x},
              'lang': {'hidden': jnp.zeros((B, 8, D), jnp.float32)}}
    out = vision_encoder_layer(inputs, params, num_heads=H)

    jax.block_until_ready(out['visual']['hidden'])
    jax.block_until_ready(out['visual']['last_attn'])

    assert out['visual']['global'].shape == (B, D)
    assert out['visual']['local'].shape == (B, N - 1, D)
    assert out['visual']['hidden'].shape == (B, N, D)
    assert out['visual']['last_attn'].shape == (B, N - 1)
    print("KERNEL_OK")
</pallas_src>

<mosaic_0001>
module attributes {stable_mosaic.version = 11 : i64} {
  func.func @_encoder_kernel(%arg0: i32, %arg1: memref<1x17x256xf32, #tpu.memory_space<vmem>>, %arg2: memref<1x256xf32, #tpu.memory_space<vmem>>, %arg3: memref<1x256xf32, #tpu.memory_space<vmem>>, %arg4: memref<256x768xbf16, #tpu.memory_space<vmem>>, %arg5: memref<1x768xf32, #tpu.memory_space<vmem>>, %arg6: memref<4x64x256xbf16, #tpu.memory_space<vmem>>, %arg7: memref<1x256xf32, #tpu.memory_space<vmem>>, %arg8: memref<1x256xf32, #tpu.memory_space<vmem>>, %arg9: memref<1x256xf32, #tpu.memory_space<vmem>>, %arg10: memref<256x1024xbf16, #tpu.memory_space<vmem>>, %arg11: memref<1x1024xf32, #tpu.memory_space<vmem>>, %arg12: memref<1024x256xbf16, #tpu.memory_space<vmem>>, %arg13: memref<1x256xf32, #tpu.memory_space<vmem>>, %arg14: memref<1x256xf32, #tpu.memory_space<vmem>>, %arg15: memref<1x17x256xf32, #tpu.memory_space<vmem>>, %arg16: memref<1x1x17xf32, #tpu.memory_space<vmem>>) attributes {dimension_semantics = [#tpu.dimension_semantics<parallel>], iteration_bounds = array<i64: 2>, scalar_prefetch = 0 : i64, scratch_operands = 0 : i64, tpu.core_type = #tpu.core_type<tc>, window_params = [{transform_indices = @transform_0, window_bounds = array<i64: 1, 17, 256>}, {pipeline_mode = #tpu.pipeline_mode<synchronous>, transform_indices = @transform_1, window_bounds = array<i64: 1, 256>}, {pipeline_mode = #tpu.pipeline_mode<synchronous>, transform_indices = @transform_2, window_bounds = array<i64: 1, 256>}, {pipeline_mode = #tpu.pipeline_mode<synchronous>, transform_indices = @transform_3, window_bounds = array<i64: 256, 768>}, {pipeline_mode = #tpu.pipeline_mode<synchronous>, transform_indices = @transform_4, window_bounds = array<i64: 1, 768>}, {pipeline_mode = #tpu.pipeline_mode<synchronous>, transform_indices = @transform_5, window_bounds = array<i64: 4, 64, 256>}, {pipeline_mode = #tpu.pipeline_mode<synchronous>, transform_indices = @transform_6, window_bounds = array<i64: 1, 256>}, {pipeline_mode = #tpu.pipeline_mode<synchronous>, transform_indices = @transform_7, window_bounds = array<i64: 1, 256>}, {pipeline_mode = #tpu.pipeline_mode<synchronous>, transform_indices = @transform_8, window_bounds = array<i64: 1, 256>}, {pipeline_mode = #tpu.pipeline_mode<synchronous>, transform_indices = @transform_9, window_bounds = array<i64: 256, 1024>}, {pipeline_mode = #tpu.pipeline_mode<synchronous>, transform_indices = @transform_10, window_bounds = array<i64: 1, 1024>}, {pipeline_mode = #tpu.pipeline_mode<synchronous>, transform_indices = @transform_11, window_bounds = array<i64: 1024, 256>}, {pipeline_mode = #tpu.pipeline_mode<synchronous>, transform_indices = @transform_12, window_bounds = array<i64: 1, 256>}, {pipeline_mode = #tpu.pipeline_mode<synchronous>, transform_indices = @transform_13, window_bounds = array<i64: 1, 256>}, {transform_indices = @transform_14, window_bounds = array<i64: 1, 17, 256>}, {transform_indices = @transform_15, window_bounds = array<i64: 1, 1, 17>}]} {
    %c0 = arith.constant 0 : index
    %c0_0 = arith.constant 0 : index
    %c0_1 = arith.constant 0 : index
    %0 = vector.load %arg1[%c0, %c0_0, %c0_1] : memref<1x17x256xf32, #tpu.memory_space<vmem>>, vector<1x17x256xf32>
    %1 = vector.shape_cast %0 : vector<1x17x256xf32> to vector<17x256xf32>
    %c0_2 = arith.constant 0 : index
    %c0_3 = arith.constant 0 : index
    %2 = vector.load %arg2[%c0_2, %c0_3] : memref<1x256xf32, #tpu.memory_space<vmem>>, vector<1x256xf32>
    %c0_4 = arith.constant 0 : index
    %c0_5 = arith.constant 0 : index
    %3 = vector.load %arg3[%c0_4, %c0_5] : memref<1x256xf32, #tpu.memory_space<vmem>>, vector<1x256xf32>
    %cst = arith.constant dense<0.000000e+00> : vector<17xf32>
    %4 = vector.multi_reduction <add>, %1, %cst [1] : vector<17x256xf32> to vector<17xf32>
    %5 = vector.shape_cast %4 : vector<17xf32> to vector<17x1xf32>
    %cst_6 = arith.constant 2.560000e+02 : f32
    %6 = vector.broadcast %cst_6 : f32 to vector<17x1xf32>
    %7 = arith.divf %5, %6 : vector<17x1xf32>
    %8 = vector.broadcast %7 : vector<17x1xf32> to vector<17x256xf32>
    %9 = arith.subf %1, %8 : vector<17x256xf32>
    %10 = arith.mulf %9, %9 : vector<17x256xf32>
    %cst_7 = arith.constant dense<0.000000e+00> : vector<17xf32>
    %11 = vector.multi_reduction <add>, %10, %cst_7 [1] : vector<17x256xf32> to vector<17xf32>
    %12 = vector.shape_cast %11 : vector<17xf32> to vector<17x1xf32>
    %cst_8 = arith.constant 2.560000e+02 : f32
    %13 = vector.broadcast %cst_8 : f32 to vector<17x1xf32>
    %14 = arith.divf %12, %13 : vector<17x1xf32>
    %15 = vector.broadcast %7 : vector<17x1xf32> to vector<17x256xf32>
    %16 = arith.subf %1, %15 : vector<17x256xf32>
    %cst_9 = arith.constant 9.99999997E-7 : f32
    %17 = vector.broadcast %cst_9 : f32 to vector<17x1xf32>
    %18 = arith.addf %14, %17 : vector<17x1xf32>
    %19 = math.rsqrt %18 : vector<17x1xf32>
    %20 = vector.broadcast %19 : vector<17x1xf32> to vector<17x256xf32>
    %21 = arith.mulf %16, %20 : vector<17x256xf32>
    %22 = vector.broadcast %2 : vector<1x256xf32> to vector<17x256xf32>
    %23 = arith.mulf %21, %22 : vector<17x256xf32>
    %24 = vector.broadcast %3 : vector<1x256xf32> to vector<17x256xf32>
    %25 = arith.addf %23, %24 : vector<17x256xf32>
    %26 = arith.truncf %25 : vector<17x256xf32> to vector<17x256xbf16>
    %c0_10 = arith.constant 0 : index
    %c0_11 = arith.constant 0 : index
    %27 = vector.load %arg4[%c0_10, %c0_11] : memref<256x768xbf16, #tpu.memory_space<vmem>>, vector<256x768xbf16>
    %cst_12 = arith.constant dense<0.000000e+00> : vector<17x768xf32>
    %28 = tpu.matmul %26, %27, %cst_12 {dimension_numbers = #tpu.dot_dimension_numbers<[1], [0], [0], [1], [0, 0, 1, 1], [], []>} : vector<17x256xbf16>, vector<256x768xbf16>, vector<17x768xf32> -> vector<17x768xf32>
    %c0_13 = arith.constant 0 : index
    %c0_14 = arith.constant 0 : index
    %29 = vector.load %arg5[%c0_13, %c0_14] : memref<1x768xf32, #tpu.memory_space<vmem>>, vector<1x768xf32>
    %30 = vector.broadcast %29 : vector<1x768xf32> to vector<17x768xf32>
    %31 = arith.addf %28, %30 : vector<17x768xf32>
    %32 = arith.truncf %31 : vector<17x768xf32> to vector<17x768xbf16>
    %cst_15 = arith.constant 0.000000e+00 : f32
    %33 = vector.broadcast %cst_15 : f32 to vector<17x256xf32>
    %cst_16 = arith.constant 0.000000e+00 : f32
    %34 = vector.broadcast %cst_16 : f32 to vector<1x17xf32>
    %35 = vector.extract_strided_slice %32 {offsets = [0, 0], sizes = [17, 256], strides = [1, 1]} : vector<17x768xbf16> to vector<17x256xbf16>
    %36 = vector.shape_cast %35 : vector<17x256xbf16> to vector<17x4x64xbf16>
    %37 = vector.extract_strided_slice %32 {offsets = [0, 256], sizes = [17, 256], strides = [1, 1]} : vector<17x768xbf16> to vector<17x256xbf16>
    %38 = vector.shape_cast %37 : vector<17x256xbf16> to vector<17x4x64xbf16>
    %39 = vector.extract_strided_slice %32 {offsets = [0, 512], sizes = [17, 256], strides = [1, 1]} : vector<17x768xbf16> to vector<17x256xbf16>
    %40 = vector.shape_cast %39 : vector<17x256xbf16> to vector<17x4x64xbf16>
    "tpu.trace_start"() <{level = 10 : i32, message = "qgd,kgd->gqk"}> : () -> ()
    %cst_17 = arith.constant dense<0.000000e+00> : vector<4x17x17xf32>
    %41 = tpu.matmul %36, %38, %cst_17 {dimension_numbers = #tpu.dot_dimension_numbers<[2], [2], [0], [0], [0, 1, 0, 0, 1, 0], [1], [1]>} : vector<17x4x64xbf16>, vector<17x4x64xbf16>, vector<4x17x17xf32> -> vector<4x17x17xf32>
    "tpu.trace_stop"() : () -> ()
    %cst_18 = arith.constant dense<0xFF800000> : vector<4x17xf32>
    %42 = vector.multi_reduction <maximumf>, %41, %cst_18 [2] : vector<4x17x17xf32> to vector<4x17xf32>
    %43 = vector.shape_cast %42 : vector<4x17xf32> to vector<4x17x1xf32>
    %44 = vector.broadcast %43 : vector<4x17x1xf32> to vector<4x17x17xf32>
    %45 = arith.subf %41, %44 : vector<4x17x17xf32>
    %46 = math.exp %45 : vector<4x17x17xf32>
    %cst_19 = arith.constant dense<0.000000e+00> : vector<4x17xf32>
    %47 = vector.multi_reduction <add>, %46, %cst_19 [2] : vector<4x17x17xf32> to vector<4x17xf32>
    %48 = vector.shape_cast %47 : vector<4x17xf32> to vector<4x17x1xf32>
    %49 = vector.extract_strided_slice %46 {offsets = [0, 0, 0], sizes = [4, 1, 17], strides = [1, 1, 1]} : vector<4x17x17xf32> to vector<4x1x17xf32>
    %50 = vector.shape_cast %49 : vector<4x1x17xf32> to vector<4x17xf32>
    %51 = vector.extract_strided_slice %48 {offsets = [0, 0, 0], sizes = [4, 1, 1], strides = [1, 1, 1]} : vector<4x17x1xf32> to vector<4x1x1xf32>
    %52 = vector.shape_cast %51 : vector<4x1x1xf32> to vector<4x1xf32>
    %53 = vector.broadcast %52 : vector<4x1xf32> to vector<4x17xf32>
    %54 = arith.divf %50, %53 : vector<4x17xf32>
    %cst_20 = arith.constant dense<0.000000e+00> : vector<17xf32>
    %55 = vector.multi_reduction <add>, %54, %cst_20 [0] : vector<4x17xf32> to vector<17xf32>
    %56 = vector.shape_cast %55 : vector<17xf32> to vector<1x17xf32>
    %57 = arith.addf %34, %56 : vector<1x17xf32>
    %58 = tpu.reciprocal %48 {approx = true} : vector<4x17x1xf32> -> vector<4x17x1xf32>
    %59 = vector.broadcast %58 : vector<4x17x1xf32> to vector<4x17x17xf32>
    %60 = arith.mulf %46, %59 : vector<4x17x17xf32>
    %61 = arith.truncf %60 : vector<4x17x17xf32> to vector<4x17x17xbf16>
    "tpu.trace_start"() <{level = 10 : i32, message = "gqk,kgd->gqd"}> : () -> ()
    %cst_21 = arith.constant dense<0.000000e+00> : vector<4x17x64xf32>
    %62 = tpu.matmul %61, %40, %cst_21 {dimension_numbers = #tpu.dot_dimension_numbers<[2], [0], [1], [2], [0, 0, 0, 1, 1, 2], [0], [1]>} : vector<4x17x17xbf16>, vector<17x4x64xbf16>, vector<4x17x64xf32> -> vector<4x17x64xf32>
    "tpu.trace_stop"() : () -> ()
    %c0_22 = arith.constant 0 : index
    %c0_23 = arith.constant 0 : index
    %c0_24 = arith.constant 0 : index
    %63 = vector.load %arg6[%c0_22, %c0_23, %c0_24] : memref<4x64x256xbf16, #tpu.memory_space<vmem>>, vector<4x64x256xbf16>
    %64 = arith.truncf %62 : vector<4x17x64xf32> to vector<4x17x64xbf16>
    "tpu.trace_start"() <{level = 10 : i32, message = "gqd,gde->gqe"}> : () -> ()
    %cst_25 = arith.constant dense<0.000000e+00> : vector<4x17x256xf32>
    %65 = tpu.matmul %64, %63, %cst_25 {dimension_numbers = #tpu.dot_dimension_numbers<[2], [1], [1], [2], [0, 0, 0, 1, 1, 2], [0], [0]>} : vector<4x17x64xbf16>, vector<4x64x256xbf16>, vector<4x17x256xf32> -> vector<4x17x256xf32>
    "tpu.trace_stop"() : () -> ()
    %cst_26 = arith.constant dense<0.000000e+00> : vector<17x256xf32>
    %66 = vector.multi_reduction <add>, %65, %cst_26 [0] : vector<4x17x256xf32> to vector<17x256xf32>
    %67 = arith.addf %33, %66 : vector<17x256xf32>
    %cst_27 = arith.constant 2.500000e-01 : f32
    %68 = vector.broadcast %cst_27 : f32 to vector<1x17xf32>
    %69 = arith.mulf %57, %68 : vector<1x17xf32>
    %c0_28 = arith.constant 0 : index
    %c0_29 = arith.constant 0 : index
    %c0_30 = arith.constant 0 : index
    %70 = vector.load %arg16[%c0_28, %c0_29, %c0_30] : memref<1x1x17xf32, #tpu.memory_space<vmem>>, vector<1x1x17xf32>
    %71 = vector.shape_cast %70 : vector<1x1x17xf32> to vector<1x17xf32>
    %72 = vector.shape_cast %69 : vector<1x17xf32> to vector<1x1x17xf32>
    tpu.vector_store %arg16[%c0_28, %c0_29, %c0_30], %72 {strides = array<i32>} : memref<1x1x17xf32, #tpu.memory_space<vmem>>, vector<1x1x17xf32>,
    %73 = arith.addf %1, %67 : vector<17x256xf32>
    %c0_31 = arith.constant 0 : index
    %c0_32 = arith.constant 0 : index
    %74 = vector.load %arg7[%c0_31, %c0_32] : memref<1x256xf32, #tpu.memory_space<vmem>>, vector<1x256xf32>
    %75 = vector.broadcast %74 : vector<1x256xf32> to vector<17x256xf32>
    %76 = arith.addf %73, %75 : vector<17x256xf32>
    %c0_33 = arith.constant 0 : index
    %c0_34 = arith.constant 0 : index
    %77 = vector.load %arg8[%c0_33, %c0_34] : memref<1x256xf32, #tpu.memory_space<vmem>>, vector<1x256xf32>
    %c0_35 = arith.constant 0 : index
    %c0_36 = arith.constant 0 : index
    %78 = vector.load %arg9[%c0_35, %c0_36] : memref<1x256xf32, #tpu.memory_space<vmem>>, vector<1x256xf32>
    %cst_37 = arith.constant dense<0.000000e+00> : vector<17xf32>
    %79 = vector.multi_reduction <add>, %76, %cst_37 [1] : vector<17x256xf32> to vector<17xf32>
    %80 = vector.shape_cast %79 : vector<17xf32> to vector<17x1xf32>
    %cst_38 = arith.constant 2.560000e+02 : f32
    %81 = vector.broadcast %cst_38 : f32 to vector<17x1xf32>
    %82 = arith.divf %80, %81 : vector<17x1xf32>
    %83 = vector.broadcast %82 : vector<17x1xf32> to vector<17x256xf32>
    %84 = arith.subf %76, %83 : vector<17x256xf32>
    %85 = arith.mulf %84, %84 : vector<17x256xf32>
    %cst_39 = arith.constant dense<0.000000e+00> : vector<17xf32>
    %86 = vector.multi_reduction <add>, %85, %cst_39 [1] : vector<17x256xf32> to vector<17xf32>
    %87 = vector.shape_cast %86 : vector<17xf32> to vector<17x1xf32>
    %cst_40 = arith.constant 2.560000e+02 : f32
    %88 = vector.broadcast %cst_40 : f32 to vector<17x1xf32>
    %89 = arith.divf %87, %88 : vector<17x1xf32>
    %90 = vector.broadcast %82 : vector<17x1xf32> to vector<17x256xf32>
    %91 = arith.subf %76, %90 : vector<17x256xf32>
    %cst_41 = arith.constant 9.99999997E-7 : f32
    %92 = vector.broadcast %cst_41 : f32 to vector<17x1xf32>
    %93 = arith.addf %89, %92 : vector<17x1xf32>
    %94 = math.rsqrt %93 : vector<17x1xf32>
    %95 = vector.broadcast %94 : vector<17x1xf32> to vector<17x256xf32>
    %96 = arith.mulf %91, %95 : vector<17x256xf32>
    %97 = vector.broadcast %77 : vector<1x256xf32> to vector<17x256xf32>
    %98 = arith.mulf %96, %97 : vector<17x256xf32>
    %99 = vector.broadcast %78 : vector<1x256xf32> to vector<17x256xf32>
    %100 = arith.addf %98, %99 : vector<17x256xf32>
    %101 = arith.truncf %100 : vector<17x256xf32> to vector<17x256xbf16>
    %c0_42 = arith.constant 0 : index
    %c0_43 = arith.constant 0 : index
    %102 = vector.load %arg10[%c0_42, %c0_43] : memref<256x1024xbf16, #tpu.memory_space<vmem>>, vector<256x1024xbf16>
    %cst_44 = arith.constant dense<0.000000e+00> : vector<17x1024xf32>
    %103 = tpu.matmul %101, %102, %cst_44 {dimension_numbers = #tpu.dot_dimension_numbers<[1], [0], [0], [1], [0, 0, 1, 1], [], []>} : vector<17x256xbf16>, vector<256x1024xbf16>, vector<17x1024xf32> -> vector<17x1024xf32>
    %c0_45 = arith.constant 0 : index
    %c0_46 = arith.constant 0 : index
    %104 = vector.load %arg11[%c0_45, %c0_46] : memref<1x1024xf32, #tpu.memory_space<vmem>>, vector<1x1024xf32>
    %105 = vector.broadcast %104 : vector<1x1024xf32> to vector<17x1024xf32>
    %106 = arith.addf %103, %105 : vector<17x1024xf32>
    %107 = arith.mulf %106, %106 : vector<17x1024xf32>
    %108 = arith.mulf %106, %107 : vector<17x1024xf32>
    %cst_47 = arith.constant 4.471500e-02 : f32
    %109 = vector.broadcast %cst_47 : f32 to vector<17x1024xf32>
    %110 = arith.mulf %109, %108 : vector<17x1024xf32>
    %111 = arith.addf %106, %110 : vector<17x1024xf32>
    %cst_48 = arith.constant 0.797884583 : f32
    %112 = vector.broadcast %cst_48 : f32 to vector<17x1024xf32>
    %113 = arith.mulf %112, %111 : vector<17x1024xf32>
    %114 = math.tanh %113 : vector<17x1024xf32>
    %cst_49 = arith.constant 1.000000e+00 : f32
    %115 = vector.broadcast %cst_49 : f32 to vector<17x1024xf32>
    %116 = arith.addf %115, %114 : vector<17x1024xf32>
    %cst_50 = arith.constant 5.000000e-01 : f32
    %117 = vector.broadcast %cst_50 : f32 to vector<17x1024xf32>
    %118 = arith.mulf %117, %116 : vector<17x1024xf32>
    %119 = arith.mulf %106, %118 : vector<17x1024xf32>
    %120 = arith.truncf %119 : vector<17x1024xf32> to vector<17x1024xbf16>
    %c0_51 = arith.constant 0 : index
    %c0_52 = arith.constant 0 : index
    %121 = vector.load %arg12[%c0_51, %c0_52] : memref<1024x256xbf16, #tpu.memory_space<vmem>>, vector<1024x256xbf16>
    %cst_53 = arith.constant dense<0.000000e+00> : vector<17x256xf32>
    %122 = tpu.matmul %120, %121, %cst_53 {dimension_numbers = #tpu.dot_dimension_numbers<[1], [0], [0], [1], [0, 0, 1, 1], [], []>} : vector<17x1024xbf16>, vector<1024x256xbf16>, vector<17x256xf32> -> vector<17x256xf32>
    %c0_54 = arith.constant 0 : index
    %c0_55 = arith.constant 0 : index
    %123 = vector.load %arg13[%c0_54, %c0_55] : memref<1x256xf32, #tpu.memory_space<vmem>>, vector<1x256xf32>
    %124 = vector.broadcast %123 : vector<1x256xf32> to vector<17x256xf32>
    %125 = arith.addf %122, %124 : vector<17x256xf32>
    %126 = arith.addf %76, %125 : vector<17x256xf32>
    %c0_56 = arith.constant 0 : index
    %c0_57 = arith.constant 0 : index
    %127 = vector.load %arg14[%c0_56, %c0_57] : memref<1x256xf32, #tpu.memory_space<vmem>>, vector<1x256xf32>
    %128 = vector.broadcast %127 : vector<1x256xf32> to vector<17x256xf32>
    %129 = arith.addf %126, %128 : vector<17x256xf32>
    %c0_58 = arith.constant 0 : index
    %c0_59 = arith.constant 0 : index
    %c0_60 = arith.constant 0 : index
    %130 = vector.load %arg15[%c0_58, %c0_59, %c0_60] : memref<1x17x256xf32, #tpu.memory_space<vmem>>, vector<1x17x256xf32>
    %131 = vector.shape_cast %130 : vector<1x17x256xf32> to vector<17x256xf32>
    %132 = vector.shape_cast %129 : vector<17x256xf32> to vector<1x17x256xf32>
    tpu.vector_store %arg15[%c0_58, %c0_59, %c0_60], %132 {strides = array<i32>} : memref<1x17x256xf32, #tpu.memory_space<vmem>>, vector<1x17x256xf32>,
    return
  }
  func.func @transform_0(%arg0: i32) -> (i32, i32, i32) {
    %c0_i32 = arith.constant 0 : i32
    %c0_i32_0 = arith.constant 0 : i32
    %c0_i32_1 = arith.constant 0 : i32
    return %arg0, %c0_i32, %c0_i32_0 : i32, i32, i32
  }
  func.func @transform_1(%arg0: i32) -> (i32, i32) {
    %c0_i32 = arith.constant 0 : i32
    %c0_i32_0 = arith.constant 0 : i32
    %c0_i32_1 = arith.constant 0 : i32
    return %c0_i32, %c0_i32_0 : i32, i32
  }
  func.func @transform_2(%arg0: i32) -> (i32, i32) {
    %c0_i32 = arith.constant 0 : i32
    %c0_i32_0 = arith.constant 0 : i32
    %c0_i32_1 = arith.constant 0 : i32
    return %c0_i32, %c0_i32_0 : i32, i32
  }
  func.func @transform_3(%arg0: i32) -> (i32, i32) {
    %c0_i32 = arith.constant 0 : i32
    %c0_i32_0 = arith.constant 0 : i32
    %c0_i32_1 = arith.constant 0 : i32
    return %c0_i32, %c0_i32_0 : i32, i32
  }
  func.func @transform_4(%arg0: i32) -> (i32, i32) {
    %c0_i32 = arith.constant 0 : i32
    %c0_i32_0 = arith.constant 0 : i32
    %c0_i32_1 = arith.constant 0 : i32
    return %c0_i32, %c0_i32_0 : i32, i32
  }
  func.func @transform_5(%arg0: i32) -> (i32, i32, i32) {
    %c0_i32 = arith.constant 0 : i32
    %c0_i32_0 = arith.constant 0 : i32
    %c0_i32_1 = arith.constant 0 : i32
    %c0_i32_2 = arith.constant 0 : i32
    return %c0_i32, %c0_i32_0, %c0_i32_1 : i32, i32, i32
  }
  func.func @transform_6(%arg0: i32) -> (i32, i32) {
    %c0_i32 = arith.constant 0 : i32
    %c0_i32_0 = arith.constant 0 : i32
    %c0_i32_1 = arith.constant 0 : i32
    return %c0_i32, %c0_i32_0 : i32, i32
  }
  func.func @transform_7(%arg0: i32) -> (i32, i32) {
    %c0_i32 = arith.constant 0 : i32
    %c0_i32_0 = arith.constant 0 : i32
    %c0_i32_1 = arith.constant 0 : i32
    return %c0_i32, %c0_i32_0 : i32, i32
  }
  func.func @transform_8(%arg0: i32) -> (i32, i32) {
    %c0_i32 = arith.constant 0 : i32
    %c0_i32_0 = arith.constant 0 : i32
    %c0_i32_1 = arith.constant 0 : i32
    return %c0_i32, %c0_i32_0 : i32, i32
  }
  func.func @transform_9(%arg0: i32) -> (i32, i32) {
    %c0_i32 = arith.constant 0 : i32
    %c0_i32_0 = arith.constant 0 : i32
    %c0_i32_1 = arith.constant 0 : i32
    return %c0_i32, %c0_i32_0 : i32, i32
  }
  func.func @transform_10(%arg0: i32) -> (i32, i32) {
    %c0_i32 = arith.constant 0 : i32
    %c0_i32_0 = arith.constant 0 : i32
    %c0_i32_1 = arith.constant 0 : i32
    return %c0_i32, %c0_i32_0 : i32, i32
  }
  func.func @transform_11(%arg0: i32) -> (i32, i32) {
    %c0_i32 = arith.constant 0 : i32
    %c0_i32_0 = arith.constant 0 : i32
    %c0_i32_1 = arith.constant 0 : i32
    return %c0_i32, %c0_i32_0 : i32, i32
  }
  func.func @transform_12(%arg0: i32) -> (i32, i32) {
    %c0_i32 = arith.constant 0 : i32
    %c0_i32_0 = arith.constant 0 : i32
    %c0_i32_1 = arith.constant 0 : i32
    return %c0_i32, %c0_i32_0 : i32, i32
  }
  func.func @transform_13(%arg0: i32) -> (i32, i32) {
    %c0_i32 = arith.constant 0 : i32
    %c0_i32_0 = arith.constant 0 : i32
    %c0_i32_1 = arith.constant 0 : i32
    return %c0_i32, %c0_i32_0 : i32, i32
  }
  func.func @transform_14(%arg0: i32) -> (i32, i32, i32) {
    %c0_i32 = arith.constant 0 : i32
    %c0_i32_0 = arith.constant 0 : i32
    %c0_i32_1 = arith.constant 0 : i32
    return %arg0, %c0_i32, %c0_i32_0 : i32, i32, i32
  }
  func.func @transform_15(%arg0: i32) -> (i32, i32, i32) {
    %c0_i32 = arith.constant 0 : i32
    %c0_i32_0 = arith.constant 0 : i32
    %c0_i32_1 = arith.constant 0 : i32
    return %arg0, %c0_i32, %c0_i32_0 : i32, i32, i32
  }
}

</mosaic_0001>

<llo_original>
// kernel: tpu_custom_call.1
$region0: #{tpu_custom_call.1}
  #allocation0 [shape = 'u32[]', space=smem, size = 0x4, offset = 0x4, fixed_abs, tag = 'smem constant byte address 0x4 - core index']
  #allocation1 [shape = 'u32[144,128]{1,0:T(1,128)}', space=vmem, size = 0x12000, scoped, tag = 'internal scratch']
  %s0 = inlined_call_operand.vmem [shape: f32[2,17,256], index: 0, kind: input, shape index: {}]
  %s1 = inlined_call_operand.vmem [shape: f32[1,256], index: 1, kind: input, shape index: {}]
  %s2 = inlined_call_operand.vmem [shape: f32[1,256], index: 2, kind: input, shape index: {}]
  %s3 = inlined_call_operand.hbm [shape: bf16[256,768], index: 3, kind: input, shape index: {}]
  %s4 = inlined_call_operand.vmem [shape: f32[1,768], index: 4, kind: input, shape index: {}]
  %s5 = inlined_call_operand.hbm [shape: bf16[4,64,256], index: 5, kind: input, shape index: {}]
  %s6 = inlined_call_operand.vmem [shape: f32[1,256], index: 6, kind: input, shape index: {}]
  %s7 = inlined_call_operand.vmem [shape: f32[1,256], index: 7, kind: input, shape index: {}]
  %s8 = inlined_call_operand.vmem [shape: f32[1,256], index: 8, kind: input, shape index: {}]
  %s9 = inlined_call_operand.hbm [shape: bf16[256,1024], index: 9, kind: input, shape index: {}]
  %s10 = inlined_call_operand.vmem [shape: f32[1,1024], index: 10, kind: input, shape index: {}]
  %s11 = inlined_call_operand.hbm [shape: bf16[1024,256], index: 11, kind: input, shape index: {}]
  %s12 = inlined_call_operand.vmem [shape: f32[1,256], index: 12, kind: input, shape index: {}]
  %s13 = inlined_call_operand.vmem [shape: f32[1,256], index: 13, kind: input, shape index: {}]
  %s14 = inlined_call_operand.vmem [shape: f32[2,17,256], index: 14, kind: output, shape index: {0}]
  %s15 = inlined_call_operand.hbm [shape: f32[2,1,17], index: 15, kind: output, shape index: {1}]
  %16 = xla_tuple %s14, %s15
  %s17 = sld [smem:[#allocation0]]
  $region113: #{tpu_custom_call.1} parent=0
    _
  %s19 = ssub.s32 1, %s17
  %s20 = scalar_select 0, %s19, %s17
  $region1: #{tpu_custom_call.1} parent=0
    #allocation2 [shape = 'u8[393216]{0}', space=vmem, size = 0x60000, scoped, tag = 'input window, operand 3, single buffered']
    #allocation3 [shape = 's32[2]{0}', space=sflag, size = 0x8, scoped, tag = 'scoped memory for tpu_custom_call.1']
    #allocation4 [shape = 's32[2]{0}', space=sflag, size = 0x8, scoped, tag = 'scoped memory for tpu_custom_call.1']
    #allocation5 [shape = 'u8[131072]{0}', space=vmem, size = 0x20000, scoped, tag = 'input window, operand 5, single buffered']
    #allocation6 [shape = 's32[1]{0}', space=sflag, size = 0x4, scoped, tag = 'scoped memory for tpu_custom_call.1']
    #allocation7 [shape = 'u8[524288]{0}', space=vmem, size = 0x80000, scoped, tag = 'input window, operand 9, single buffered']
    #allocation8 [shape = 'u8[524288]{0}', space=vmem, size = 0x80000, scoped, tag = 'input window, operand 11, single buffered']
    #allocation9 [shape = 's32[1]{0}', space=sflag, size = 0x4, scoped, tag = 'scoped memory for tpu_custom_call.1']
    #allocation10 [shape = 'u8[1024]{0}', space=vmem, size = 0x400, scoped, tag = 'output window, operand 1']
    %21 = vsyncpa [#allocation3], 0
    %22 = vsyncpa [#allocation6], 0
    %23 = vsyncpa [#allocation9], 0
    %24 = vsyncpa [#allocation4], 0
    %s25 = scalar_lea.sflag [#allocation4], 1
    %26 = vsyncpa %s25, 0
    loop: start=0, step=1, limit=4
    $region2: #{tpu_custom_call.1} parent=1 // loop_pre_header
      _
    $region3: #{tpu_custom_call.1} parent=1 // loop_header
      %s28 = sphi 0, %s32
      %p29 = scmp.ge.s32.totalorder %s28, 4
      %s38 = sphi 0, %s40
      %s41 = sphi 0, %s38
      %s42 = sphi 0, %s41
      %s58 = sphi 0, %s42
      %s62 = sphi 0, %s62
      %s64 = sphi 0, %s62
      %s65 = sphi 0, %s64
      %s79 = sphi 0, %s65
      %s83 = sphi 0, %s83
      %s85 = sphi 0, %s83
      %s86 = sphi 0, %s85
      %s100 = sphi 0, %s86
      %s104 = sphi 0, %s104
      %s106 = sphi 0, %s104
      %s107 = sphi 0, %s106
      %s121 = sphi 0, %s107
      %s125 = sphi 0, %s125
      %s127 = sphi 0, %s125
      %s128 = sphi 0, %s127
      %s142 = sphi 0, %s128
      %s146 = sphi 0, %s146
      %s148 = sphi 0, %s146
      %s149 = sphi 0, %s148
      %s163 = sphi 0, %s149
      %s167 = sphi 0, %s167
      %s169 = sphi 0, %s167
      %s170 = sphi 0, %s169
      %s184 = sphi 0, %s170
      %s188 = sphi 0, %s188
      %s190 = sphi 0, %s188
      %s191 = sphi 0, %s190
      %s205 = sphi 0, %s191
      %s209 = sphi 0, %s209
      %s211 = sphi 0, %s209
      %s212 = sphi 0, %s211
      %s226 = sphi 0, %s212
      %s230 = sphi 0, %s230
      %s232 = sphi 0, %s230
      %s233 = sphi 0, %s232
      %s247 = sphi 0, %s233
      %s251 = sphi 0, %s251
      %s253 = sphi 0, %s251
      %s254 = sphi 0, %s253
      %s268 = sphi 0, %s254
      %s272 = sphi 0, %s272
      %s274 = sphi 0, %s272
      %s275 = sphi 0, %s274
      %s289 = sphi 0, %s275
      %s293 = sphi 0, %s293
      %s295 = sphi 0, %s293
      %s296 = sphi 0, %s295
      %s310 = sphi 0, %s296
      %s314 = sphi 0, %s314
      %s316 = sphi 0, %s314
      %s317 = sphi 0, %s316
      %s331 = sphi 0, %s317
      %s337 = sphi 0, %s339
      %s340 = sphi 0, %s337
      %s341 = sphi 0, %s340
      %s357 = sphi 0, %s341
      %s363 = sphi 0, %s365
      %s366 = sphi 0, %s363
      %s367 = sphi 0, %s366
      %s383 = sphi 0, %s367
    $region4: #{tpu_custom_call.1} parent=1 // loop_header_branch
      %31 = sbr.rel (%p29) target = $region8
    $region5: #{tpu_custom_call.1} parent=1 // loop_body
      %s33 = ssub.s32 %s28, 1
      %s34 = ssub.s32 %s28, 2
      %s35 = sadd.s32 %s28, 1
      %s36 = ssub.s32 %s28, %s35
      %p37 = scmp.eq.s32.totalorder %s36, 0
      %s39 = sadd.s32 %s38, 1
      %s40 = scalar_select %p37, %s38, %s39
      %p43 = pneg %p37
      %p44 = scmp.eq.s32.totalorder %s28, 1
      %p45 = por %p43, %p44
      %p46 = scmp.ne.s32.totalorder %s38, %s41
      %p47 = scmp.eq.s32.totalorder %s28, 0
      %p48 = por %p46, %p47
      %p49 = scmp.ne.s32.totalorder %s38, %s41
      %p50 = scmp.eq.s32.totalorder %s33, 1
      %p51 = por %p49, %p50
      %p52 = scmp.ne.s32.totalorder %s41, %s42
      %p53 = scmp.eq.s32.totalorder %s33, 0
      %p54 = por %p52, %p53
      %p55 = scmp.ne.s32.totalorder %s41, %s42
      %p56 = scmp.eq.s32.totalorder %s34, 1
      %p57 = por %p55, %p56
      %p59 = scmp.ne.s32.totalorder %s42, %s58
      %p60 = scmp.eq.s32.totalorder %s34, 0
      %p61 = por %p59, %p60
      %s63 = sadd.s32 %s62, 1
      %p66 = scmp.eq.s32.totalorder %s28, 1
      %p67 = scmp.ne.s32.totalorder %s62, %s64
      %p68 = scmp.eq.s32.totalorder %s28, 0
      %p69 = por %p67, %p68
      %p70 = scmp.ne.s32.totalorder %s62, %s64
      %p71 = scmp.eq.s32.totalorder %s33, 1
      %p72 = por %p70, %p71
      %p73 = scmp.ne.s32.totalorder %s64, %s65
      %p74 = scmp.eq.s32.totalorder %s33, 0
      %p75 = por %p73, %p74
      %p76 = scmp.ne.s32.totalorder %s64, %s65
      %p77 = scmp.eq.s32.totalorder %s34, 1
      %p78 = por %p76, %p77
      %p80 = scmp.ne.s32.totalorder %s65, %s79
      %p81 = scmp.eq.s32.totalorder %s34, 0
      %p82 = por %p80, %p81
      %s84 = sadd.s32 %s83, 1
      %p87 = scmp.eq.s32.totalorder %s28, 1
      %p88 = scmp.ne.s32.totalorder %s83, %s85
      %p89 = scmp.eq.s32.totalorder %s28, 0
      %p90 = por %p88, %p89
      %p91 = scmp.ne.s32.totalorder %s83, %s85
      %p92 = scmp.eq.s32.totalorder %s33, 1
      %p93 = por %p91, %p92
      %p94 = scmp.ne.s32.totalorder %s85, %s86
      %p95 = scmp.eq.s32.totalorder %s33, 0
      %p96 = por %p94, %p95
      %p97 = scmp.ne.s32.totalorder %s85, %s86
      %p98 = scmp.eq.s32.totalorder %s34, 1
      %p99 = por %p97, %p98
      %p101 = scmp.ne.s32.totalorder %s86, %s100
      %p102 = scmp.eq.s32.totalorder %s34, 0
      %p103 = por %p101, %p102
      %s105 = sadd.s32 %s104, 1
      %p108 = scmp.eq.s32.totalorder %s28, 1
      %p109 = scmp.ne.s32.totalorder %s104, %s106
      %p110 = scmp.eq.s32.totalorder %s28, 0
      %p111 = por %p109, %p110
      %p112 = scmp.ne.s32.totalorder %s104, %s106
      %p113 = scmp.eq.s32.totalorder %s33, 1
      %p114 = por %p112, %p113
      %p115 = scmp.ne.s32.totalorder %s106, %s107
      %p116 = scmp.eq.s32.totalorder %s33, 0
      %p117 = por %p115, %p116
      %p118 = scmp.ne.s32.totalorder %s106, %s107
      %p119 = scmp.eq.s32.totalorder %s34, 1
      %p120 = por %p118, %p119
      %p122 = scmp.ne.s32.totalorder %s107, %s121
      %p123 = scmp.eq.s32.totalorder %s34, 0
      %p124 = por %p122, %p123
      %s126 = sadd.s32 %s125, 1
      %p129 = scmp.eq.s32.totalorder %s28, 1
      %p130 = scmp.ne.s32.totalorder %s125, %s127
      %p131 = scmp.eq.s32.totalorder %s28, 0
      %p132 = por %p130, %p131
      %p133 = scmp.ne.s32.totalorder %s125, %s127
      %p134 = scmp.eq.s32.totalorder %s33, 1
      %p135 = por %p133, %p134
      %p136 = scmp.ne.s32.totalorder %s127, %s128
      %p137 = scmp.eq.s32.totalorder %s33, 0
      %p138 = por %p136, %p137
      %p139 = scmp.ne.s32.totalorder %s127, %s128
      %p140 = scmp.eq.s32.totalorder %s34, 1
      %p141 = por %p139, %p140
      %p143 = scmp.ne.s32.totalorder %s128, %s142
      %p144 = scmp.eq.s32.totalorder %s34, 0
      %p145 = por %p143, %p144
      %s147 = sadd.s32 %s146, 1
      %p150 = scmp.eq.s32.totalorder %s28, 1
      %p151 = scmp.ne.s32.totalorder %s146, %s148
      %p152 = scmp.eq.s32.totalorder %s28, 0
      %p153 = por %p151, %p152
      %p154 = scmp.ne.s32.totalorder %s146, %s148
      %p155 = scmp.eq.s32.totalorder %s33, 1
      %p156 = por %p154, %p155
      %p157 = scmp.ne.s32.totalorder %s148, %s149
      %p158 = scmp.eq.s32.totalorder %s33, 0
      %p159 = por %p157, %p158
      %p160 = scmp.ne.s32.totalorder %s148, %s149
      %p161 = scmp.eq.s32.totalorder %s34, 1
      %p162 = por %p160, %p161
      %p164 = scmp.ne.s32.totalorder %s149, %s163
      %p165 = scmp.eq.s32.totalorder %s34, 0
      %p166 = por %p164, %p165
      %s168 = sadd.s32 %s167, 1
      %p171 = scmp.eq.s32.totalorder %s28, 1
      %p172 = scmp.ne.s32.totalorder %s167, %s169
      %p173 = scmp.eq.s32.totalorder %s28, 0
      %p174 = por %p172, %p173
      %p175 = scmp.ne.s32.totalorder %s167, %s169
      %p176 = scmp.eq.s32.totalorder %s33, 1
      %p177 = por %p175, %p176
      %p178 = scmp.ne.s32.totalorder %s169, %s170
      %p179 = scmp.eq.s32.totalorder %s33, 0
      %p180 = por %p178, %p179
      %p181 = scmp.ne.s32.totalorder %s169, %s170
      %p182 = scmp.eq.s32.totalorder %s34, 1
      %p183 = por %p181, %p182
      %p185 = scmp.ne.s32.totalorder %s170, %s184
      %p186 = scmp.eq.s32.totalorder %s34, 0
      %p187 = por %p185, %p186
      %s189 = sadd.s32 %s188, 1
      %p192 = scmp.eq.s32.totalorder %s28, 1
      %p193 = scmp.ne.s32.totalorder %s188, %s190
      %p194 = scmp.eq.s32.totalorder %s28, 0
      %p195 = por %p193, %p194
      %p196 = scmp.ne.s32.totalorder %s188, %s190
      %p197 = scmp.eq.s32.totalorder %s33, 1
      %p198 = por %p196, %p197
      %p199 = scmp.ne.s32.totalorder %s190, %s191
      %p200 = scmp.eq.s32.totalorder %s33, 0
      %p201 = por %p199, %p200
      %p202 = scmp.ne.s32.totalorder %s190, %s191
      %p203 = scmp.eq.s32.totalorder %s34, 1
      %p204 = por %p202, %p203
      %p206 = scmp.ne.s32.totalorder %s191, %s205
      %p207 = scmp.eq.s32.totalorder %s34, 0
      %p208 = por %p206, %p207
      %s210 = sadd.s32 %s209, 1
      %p213 = scmp.eq.s32.totalorder %s28, 1
      %p214 = scmp.ne.s32.totalorder %s209, %s211
      %p215 = scmp.eq.s32.totalorder %s28, 0
      %p216 = por %p214, %p215
      %p217 = scmp.ne.s32.totalorder %s209, %s211
      %p218 = scmp.eq.s32.totalorder %s33, 1
      %p219 = por %p217, %p218
      %p220 = scmp.ne.s32.totalorder %s211, %s212
      %p221 = scmp.eq.s32.totalorder %s33, 0
      %p222 = por %p220, %p221
      %p223 = scmp.ne.s32.totalorder %s211, %s212
      %p224 = scmp.eq.s32.totalorder %s34, 1
      %p225 = por %p223, %p224
      %p227 = scmp.ne.s32.totalorder %s212, %s226
      %p228 = scmp.eq.s32.totalorder %s34, 0
      %p229 = por %p227, %p228
      %s231 = sadd.s32 %s230, 1
      %p234 = scmp.eq.s32.totalorder %s28, 1
      %p235 = scmp.ne.s32.totalorder %s230, %s232
      %p236 = scmp.eq.s32.totalorder %s28, 0
      %p237 = por %p235, %p236
      %p238 = scmp.ne.s32.totalorder %s230, %s232
      %p239 = scmp.eq.s32.totalorder %s33, 1
      %p240 = por %p238, %p239
      %p241 = scmp.ne.s32.totalorder %s232, %s233
      %p242 = scmp.eq.s32.totalorder %s33, 0
      %p243 = por %p241, %p242
      %p244 = scmp.ne.s32.totalorder %s232, %s233
      %p245 = scmp.eq.s32.totalorder %s34, 1
      %p246 = por %p244, %p245
      %p248 = scmp.ne.s32.totalorder %s233, %s247
      %p249 = scmp.eq.s32.totalorder %s34, 0
      %p250 = por %p248, %p249
      %s252 = sadd.s32 %s251, 1
      %p255 = scmp.eq.s32.totalorder %s28, 1
      %p256 = scmp.ne.s32.totalorder %s251, %s253
      %p257 = scmp.eq.s32.totalorder %s28, 0
      %p258 = por %p256, %p257
      %p259 = scmp.ne.s32.totalorder %s251, %s253
      %p260 = scmp.eq.s32.totalorder %s33, 1
      %p261 = por %p259, %p260
      %p262 = scmp.ne.s32.totalorder %s253, %s254
      %p263 = scmp.eq.s32.totalorder %s33, 0
      %p264 = por %p262, %p263
      %p265 = scmp.ne.s32.totalorder %s253, %s254
      %p266 = scmp.eq.s32.totalorder %s34, 1
      %p267 = por %p265, %p266
      %p269 = scmp.ne.s32.totalorder %s254, %s268
      %p270 = scmp.eq.s32.totalorder %s34, 0
      %p271 = por %p269, %p270
      %s273 = sadd.s32 %s272, 1
      %p276 = scmp.eq.s32.totalorder %s28, 1
      %p277 = scmp.ne.s32.totalorder %s272, %s274
      %p278 = scmp.eq.s32.totalorder %s28, 0
      %p279 = por %p277, %p278
      %p280 = scmp.ne.s32.totalorder %s272, %s274
      %p281 = scmp.eq.s32.totalorder %s33, 1
      %p282 = por %p280, %p281
      %p283 = scmp.ne.s32.totalorder %s274, %s275
      %p284 = scmp.eq.s32.totalorder %s33, 0
      %p285 = por %p283, %p284
      %p286 = scmp.ne.s32.totalorder %s274, %s275
      %p287 = scmp.eq.s32.totalorder %s34, 1
      %p288 = por %p286, %p287
      %p290 = scmp.ne.s32.totalorder %s275, %s289
      %p291 = scmp.eq.s32.totalorder %s34, 0
      %p292 = por %p290, %p291
      %s294 = sadd.s32 %s293, 1
      %p297 = scmp.eq.s32.totalorder %s28, 1
      %p298 = scmp.ne.s32.totalorder %s293, %s295
      %p299 = scmp.eq.s32.totalorder %s28, 0
      %p300 = por %p298, %p299
      %p301 = scmp.ne.s32.totalorder %s293, %s295
      %p302 = scmp.eq.s32.totalorder %s33, 1
      %p303 = por %p301, %p302
      %p304 = scmp.ne.s32.totalorder %s295, %s296
      %p305 = scmp.eq.s32.totalorder %s33, 0
      %p306 = por %p304, %p305
      %p307 = scmp.ne.s32.totalorder %s295, %s296
      %p308 = scmp.eq.s32.totalorder %s34, 1
      %p309 = por %p307, %p308
      %p311 = scmp.ne.s32.totalorder %s296, %s310
      %p312 = scmp.eq.s32.totalorder %s34, 0
      %p313 = por %p311, %p312
      %s315 = sadd.s32 %s314, 1
      %p318 = scmp.eq.s32.totalorder %s28, 1
      %p319 = scmp.ne.s32.totalorder %s314, %s316
      %p320 = scmp.eq.s32.totalorder %s28, 0
      %p321 = por %p319, %p320
      %p322 = scmp.ne.s32.totalorder %s314, %s316
      %p323 = scmp.eq.s32.totalorder %s33, 1
      %p324 = por %p322, %p323
      %p325 = scmp.ne.s32.totalorder %s316, %s317
      %p326 = scmp.eq.s32.totalorder %s33, 0
      %p327 = por %p325, %p326
      %p328 = scmp.ne.s32.totalorder %s316, %s317
      %p329 = scmp.eq.s32.totalorder %s34, 1
      %p330 = por %p328, %p329
      %p332 = scmp.ne.s32.totalorder %s317, %s331
      %p333 = scmp.eq.s32.totalorder %s34, 0
      %p334 = por %p332, %p333
      %s335 = ssub.s32 %s28, %s35
      %p336 = scmp.eq.s32.totalorder %s335, 0
      %s338 = sadd.s32 %s337, 1
      %s339 = scalar_select %p336, %s337, %s338
      %p342 = pneg %p336
      %p343 = scmp.eq.s32.totalorder %s28, 1
      %p344 = por %p342, %p343
      %p345 = scmp.ne.s32.totalorder %s337, %s340
      %p346 = scmp.eq.s32.totalorder %s28, 0
      %p347 = por %p345, %p346
      %p348 = scmp.ne.s32.totalorder %s337, %s340
      %p349 = scmp.eq.s32.totalorder %s33, 1
      %p350 = por %p348, %p349
      %p351 = scmp.ne.s32.totalorder %s340, %s341
      %p352 = scmp.eq.s32.totalorder %s33, 0
      %p353 = por %p351, %p352
      %p354 = scmp.ne.s32.totalorder %s340, %s341
      %p355 = scmp.eq.s32.totalorder %s34, 1
      %p356 = por %p354, %p355
      %p358 = scmp.ne.s32.totalorder %s341, %s357
      %p359 = scmp.eq.s32.totalorder %s34, 0
      %p360 = por %p358, %p359
      %s361 = ssub.s32 %s28, %s35
      %p362 = scmp.eq.s32.totalorder %s361, 0
      %s364 = sadd.s32 %s363, 1
      %s365 = scalar_select %p362, %s363, %s364
      %p368 = pneg %p362
      %p369 = scmp.eq.s32.totalorder %s28, 1
      %p370 = por %p368, %p369
      %p371 = scmp.ne.s32.totalorder %s363, %s366
      %p372 = scmp.eq.s32.totalorder %s28, 0
      %p373 = por %p371, %p372
      %p374 = scmp.ne.s32.totalorder %s363, %s366
      %p375 = scmp.eq.s32.totalorder %s33, 1
      %p376 = por %p374, %p375
      %p377 = scmp.ne.s32.totalorder %s366, %s367
      %p378 = scmp.eq.s32.totalorder %s33, 0
      %p379 = por %p377, %p378
      %p380 = scmp.ne.s32.totalorder %s366, %s367
      %p381 = scmp.eq.s32.totalorder %s34, 1
      %p382 = por %p380, %p381
      %p384 = scmp.ne.s32.totalorder %s367, %s383
      %p385 = scmp.eq.s32.totalorder %s34, 0
      %p386 = por %p384, %p385
      %p387 = scmp.le.s32.totalorder 1, %s28
      %p388 = scmp.lt.s32.totalorder %s28, 3
      %p389 = pnand %p387, %p388
      %p390 = pneg %p389
      // Predicated region
      $region9: #{tpu_custom_call.1} parent=5 // pred_check
        _
      $region10: #{tpu_custom_call.1} parent=5 // pred_check_branch
        %392 = sbr.rel (%p389) target = $region12
      $region11: #{tpu_custom_call.1} parent=5 // pred_region
        %s393 = ssub.s32 %s28, 1
        // Predicated region
        $region13: #{tpu_custom_call.1} parent=11 // pred_check
          %p394 = pneg %p75
        $region14: #{tpu_custom_call.1} parent=11 // pred_check_branch
          %396 = sbr.rel (%p394) target = $region16
        $region15: #{tpu_custom_call.1} parent=11 // pred_region
          _
        $region16: #{tpu_custom_call.1} parent=11 // pred_fallthru
          _
        // Predicated region
        $region17: #{tpu_custom_call.1} parent=11 // pred_check
          %p397 = pneg %p96
        $region18: #{tpu_custom_call.1} parent=11 // pred_check_branch
          %399 = sbr.rel (%p397) target = $region20
        $region19: #{tpu_custom_call.1} parent=11 // pred_region
          _
        $region20: #{tpu_custom_call.1} parent=11 // pred_fallthru
          _
        // Predicated region
        $region21: #{tpu_custom_call.1} parent=11 // pred_check
          %p400 = pneg %p117
        $region22: #{tpu_custom_call.1} parent=11 // pred_check_branch
          %402 = sbr.rel (%p400) target = $region24
        $region23: #{tpu_custom_call.1} parent=11 // pred_region
          %s404 = ssub.s32 12288, 12288
          %405 = vsyncadd [#allocation3], %s404
          %s406 = sshll.u32 [#allocation2], 4
          %s407 = int_to_ptr.vmem [resolvable:$true] %s406
          %412 = dma.hbm_to_vmem [thread:$0]  %s3, 12288, %s407, [#allocation3], 384, 384, 24
        $region24: #{tpu_custom_call.1} parent=11 // pred_fallthru
          _
        // Predicated region
        $region25: #{tpu_custom_call.1} parent=11 // pred_check
          %p413 = pneg %p138
        $region26: #{tpu_custom_call.1} parent=11 // pred_check_branch
          %415 = sbr.rel (%p413) target = $region28
        $region27: #{tpu_custom_call.1} parent=11 // pred_region
          _
        $region28: #{tpu_custom_call.1} parent=11 // pred_fallthru
          _
        // Predicated region
        $region29: #{tpu_custom_call.1} parent=11 // pred_check
          %p416 = pneg %p159
        $region30: #{tpu_custom_call.1} parent=11 // pred_check_branch
          %418 = sbr.rel (%p416) target = $region32
        $region31: #{tpu_custom_call.1} parent=11 // pred_region
          %s420 = ssub.s32 4096, 4096
          %421 = vsyncadd [#allocation6], %s420
          %s422 = sshll.u32 [#allocation5], 4
          %s423 = int_to_ptr.vmem [resolvable:$true] %s422
          %428 = dma.hbm_to_vmem [thread:$0]  %s5, 4096, %s423, [#allocation6], 128, 128, 8
        $region32: #{tpu_custom_call.1} parent=11 // pred_fallthru
          _
        // Predicated region
        $region33: #{tpu_custom_call.1} parent=11 // pred_check
          %p429 = pneg %p180
        $region34: #{tpu_custom_call.1} parent=11 // pred_check_branch
          %431 = sbr.rel (%p429) target = $region36
        $region35: #{tpu_custom_call.1} parent=11 // pred_region
          _
        $region36: #{tpu_custom_call.1} parent=11 // pred_fallthru
          _
        // Predicated region
        $region37: #{tpu_custom_call.1} parent=11 // pred_check
          %p432 = pneg %p201
        $region38: #{tpu_custom_call.1} parent=11 // pred_check_branch
          %434 = sbr.rel (%p432) target = $region40
        $region39: #{tpu_custom_call.1} parent=11 // pred_region
          _
        $region40: #{tpu_custom_call.1} parent=11 // pred_fallthru
          _
        // Predicated region
        $region41: #{tpu_custom_call.1} parent=11 // pred_check
          %p435 = pneg %p222
        $region42: #{tpu_custom_call.1} parent=11 // pred_check_branch
          %437 = sbr.rel (%p435) target = $region44
        $region43: #{tpu_custom_call.1} parent=11 // pred_region
          _
        $region44: #{tpu_custom_call.1} parent=11 // pred_fallthru
          _
        // Predicated region
        $region45: #{tpu_custom_call.1} parent=11 // pred_check
          %p438 = pneg %p243
        $region46: #{tpu_custom_call.1} parent=11 // pred_check_branch
          %440 = sbr.rel (%p438) target = $region48
        $region47: #{tpu_custom_call.1} parent=11 // pred_region
          %s442 = ssub.s32 16384, 16384
          %443 = vsyncadd [#allocation6], %s442
          %s444 = sshll.u32 [#allocation7], 4
          %s445 = int_to_ptr.vmem [resolvable:$true] %s444
          %450 = dma.hbm_to_vmem [thread:$0]  %s9, 16384, %s445, [#allocation6], 512, 512, 32
        $region48: #{tpu_custom_call.1} parent=11 // pred_fallthru
          _
        // Predicated region
        $region49: #{tpu_custom_call.1} parent=11 // pred_check
          %p451 = pneg %p264
        $region50: #{tpu_custom_call.1} parent=11 // pred_check_branch
          %453 = sbr.rel (%p451) target = $region52
        $region51: #{tpu_custom_call.1} parent=11 // pred_region
          _
        $region52: #{tpu_custom_call.1} parent=11 // pred_fallthru
          _
        // Predicated region
        $region53: #{tpu_custom_call.1} parent=11 // pred_check
          %p454 = pneg %p285
        $region54: #{tpu_custom_call.1} parent=11 // pred_check_branch
          %456 = sbr.rel (%p454) target = $region56
        $region55: #{tpu_custom_call.1} parent=11 // pred_region
          %s458 = ssub.s32 16384, 16384
          %459 = vsyncadd [#allocation9], %s458
          %s460 = sshll.u32 [#allocation8], 4
          %s461 = int_to_ptr.vmem [resolvable:$true] %s460
          %466 = dma.hbm_to_vmem [thread:$0]  %s11, 16384, %s461, [#allocation9], 128, 128, 8
        $region56: #{tpu_custom_call.1} parent=11 // pred_fallthru
          _
        // Predicated region
        $region57: #{tpu_custom_call.1} parent=11 // pred_check
          %p467 = pneg %p306
        $region58: #{tpu_custom_call.1} parent=11 // pred_check_branch
          %469 = sbr.rel (%p467) target = $region60
        $region59: #{tpu_custom_call.1} parent=11 // pred_region
          _
        $region60: #{tpu_custom_call.1} parent=11 // pred_fallthru
          _
        // Predicated region
        $region61: #{tpu_custom_call.1} parent=11 // pred_check
          %p470 = pneg %p327
        $region62: #{tpu_custom_call.1} parent=11 // pred_check_branch
          %472 = sbr.rel (%p470) target = $region64
        $region63: #{tpu_custom_call.1} parent=11 // pred_region
          _
        $region64: #{tpu_custom_call.1} parent=11 // pred_fallthru
          _
      $region12: #{tpu_custom_call.1} parent=5 // pred_fallthru
        _
      %p473 = scmp.lt.s32.totalorder %s28, 2
      // Predicated region
      $region65: #{tpu_custom_call.1} parent=5 // pred_check
        %p474 = pneg %p473
      $region66: #{tpu_custom_call.1} parent=5 // pred_check_branch
        %476 = sbr.rel (%p474) target = $region68
      $region67: #{tpu_custom_call.1} parent=5 // pred_region
        // Predicated region
        $region69: #{tpu_custom_call.1} parent=67 // pred_check
          %p477 = pneg %p48
        $region70: #{tpu_custom_call.1} parent=67 // pred_check_branch
          %479 = sbr.rel (%p477) target = $region72
        $region71: #{tpu_custom_call.1} parent=67 // pred_region
          %p480 = scmp.lt.s32.totalorder %s28, 1
          %s481 = scalar_select %p480, %s28, 1
          %s482 = smul.addr %s481, 6
          %s483 = smul.addr %s482, 8
          %s484 = scalar_lea.vmem %s0, %s483
        $region72: #{tpu_custom_call.1} parent=67 // pred_fallthru
          _
      $region68: #{tpu_custom_call.1} parent=5 // pred_fallthru
        _
      %p485 = scmp.le.s32.totalorder 1, %s28
      %p486 = scmp.lt.s32.totalorder %s28, 3
      %p487 = pnand %p485, %p486
      %p488 = pneg %p487
      // Predicated region
      $region73: #{tpu_custom_call.1} parent=5 // pred_check
        _
      $region74: #{tpu_custom_call.1} parent=5 // pred_check_branch
        %490 = sbr.rel (%p487) target = $region76
      $region75: #{tpu_custom_call.1} parent=5 // pred_region
        %s491 = ssub.s32 %s28, 1
        // Predicated region
        $region77: #{tpu_custom_call.1} parent=75 // pred_check
          %p492 = pneg %p117
        $region78: #{tpu_custom_call.1} parent=75 // pred_check_branch
          %494 = sbr.rel (%p492) target = $region80
        $region79: #{tpu_custom_call.1} parent=75 // pred_region
          %495 = dma.done [#allocation3], 12288
        $region80: #{tpu_custom_call.1} parent=75 // pred_fallthru
          _
        // Predicated region
        $region81: #{tpu_custom_call.1} parent=75 // pred_check
          %p496 = pneg %p159
        $region82: #{tpu_custom_call.1} parent=75 // pred_check_branch
          %498 = sbr.rel (%p496) target = $region84
        $region83: #{tpu_custom_call.1} parent=75 // pred_region
          %499 = dma.done [#allocation6], 4096
        $region84: #{tpu_custom_call.1} parent=75 // pred_fallthru
          _
        // Predicated region
        $region85: #{tpu_custom_call.1} parent=75 // pred_check
          %p500 = pneg %p243
        $region86: #{tpu_custom_call.1} parent=75 // pred_check_branch
          %502 = sbr.rel (%p500) target = $region88
        $region87: #{tpu_custom_call.1} parent=75 // pred_region
          %503 = dma.done [#allocation6], 16384
        $region88: #{tpu_custom_call.1} parent=75 // pred_fallthru
          _
        // Predicated region
        $region89: #{tpu_custom_call.1} parent=75 // pred_check
          %p504 = pneg %p285
        $region90: #{tpu_custom_call.1} parent=75 // pred_check_branch
          %506 = sbr.rel (%p504) target = $region92
        $region91: #{tpu_custom_call.1} parent=75 // pred_region
          %507 = dma.done [#allocation9], 16384
        $region92: #{tpu_custom_call.1} parent=75 // pred_fallthru
          _
        %p508 = scmp.lt.s32.totalorder %s33, 1
        %s509 = scalar_select %p508, %s33, 1
        %s510 = smul.addr %s509, 6
        %s511 = smul.addr %s510, 8
        %s512 = scalar_lea.vmem %s0, %s511
        %p513 = pneg %p54
        %p514 = pneg %p51
        %p515 = pneg %p75
        %p516 = pneg %p72
        %p517 = pneg %p96
        %p518 = pneg %p93
        %p519 = pneg %p117
        %p520 = pneg %p114
        %p521 = pneg %p138
        %p522 = pneg %p135
        %p523 = pneg %p159
        %p524 = pneg %p156
        %p525 = pneg %p180
        %p526 = pneg %p177
        %p527 = pneg %p201
        %p528 = pneg %p198
        %p529 = pneg %p222
        %p530 = pneg %p219
        %p531 = pneg %p243
        %p532 = pneg %p240
        %p533 = pneg %p264
        %p534 = pneg %p261
        %p535 = pneg %p285
        %p536 = pneg %p282
        %p537 = pneg %p306
        %p538 = pneg %p303
        %p539 = pneg %p327
        %p540 = pneg %p324
        %p541 = pneg %p353
        %p542 = pneg %p350
        %p543 = scmp.lt.s32.totalorder %s33, 1
        %s544 = scalar_select %p543, %s33, 1
        %s545 = smul.addr %s544, 6
        %s546 = smul.addr %s545, 8
        %s547 = scalar_lea.vmem %s14, %s546
        %p548 = pneg %p379
        %p549 = pneg %p376
        %s550 = sand.u32 %s366, 1
        %s551 = scalar_lea.sflag [#allocation4], %s550
        %s552 = sand.u32 %s366, 1
        %s553 = scalar_lea.vmem [#allocation10], %s552
        %p554 = scmp.lt.s32.totalorder %s33, 1
        %s555 = scalar_select %p554, %s33, 1
        %s556 = smul.addr %s555, 6
        %s557 = smul.addr %s556, 8
        %s558 = scalar_lea.vmem %s0, %s557
        %p559 = scmp.lt.s32.totalorder %s33, 1
        %s560 = scalar_select %p559, %s33, 1
        %s561 = smul.addr %s560, 6
        %s562 = smul.addr %s561, 8
        %s563 = scalar_lea.vmem %s14, %s562
        %v565 = vld [vmem:[%s558] sm:$0xff]
        %v566 = vld [vmem:[%s558 + $0x8] sm:$0xff]
        %v567 = vld [vmem:[%s558 + $0x10] sm:$0xff]
        %v568 = vld [vmem:[%s558 + $0x18] sm:$0xff]
        %v569 = vld [vmem:[%s558 + $0x20] sm:$0x1]
        %v570 = vld [vmem:[%s558 + $0x28] sm:$0x1]
        %v571 = vld [vmem:[%s1] sm:$0x3]
        %v572 = vld [vmem:[%s2] sm:$0x3]
        %v573 = vadd.f32 %v565, %v566
        %574 = vadd.xlane.f32.xlu0 %v573
        %v575 = vpop.xlane.xlu0 %574
        %v576 = vadd.f32 %v567, %v568
        %577 = vadd.xlane.f32.xlu0 %v576
        %v578 = vpop.xlane.xlu0 %577
        %vm579 = vcmask 1040384
        %v580 = vsel %vm579, %v569, 0.0
        %v581 = vsel %vm579, %v570, 0.0
        %v582 = vadd.f32 %v580, %v581
        %583 = vadd.xlane.f32.xlu0 %v582
        %v584 = vpop.xlane.xlu0 %583
        %v585 = vrcp.pop 256.0
        %v586 = vmul.f32 %v575, %v585
        %v587 = vmul.f32 %v578, %v585
        %v588 = vmul.f32 %v584, %v585
        %v589 = vsub.f32 %v565, %v586
        %v590 = vsub.f32 %v566, %v586
        %v591 = vsub.f32 %v567, %v587
        %v592 = vsub.f32 %v568, %v587
        %v593 = vsub.f32 %v569, %v588
        %v594 = vsub.f32 %v570, %v588
        %v595 = vmul.f32 %v589, %v589
        %v596 = vmul.f32 %v590, %v590
        %v597 = vmul.f32 %v591, %v591
        %v598 = vmul.f32 %v592, %v592
        %v599 = vmul.f32 %v593, %v593
        %v600 = vmul.f32 %v594, %v594
        %v601 = vadd.f32 %v595, %v596
        %602 = vadd.xlane.f32.xlu0 %v601
        %v603 = vpop.xlane.xlu0 %602
        %v604 = vadd.f32 %v597, %v598
        %605 = vadd.xlane.f32.xlu0 %v604
        %v606 = vpop.xlane.xlu0 %605
        %v607 = vsel %vm579, %v599, 0.0
        %v608 = vsel %vm579, %v600, 0.0
        %v609 = vadd.f32 %v607, %v608
        %610 = vadd.xlane.f32.xlu0 %v609
        %v611 = vpop.xlane.xlu0 %610
        %v612 = vmul.f32 %v603, %v585
        %v613 = vmul.f32 %v606, %v585
        %v614 = vmul.f32 %v611, %v585
        %v615 = vadd.f32 %v612, 1e-06
        %v616 = vadd.f32 %v613, 1e-06
        %v617 = vadd.f32 %v614, 1e-06
        %v618 = vrsqrt.pop %v615
        %v619 = vrsqrt.pop %v616
        %v620 = vrsqrt.pop %v617
        %v621 = vmul.f32 %v589, %v618
        %v622 = vmul.f32 %v590, %v618
        %v623 = vmul.f32 %v591, %v619
        %v624 = vmul.f32 %v592, %v619
        %v625 = vmul.f32 %v593, %v620
        %v626 = vmul.f32 %v594, %v620
        %v628 = vlaneseq
        %v629 = vshrl.u32 %v628, 7
        %v630 = vsub.s32 0, %v629
        %v631 = vrot.slane %v571, %v630
        %v632 = vlaneseq
        %v633 = vshrl.u32 %v632, 7
        %v634 = vsub.s32 1, %v633
        %v635 = vrot.slane %v571, %v634
        %v638 = vmul.f32 %v621, %v631
        %v639 = vmul.f32 %v622, %v635
        %v640 = vmul.f32 %v623, %v631
        %v641 = vmul.f32 %v624, %v635
        %v642 = vmul.f32 %v625, %v631
        %v643 = vmul.f32 %v626, %v635
        %v645 = vlaneseq
        %v646 = vshrl.u32 %v645, 7
        %v647 = vsub.s32 0, %v646
        %v648 = vrot.slane %v572, %v647
        %v649 = vlaneseq
        %v650 = vshrl.u32 %v649, 7
        %v651 = vsub.s32 1, %v650
        %v652 = vrot.slane %v572, %v651
        %v655 = vadd.f32 %v638, %v648
        %v656 = vadd.f32 %v639, %v652
        %v657 = vadd.f32 %v640, %v648
        %v658 = vadd.f32 %v641, %v652
        %v659 = vadd.f32 %v642, %v648
        %v660 = vadd.f32 %v643, %v652
        %v661 = vpack.c.bf16 %v657, %v655
        %v662 = vpack.c.bf16 %v658, %v656
        %v663 = vpack.c.bf16 %v659, %v659
        %v664 = vpack.c.bf16 %v660, %v660
        %v665 = vld [vmem:[#allocation2] sm:$0xff]
        %v666 = vld [vmem:[#allocation2 + $0x8] sm:$0xff]
        %v667 = vld [vmem:[#allocation2 + $0x10] sm:$0xff]
        %v668 = vld [vmem:[#allocation2 + $0x18] sm:$0xff]
        %v669 = vld [vmem:[#allocation2 + $0x20] sm:$0xff]
        %v670 = vld [vmem:[#allocation2 + $0x28] sm:$0xff]
        %v671 = vld [vmem:[#allocation2 + $0x30] sm:$0xff]
        %v672 = vld [vmem:[#allocation2 + $0x38] sm:$0xff]
        %v673 = vld [vmem:[#allocation2 + $0x40] sm:$0xff]
        %v674 = vld [vmem:[#allocation2 + $0x48] sm:$0xff]
        %v675 = vld [vmem:[#allocation2 + $0x50] sm:$0xff]
        %v676 = vld [vmem:[#allocation2 + $0x58] sm:$0xff]
        %v677 = vld [vmem:[#allocation2 + $0x60] sm:$0xff]
        %v678 = vld [vmem:[#allocation2 + $0x68] sm:$0xff]
        %v679 = vld [vmem:[#allocation2 + $0x70] sm:$0xff]
        %v680 = vld [vmem:[#allocation2 + $0x78] sm:$0xff]
        %v681 = vld [vmem:[#allocation2 + $0x80] sm:$0xff]
        %v682 = vld [vmem:[#allocation2 + $0x88] sm:$0xff]
        %v683 = vld [vmem:[#allocation2 + $0x90] sm:$0xff]
        %v684 = vld [vmem:[#allocation2 + $0x98] sm:$0xff]
        %v685 = vld [vmem:[#allocation2 + $0xa0] sm:$0xff]
        %v686 = vld [vmem:[#allocation2 + $0xa8] sm:$0xff]
        %v687 = vld [vmem:[#allocation2 + $0xb0] sm:$0xff]
        %v688 = vld [vmem:[#allocation2 + $0xb8] sm:$0xff]
        %v689 = vld [vmem:[#allocation2 + $0xc0] sm:$0xff]
        %v690 = vld [vmem:[#allocation2 + $0xc8] sm:$0xff]
        %v691 = vld [vmem:[#allocation2 + $0xd0] sm:$0xff]
        %v692 = vld [vmem:[#allocation2 + $0xd8] sm:$0xff]
        %v693 = vld [vmem:[#allocation2 + $0xe0] sm:$0xff]
        %v694 = vld [vmem:[#allocation2 + $0xe8] sm:$0xff]
        %v695 = vld [vmem:[#allocation2 + $0xf0] sm:$0xff]
        %v696 = vld [vmem:[#allocation2 + $0xf8] sm:$0xff]
        %v697 = vld [vmem:[#allocation2 + $0x100] sm:$0xff]
        %v698 = vld [vmem:[#allocation2 + $0x108] sm:$0xff]
        %v699 = vld [vmem:[#allocation2 + $0x110] sm:$0xff]
        %v700 = vld [vmem:[#allocation2 + $0x118] sm:$0xff]
        %v701 = vld [vmem:[#allocation2 + $0x120] sm:$0xff]
        %v702 = vld [vmem:[#allocation2 + $0x128] sm:$0xff]
        %v703 = vld [vmem:[#allocation2 + $0x130] sm:$0xff]
        %v704 = vld [vmem:[#allocation2 + $0x138] sm:$0xff]
        %v705 = vld [vmem:[#allocation2 + $0x140] sm:$0xff]
        %v706 = vld [vmem:[#allocation2 + $0x148] sm:$0xff]
        %v707 = vld [vmem:[#allocation2 + $0x150] sm:$0xff]
        %v708 = vld [vmem:[#allocation2 + $0x158] sm:$0xff]
        %v709 = vld [vmem:[#allocation2 + $0x160] sm:$0xff]
        %v710 = vld [vmem:[#allocation2 + $0x168] sm:$0xff]
        %v711 = vld [vmem:[#allocation2 + $0x170] sm:$0xff]
        %v712 = vld [vmem:[#allocation2 + $0x178] sm:$0xff]
        %v713 = vld [vmem:[#allocation2 + $0x180] sm:$0xff]
        %v714 = vld [vmem:[#allocation2 + $0x188] sm:$0xff]
        %v715 = vld [vmem:[#allocation2 + $0x190] sm:$0xff]
        %v716 = vld [vmem:[#allocation2 + $0x198] sm:$0xff]
        %v717 = vld [vmem:[#allocation2 + $0x1a0] sm:$0xff]
        %v718 = vld [vmem:[#allocation2 + $0x1a8] sm:$0xff]
        %v719 = vld [vmem:[#allocation2 + $0x1b0] sm:$0xff]
        %v720 = vld [vmem:[#allocation2 + $0x1b8] sm:$0xff]
        %v721 = vld [vmem:[#allocation2 + $0x1c0] sm:$0xff]
        %v722 = vld [vmem:[#allocation2 + $0x1c8] sm:$0xff]
        %v723 = vld [vmem:[#allocation2 + $0x1d0] sm:$0xff]
        %v724 = vld [vmem:[#allocation2 + $0x1d8] sm:$0xff]
        %v725 = vld [vmem:[#allocation2 + $0x1e0] sm:$0xff]
        %v726 = vld [vmem:[#allocation2 + $0x1e8] sm:$0xff]
        %v727 = vld [vmem:[#allocation2 + $0x1f0] sm:$0xff]
        %v728 = vld [vmem:[#allocation2 + $0x1f8] sm:$0xff]
        %v729 = vld [vmem:[#allocation2 + $0x200] sm:$0xff]
        %v730 = vld [vmem:[#allocation2 + $0x208] sm:$0xff]
        %v731 = vld [vmem:[#allocation2 + $0x210] sm:$0xff]
        %v732 = vld [vmem:[#allocation2 + $0x218] sm:$0xff]
        %v733 = vld [vmem:[#allocation2 + $0x220] sm:$0xff]
        %v734 = vld [vmem:[#allocation2 + $0x228] sm:$0xff]
        %v735 = vld [vmem:[#allocation2 + $0x230] sm:$0xff]
        %v736 = vld [vmem:[#allocation2 + $0x238] sm:$0xff]
        %v737 = vld [vmem:[#allocation2 + $0x240] sm:$0xff]
        %v738 = vld [vmem:[#allocation2 + $0x248] sm:$0xff]
        %v739 = vld [vmem:[#allocation2 + $0x250] sm:$0xff]
        %v740 = vld [vmem:[#allocation2 + $0x258] sm:$0xff]
        %v741 = vld [vmem:[#allocation2 + $0x260] sm:$0xff]
        %v742 = vld [vmem:[#allocation2 + $0x268] sm:$0xff]
        %v743 = vld [vmem:[#allocation2 + $0x270] sm:$0xff]
        %v744 = vld [vmem:[#allocation2 + $0x278] sm:$0xff]
        %v745 = vld [vmem:[#allocation2 + $0x280] sm:$0xff]
        %v746 = vld [vmem:[#allocation2 + $0x288] sm:$0xff]
        %v747 = vld [vmem:[#allocation2 + $0x290] sm:$0xff]
        %v748 = vld [vmem:[#allocation2 + $0x298] sm:$0xff]
        %v749 = vld [vmem:[#allocation2 + $0x2a0] sm:$0xff]
        %v750 = vld [vmem:[#allocation2 + $0x2a8] sm:$0xff]
        %v751 = vld [vmem:[#allocation2 + $0x2b0] sm:$0xff]
        %v752 = vld [vmem:[#allocation2 + $0x2b8] sm:$0xff]
        %v753 = vld [vmem:[#allocation2 + $0x2c0] sm:$0xff]
        %v754 = vld [vmem:[#allocation2 + $0x2c8] sm:$0xff]
        %v755 = vld [vmem:[#allocation2 + $0x2d0] sm:$0xff]
        %v756 = vld [vmem:[#allocation2 + $0x2d8] sm:$0xff]
        %v757 = vld [vmem:[#allocation2 + $0x2e0] sm:$0xff]
        %v758 = vld [vmem:[#allocation2 + $0x2e8] sm:$0xff]
        %v759 = vld [vmem:[#allocation2 + $0x2f0] sm:$0xff]
        %v760 = vld [vmem:[#allocation2 + $0x2f8] sm:$0xff]
        %v761 = vld [vmem:[%s4] sm:$0x3f]
        %v763 = vlaneseq
        %v764 = vshrl.u32 %v763, 7
        %v765 = vsub.s32 0, %v764
        %v766 = vrot.slane %v761, %v765
        %v767 = vlaneseq
        %v768 = vshrl.u32 %v767, 7
        %v769 = vsub.s32 1, %v768
        %v770 = vrot.slane %v761, %v769
        %v771 = vlaneseq
        %v772 = vshrl.u32 %v771, 7
        %v773 = vsub.s32 2, %v772
        %v774 = vrot.slane %v761, %v773
        %v775 = vlaneseq
        %v776 = vshrl.u32 %v775, 7
        %v777 = vsub.s32 3, %v776
        %v778 = vrot.slane %v761, %v777
        %v779 = vlaneseq
        %v780 = vshrl.u32 %v779, 7
        %v781 = vsub.s32 4, %v780
        %v782 = vrot.slane %v761, %v781
        %v783 = vlaneseq
        %v784 = vshrl.u32 %v783, 7
        %v785 = vsub.s32 5, %v784
        %v786 = vrot.slane %v761, %v785
        %v889 = vunpack.c.l.b16 %v665
        %v890 = vunpack.c.h.b16 %v665
        %v891 = vunpack.c.l.b16 %v666
        %v892 = vunpack.c.h.b16 %v666
        %v893 = vunpack.c.l.b16 %v667
        %v894 = vunpack.c.h.b16 %v667
        %v895 = vunpack.c.l.b16 %v668
        %v896 = vunpack.c.h.b16 %v668
        %v897 = vunpack.c.l.b16 %v669
        %v898 = vunpack.c.h.b16 %v669
        %v899 = vunpack.c.l.b16 %v670
        %v900 = vunpack.c.h.b16 %v670
        %v901 = vunpack.c.l.b16 %v671
        %v902 = vunpack.c.h.b16 %v671
        %v903 = vunpack.c.l.b16 %v672
        %v904 = vunpack.c.h.b16 %v672
        %v905 = vunpack.c.l.b16 %v673
        %v906 = vunpack.c.h.b16 %v673
        %v907 = vunpack.c.l.b16 %v674
        %v908 = vunpack.c.h.b16 %v674
        %v909 = vunpack.c.l.b16 %v675
        %v910 = vunpack.c.h.b16 %v675
        %v911 = vunpack.c.l.b16 %v676
        %v912 = vunpack.c.h.b16 %v676
        %v913 = vunpack.c.l.b16 %v677
        %v914 = vunpack.c.h.b16 %v677
        %v915 = vunpack.c.l.b16 %v678
        %v916 = vunpack.c.h.b16 %v678
        %v917 = vunpack.c.l.b16 %v679
        %v918 = vunpack.c.h.b16 %v679
        %v919 = vunpack.c.l.b16 %v680
        %v920 = vunpack.c.h.b16 %v680
        %v921 = vunpack.c.l.b16 %v681
        %v922 = vunpack.c.h.b16 %v681
        %v923 = vunpack.c.l.b16 %v682
        %v924 = vunpack.c.h.b16 %v682
        %v925 = vunpack.c.l.b16 %v683
        %v926 = vunpack.c.h.b16 %v683
        %v927 = vunpack.c.l.b16 %v684
        %v928 = vunpack.c.h.b16 %v684
        %v929 = vunpack.c.l.b16 %v685
        %v930 = vunpack.c.h.b16 %v685
        %v931 = vunpack.c.l.b16 %v686
        %v932 = vunpack.c.h.b16 %v686
        %v933 = vunpack.c.l.b16 %v687
        %v934 = vunpack.c.h.b16 %v687
        %v935 = vunpack.c.l.b16 %v688
        %v936 = vunpack.c.h.b16 %v688
        %v937 = vunpack.c.l.b16 %v689
        %v938 = vunpack.c.h.b16 %v689
        %v939 = vunpack.c.l.b16 %v690
        %v940 = vunpack.c.h.b16 %v690
        %v941 = vunpack.c.l.b16 %v691
        %v942 = vunpack.c.h.b16 %v691
        %v943 = vunpack.c.l.b16 %v692
        %v944 = vunpack.c.h.b16 %v692
        %v945 = vunpack.c.l.b16 %v693
        %v946 = vunpack.c.h.b16 %v693
        %v947 = vunpack.c.l.b16 %v694
        %v948 = vunpack.c.h.b16 %v694
        %v949 = vunpack.c.l.b16 %v695
        %v950 = vunpack.c.h.b16 %v695
        %v951 = vunpack.c.l.b16 %v696
        %v952 = vunpack.c.h.b16 %v696
        %v953 = vunpack.c.l.b16 %v697
        %v954 = vunpack.c.h.b16 %v697
        %v955 = vunpack.c.l.b16 %v698
        %v956 = vunpack.c.h.b16 %v698
        %v957 = vunpack.c.l.b16 %v699
        %v958 = vunpack.c.h.b16 %v699
        %v959 = vunpack.c.l.b16 %v700
        %v960 = vunpack.c.h.b16 %v700
        %v961 = vunpack.c.l.b16 %v701
        %v962 = vunpack.c.h.b16 %v701
        %v963 = vunpack.c.l.b16 %v702
        %v964 = vunpack.c.h.b16 %v702
        %v965 = vunpack.c.l.b16 %v703
        %v966 = vunpack.c.h.b16 %v703
        %v967 = vunpack.c.l.b16 %v704
        %v968 = vunpack.c.h.b16 %v704
        %v969 = vunpack.c.l.b16 %v705
        %v970 = vunpack.c.h.b16 %v705
        %v971 = vunpack.c.l.b16 %v706
        %v972 = vunpack.c.h.b16 %v706
        %v973 = vunpack.c.l.b16 %v707
        %v974 = vunpack.c.h.b16 %v707
        %v975 = vunpack.c.l.b16 %v708
        %v976 = vunpack.c.h.b16 %v708
        %v977 = vunpack.c.l.b16 %v709
        %v978 = vunpack.c.h.b16 %v709
        %v979 = vunpack.c.l.b16 %v710
        %v980 = vunpack.c.h.b16 %v710
        %v981 = vunpack.c.l.b16 %v711
        %v982 = vunpack.c.h.b16 %v711
        %v983 = vunpack.c.l.b16 %v712
        %v984 = vunpack.c.h.b16 %v712
        %v985 = vunpack.c.l.b16 %v713
        %v986 = vunpack.c.h.b16 %v713
        %v987 = vunpack.c.l.b16 %v714
        %v988 = vunpack.c.h.b16 %v714
        %v989 = vunpack.c.l.b16 %v715
        %v990 = vunpack.c.h.b16 %v715
        %v991 = vunpack.c.l.b16 %v716
        %v992 = vunpack.c.h.b16 %v716
        %v993 = vunpack.c.l.b16 %v717
        %v994 = vunpack.c.h.b16 %v717
        %v995 = vunpack.c.l.b16 %v718
        %v996 = vunpack.c.h.b16 %v718
        %v997 = vunpack.c.l.b16 %v719
        %v998 = vunpack.c.h.b16 %v719
        %v999 = vunpack.c.l.b16 %v720
        %v1000 = vunpack.c.h.b16 %v720
        %v1001 = vunpack.c.l.b16 %v721
        %v1002 = vunpack.c.h.b16 %v721
        %v1003 = vunpack.c.l.b16 %v722
        %v1004 = vunpack.c.h.b16 %v722
        %v1005 = vunpack.c.l.b16 %v723
        %v1006 = vunpack.c.h.b16 %v723
        %v1007 = vunpack.c.l.b16 %v724
        %v1008 = vunpack.c.h.b16 %v724
        %v1009 = vunpack.c.l.b16 %v725
        %v1010 = vunpack.c.h.b16 %v725
        %v1011 = vunpack.c.l.b16 %v726
        %v1012 = vunpack.c.h.b16 %v726
        %v1013 = vunpack.c.l.b16 %v727
        %v1014 = vunpack.c.h.b16 %v727
        %v1015 = vunpack.c.l.b16 %v728
        %v1016 = vunpack.c.h.b16 %v728
        %v1017 = vunpack.c.l.b16 %v729
        %v1018 = vunpack.c.h.b16 %v729
        %v1019 = vunpack.c.l.b16 %v730
        %v1020 = vunpack.c.h.b16 %v730
        %v1021 = vunpack.c.l.b16 %v731
        %v1022 = vunpack.c.h.b16 %v731
        %v1023 = vunpack.c.l.b16 %v732
        %v1024 = vunpack.c.h.b16 %v732
        %v1025 = vunpack.c.l.b16 %v733
        %v1026 = vunpack.c.h.b16 %v733
        %v1027 = vunpack.c.l.b16 %v734
        %v1028 = vunpack.c.h.b16 %v734
        %v1029 = vunpack.c.l.b16 %v735
        %v1030 = vunpack.c.h.b16 %v735
        %v1031 = vunpack.c.l.b16 %v736
        %v1032 = vunpack.c.h.b16 %v736
        %v1033 = vunpack.c.l.b16 %v737
        %v1034 = vunpack.c.h.b16 %v737
        %v1035 = vunpack.c.l.b16 %v738
        %v1036 = vunpack.c.h.b16 %v738
        %v1037 = vunpack.c.l.b16 %v739
        %v1038 = vunpack.c.h.b16 %v739
        %v1039 = vunpack.c.l.b16 %v740
        %v1040 = vunpack.c.h.b16 %v740
        %v1041 = vunpack.c.l.b16 %v741
        %v1042 = vunpack.c.h.b16 %v741
        %v1043 = vunpack.c.l.b16 %v742
        %v1044 = vunpack.c.h.b16 %v742
        %v1045 = vunpack.c.l.b16 %v743
        %v1046 = vunpack.c.h.b16 %v743
        %v1047 = vunpack.c.l.b16 %v744
        %v1048 = vunpack.c.h.b16 %v744
        %v1049 = vunpack.c.l.b16 %v745
        %v1050 = vunpack.c.h.b16 %v745
        %v1051 = vunpack.c.l.b16 %v746
        %v1052 = vunpack.c.h.b16 %v746
        %v1053 = vunpack.c.l.b16 %v747
        %v1054 = vunpack.c.h.b16 %v747
        %v1055 = vunpack.c.l.b16 %v748
        %v1056 = vunpack.c.h.b16 %v748
        %v1057 = vunpack.c.l.b16 %v749
        %v1058 = vunpack.c.h.b16 %v749
        %v1059 = vunpack.c.l.b16 %v750
        %v1060 = vunpack.c.h.b16 %v750
        %v1061 = vunpack.c.l.b16 %v751
        %v1062 = vunpack.c.h.b16 %v751
        %v1063 = vunpack.c.l.b16 %v752
        %v1064 = vunpack.c.h.b16 %v752
        %v1065 = vunpack.c.l.b16 %v753
        %v1066 = vunpack.c.h.b16 %v753
        %v1067 = vunpack.c.l.b16 %v754
        %v1068 = vunpack.c.h.b16 %v754
        %v1069 = vunpack.c.l.b16 %v755
        %v1070 = vunpack.c.h.b16 %v755
        %v1071 = vunpack.c.l.b16 %v756
        %v1072 = vunpack.c.h.b16 %v756
        %v1073 = vunpack.c.l.b16 %v757
        %v1074 = vunpack.c.h.b16 %v757
        %v1075 = vunpack.c.l.b16 %v758
        %v1076 = vunpack.c.h.b16 %v758
        %v1077 = vunpack.c.l.b16 %v759
        %v1078 = vunpack.c.h.b16 %v759
        %v1079 = vunpack.c.l.b16 %v760
        %v1080 = vunpack.c.h.b16 %v760
        %v1081 = vpack.c.b16 %v895, %v889
        %v1082 = vpack.c.b16 %v896, %v890
        %v1083 = vpack.c.b16 %v897, %v891
        %v1084 = vpack.c.b16 %v898, %v892
        %v1085 = vpack.c.b16 %v899, %v893
        %v1086 = vpack.c.b16 %v900, %v894
        %v1087 = vpack.c.b16 %v907, %v901
        %v1088 = vpack.c.b16 %v908, %v902
        %v1089 = vpack.c.b16 %v909, %v903
        %v1090 = vpack.c.b16 %v910, %v904
        %v1091 = vpack.c.b16 %v911, %v905
        %v1092 = vpack.c.b16 %v912, %v906
        %v1093 = vpack.c.b16 %v919, %v913
        %v1094 = vpack.c.b16 %v920, %v914
        %v1095 = vpack.c.b16 %v921, %v915
        %v1096 = vpack.c.b16 %v922, %v916
        %v1097 = vpack.c.b16 %v923, %v917
        %v1098 = vpack.c.b16 %v924, %v918
        %v1099 = vpack.c.b16 %v931, %v925
        %v1100 = vpack.c.b16 %v932, %v926
        %v1101 = vpack.c.b16 %v933, %v927
        %v1102 = vpack.c.b16 %v934, %v928
        %v1103 = vpack.c.b16 %v935, %v929
        %v1104 = vpack.c.b16 %v936, %v930
        %v1105 = vpack.c.b16 %v943, %v937
        %v1106 = vpack.c.b16 %v944, %v938
        %v1107 = vpack.c.b16 %v945, %v939
        %v1108 = vpack.c.b16 %v946, %v940
        %v1109 = vpack.c.b16 %v947, %v941
        %v1110 = vpack.c.b16 %v948, %v942
        %v1111 = vpack.c.b16 %v955, %v949
        %v1112 = vpack.c.b16 %v956, %v950
        %v1113 = vpack.c.b16 %v957, %v951
        %v1114 = vpack.c.b16 %v958, %v952
        %v1115 = vpack.c.b16 %v959, %v953
        %v1116 = vpack.c.b16 %v960, %v954
        %v1117 = vpack.c.b16 %v967, %v961
        %v1118 = vpack.c.b16 %v968, %v962
        %v1119 = vpack.c.b16 %v969, %v963
        %v1120 = vpack.c.b16 %v970, %v964
        %v1121 = vpack.c.b16 %v971, %v965
        %v1122 = vpack.c.b16 %v972, %v966
        %v1123 = vpack.c.b16 %v979, %v973
        %v1124 = vpack.c.b16 %v980, %v974
        %v1125 = vpack.c.b16 %v981, %v975
        %v1126 = vpack.c.b16 %v982, %v976
        %v1127 = vpack.c.b16 %v983, %v977
        %v1128 = vpack.c.b16 %v984, %v978
        %v1129 = vpack.c.b16 %v991, %v985
        %v1130 = vpack.c.b16 %v992, %v986
        %v1131 = vpack.c.b16 %v993, %v987
        %v1132 = vpack.c.b16 %v994, %v988
        %v1133 = vpack.c.b16 %v995, %v989
        %v1134 = vpack.c.b16 %v996, %v990
        %v1135 = vpack.c.b16 %v1003, %v997
        %v1136 = vpack.c.b16 %v1004, %v998
        %v1137 = vpack.c.b16 %v1005, %v999
        %v1138 = vpack.c.b16 %v1006, %v1000
        %v1139 = vpack.c.b16 %v1007, %v1001
        %v1140 = vpack.c.b16 %v1008, %v1002
        %v1141 = vpack.c.b16 %v1015, %v1009
        %v1142 = vpack.c.b16 %v1016, %v1010
        %v1143 = vpack.c.b16 %v1017, %v1011
        %v1144 = vpack.c.b16 %v1018, %v1012
        %v1145 = vpack.c.b16 %v1019, %v1013
        %v1146 = vpack.c.b16 %v1020, %v1014
        %v1147 = vpack.c.b16 %v1027, %v1021
        %v1148 = vpack.c.b16 %v1028, %v1022
        %v1149 = vpack.c.b16 %v1029, %v1023
        %v1150 = vpack.c.b16 %v1030, %v1024
        %v1151 = vpack.c.b16 %v1031, %v1025
        %v1152 = vpack.c.b16 %v1032, %v1026
        %v1153 = vpack.c.b16 %v1039, %v1033
        %v1154 = vpack.c.b16 %v1040, %v1034
        %v1155 = vpack.c.b16 %v1041, %v1035
        %v1156 = vpack.c.b16 %v1042, %v1036
        %v1157 = vpack.c.b16 %v1043, %v1037
        %v1158 = vpack.c.b16 %v1044, %v1038
        %v1159 = vpack.c.b16 %v1051, %v1045
        %v1160 = vpack.c.b16 %v1052, %v1046
        %v1161 = vpack.c.b16 %v1053, %v1047
        %v1162 = vpack.c.b16 %v1054, %v1048
        %v1163 = vpack.c.b16 %v1055, %v1049
        %v1164 = vpack.c.b16 %v1056, %v1050
        %v1165 = vpack.c.b16 %v1063, %v1057
        %v1166 = vpack.c.b16 %v1064, %v1058
        %v1167 = vpack.c.b16 %v1065, %v1059
        %v1168 = vpack.c.b16 %v1066, %v1060
        %v1169 = vpack.c.b16 %v1067, %v1061
        %v1170 = vpack.c.b16 %v1068, %v1062
        %v1171 = vpack.c.b16 %v1075, %v1069
        %v1172 = vpack.c.b16 %v1076, %v1070
        %v1173 = vpack.c.b16 %v1077, %v1071
        %v1174 = vpack.c.b16 %v1078, %v1072
        %v1175 = vpack.c.b16 %v1079, %v1073
        %v1176 = vpack.c.b16 %v1080, %v1074
        %1273 = vmatprep.subr.bf16.mxu0 %v1082
        %1274 = vmatpush1.bf16.msra.mxu0 %v1081
        %1275 = vmatprep.subr.bf16.mxu0 %v1088
        %1276 = vmatpush1.bf16.msra.mxu0 %v1087
        %1277 = vmatprep.subr.bf16.mxu0 %v1094
        %1278 = vmatpush1.bf16.msra.mxu0 %v1093
        %1279 = vmatprep.subr.bf16.mxu0 %v1100
        %1280 = vmatpush1.bf16.msra.mxu0 %v1099
        %1281 = vmatprep.subr.bf16.mxu0 %v1106
        %1282 = vmatpush1.bf16.msra.mxu0 %v1105
        %1283 = vmatprep.subr.bf16.mxu0 %v1112
        %1284 = vmatpush1.bf16.msra.mxu0 %v1111
        %1285 = vmatprep.subr.bf16.mxu0 %v1118
        %1286 = vmatpush1.bf16.msra.mxu0 %v1117
        %1287 = vmatprep.subr.bf16.mxu0 %v1124
        %1288 = vmatpush1.bf16.msra.mxu0 %v1123
        %1289 = vmatprep.subr.bf16.mxu0 %v1130
        %1290 = vmatpush1.bf16.msra.mxu0 %v1129
        %1291 = vmatprep.subr.bf16.mxu0 %v1136
        %1292 = vmatpush1.bf16.msra.mxu0 %v1135
        %1293 = vmatprep.subr.bf16.mxu0 %v1142
        %1294 = vmatpush1.bf16.msra.mxu0 %v1141
        %1295 = vmatprep.subr.bf16.mxu0 %v1148
        %1296 = vmatpush1.bf16.msra.mxu0 %v1147
        %1297 = vmatprep.subr.bf16.mxu0 %v1154
        %1298 = vmatpush1.bf16.msra.mxu0 %v1153
        %1299 = vmatprep.subr.bf16.mxu0 %v1160
        %1300 = vmatpush1.bf16.msra.mxu0 %v1159
        %1301 = vmatprep.subr.bf16.mxu0 %v1166
        %1302 = vmatpush1.bf16.msra.mxu0 %v1165
        %1303 = vmatprep.subr.bf16.mxu0 %v1172
        %1304 = vmatpush1.bf16.msra.mxu0 %v1171
        %1305 = vmatprep.mubr.bf16.mxu0 %v662
        %1306 = vmatmul.mubr.bf16.gmra.mrb[0].mxu0 %v661
        %v1307 = vpop.f32.mrb[0].mxu0
        %v1308 = vadd.f32 %v766, %v1307
        %v1309 = vpop.f32.mrb[0].mxu0
        %v1310 = vadd.f32 %v770, %v1309
        %v1311 = vpop.f32.mrb[0].mxu0
        %v1312 = vadd.f32 %v766, %v1311
        %v1313 = vpop.f32.mrb[0].mxu0
        %v1314 = vadd.f32 %v770, %v1313
        %1315 = vmatprep.mubr.bf16.mxu0 %v664
        %1316 = vmatmul.mubr.bf16.gmra.mrb[0].mxu0 %v663
        %v1317 = vpop.f32.mrb[0].mxu0
        %v1318 = vadd.f32 %v766, %v1317
        %v1319 = vpop.f32.mrb[0].mxu0
        %v1320 = vadd.f32 %v770, %v1319
        %v1321 = vpop.f32.mrb[0].mxu0
        %v1322 = vpop.f32.mrb[0].mxu0
        %1323 = vdwg.mxu0
        %1324 = vmatprep.subr.bf16.mxu0 %v1084
        %1325 = vmatpush1.bf16.msra.mxu0 %v1083
        %1326 = vmatprep.subr.bf16.mxu0 %v1090
        %1327 = vmatpush1.bf16.msra.mxu0 %v1089
        %1328 = vmatprep.subr.bf16.mxu0 %v1096
        %1329 = vmatpush1.bf16.msra.mxu0 %v1095
        %1330 = vmatprep.subr.bf16.mxu0 %v1102
        %1331 = vmatpush1.bf16.msra.mxu0 %v1101
        %1332 = vmatprep.subr.bf16.mxu0 %v1108
        %1333 = vmatpush1.bf16.msra.mxu0 %v1107
        %1334 = vmatprep.subr.bf16.mxu0 %v1114
        %1335 = vmatpush1.bf16.msra.mxu0 %v1113
        %1336 = vmatprep.subr.bf16.mxu0 %v1120
        %1337 = vmatpush1.bf16.msra.mxu0 %v1119
        %1338 = vmatprep.subr.bf16.mxu0 %v1126
        %1339 = vmatpush1.bf16.msra.mxu0 %v1125
        %1340 = vmatprep.subr.bf16.mxu0 %v1132
        %1341 = vmatpush1.bf16.msra.mxu0 %v1131
        %1342 = vmatprep.subr.bf16.mxu0 %v1138
        %1343 = vmatpush1.bf16.msra.mxu0 %v1137
        %1344 = vmatprep.subr.bf16.mxu0 %v1144
        %1345 = vmatpush1.bf16.msra.mxu0 %v1143
        %1346 = vmatprep.subr.bf16.mxu0 %v1150
        %1347 = vmatpush1.bf16.msra.mxu0 %v1149
        %1348 = vmatprep.subr.bf16.mxu0 %v1156
        %1349 = vmatpush1.bf16.msra.mxu0 %v1155
        %1350 = vmatprep.subr.bf16.mxu0 %v1162
        %1351 = vmatpush1.bf16.msra.mxu0 %v1161
        %1352 = vmatprep.subr.bf16.mxu0 %v1168
        %1353 = vmatpush1.bf16.msra.mxu0 %v1167
        %1354 = vmatprep.subr.bf16.mxu0 %v1174
        %1355 = vmatpush1.bf16.msra.mxu0 %v1173
        %1356 = vmatprep.mubr.bf16.mxu0 %v662
        %1357 = vmatmul.mubr.bf16.gmra.mrb[0].mxu0 %v661
        %v1358 = vpop.f32.mrb[0].mxu0
        %v1359 = vadd.f32 %v774, %v1358
        %v1360 = vpop.f32.mrb[0].mxu0
        %v1361 = vadd.f32 %v778, %v1360
        %v1362 = vpop.f32.mrb[0].mxu0
        %v1363 = vadd.f32 %v774, %v1362
        %v1364 = vpop.f32.mrb[0].mxu0
        %v1365 = vadd.f32 %v778, %v1364
        %1366 = vmatprep.mubr.bf16.mxu0 %v664
        %1367 = vmatmul.mubr.bf16.gmra.mrb[0].mxu0 %v663
        %v1368 = vpop.f32.mrb[0].mxu0
        %v1369 = vadd.f32 %v774, %v1368
        %v1370 = vpop.f32.mrb[0].mxu0
        %v1371 = vadd.f32 %v778, %v1370
        %v1372 = vpop.f32.mrb[0].mxu0
        %v1373 = vpop.f32.mrb[0].mxu0
        %1374 = vdwg.mxu0
        %1375 = vmatprep.subr.bf16.mxu0 %v1086
        %1376 = vmatpush1.bf16.msra.mxu0 %v1085
        %1377 = vmatprep.subr.bf16.mxu0 %v1092
        %1378 = vmatpush1.bf16.msra.mxu0 %v1091
        %1379 = vmatprep.subr.bf16.mxu0 %v1098
        %1380 = vmatpush1.bf16.msra.mxu0 %v1097
        %1381 = vmatprep.subr.bf16.mxu0 %v1104
        %1382 = vmatpush1.bf16.msra.mxu0 %v1103
        %1383 = vmatprep.subr.bf16.mxu0 %v1110
        %1384 = vmatpush1.bf16.msra.mxu0 %v1109
        %1385 = vmatprep.subr.bf16.mxu0 %v1116
        %1386 = vmatpush1.bf16.msra.mxu0 %v1115
        %1387 = vmatprep.subr.bf16.mxu0 %v1122
        %1388 = vmatpush1.bf16.msra.mxu0 %v1121
        %1389 = vmatprep.subr.bf16.mxu0 %v1128
        %1390 = vmatpush1.bf16.msra.mxu0 %v1127
        %1391 = vmatprep.subr.bf16.mxu0 %v1134
        %1392 = vmatpush1.bf16.msra.mxu0 %v1133
        %1393 = vmatprep.subr.bf16.mxu0 %v1140
        %1394 = vmatpush1.bf16.msra.mxu0 %v1139
        %1395 = vmatprep.subr.bf16.mxu0 %v1146
        %1396 = vmatpush1.bf16.msra.mxu0 %v1145
        %1397 = vmatprep.subr.bf16.mxu0 %v1152
        %1398 = vmatpush1.bf16.msra.mxu0 %v1151
        %1399 = vmatprep.subr.bf16.mxu0 %v1158
        %1400 = vmatpush1.bf16.msra.mxu0 %v1157
        %1401 = vmatprep.subr.bf16.mxu0 %v1164
        %1402 = vmatpush1.bf16.msra.mxu0 %v1163
        %1403 = vmatprep.subr.bf16.mxu0 %v1170
        %1404 = vmatpush1.bf16.msra.mxu0 %v1169
        %1405 = vmatprep.subr.bf16.mxu0 %v1176
        %1406 = vmatpush1.bf16.msra.mxu0 %v1175
        %1407 = vmatprep.mubr.bf16.mxu0 %v662
        %1408 = vmatmul.mubr.bf16.gmra.mrb[0].mxu0 %v661
        %v1409 = vpop.f32.mrb[0].mxu0
        %v1410 = vadd.f32 %v782, %v1409
        %v1411 = vpop.f32.mrb[0].mxu0
        %v1412 = vadd.f32 %v786, %v1411
        %v1413 = vpop.f32.mrb[0].mxu0
        %v1414 = vadd.f32 %v782, %v1413
        %v1415 = vpop.f32.mrb[0].mxu0
        %v1416 = vadd.f32 %v786, %v1415
        %1417 = vmatprep.mubr.bf16.mxu0 %v664
        %1418 = vmatmul.mubr.bf16.gmra.mrb[0].mxu0 %v663
        %v1419 = vpop.f32.mrb[0].mxu0
        %v1420 = vadd.f32 %v782, %v1419
        %v1421 = vpop.f32.mrb[0].mxu0
        %v1422 = vadd.f32 %v786, %v1421
        %v1423 = vpop.f32.mrb[0].mxu0
        %v1424 = vpop.f32.mrb[0].mxu0
        %1425 = vdwg.mxu0
        %v1426 = vpack.c.bf16 %v1312, %v1308
        %v1427 = vpack.c.bf16 %v1314, %v1310
        %v1428 = vpack.c.bf16 %v1363, %v1359
        %v1429 = vpack.c.bf16 %v1365, %v1361
        %v1430 = vpack.c.bf16 %v1414, %v1410
        %v1431 = vpack.c.bf16 %v1416, %v1412
        %v1432 = vpack.c.bf16 %v1318, %v1318
        %v1433 = vpack.c.bf16 %v1320, %v1320
        %v1434 = vpack.c.bf16 %v1369, %v1369
        %v1435 = vpack.c.bf16 %v1371, %v1371
        %v1436 = vpack.c.bf16 %v1420, %v1420
        %v1437 = vpack.c.bf16 %v1422, %v1422
        %1440 = vrot.lane.b32.xlu0 %v1426, 64
        %v1441 = vpop.permute.xlu0 %1440
        %1442 = vrot.lane.b32.xlu0 %v1432, 64
        %v1443 = vpop.permute.xlu0 %1442
        %1446 = vrot.lane.b32.xlu0 %v1427, 64
        %v1447 = vpop.permute.xlu0 %1446
        %1448 = vrot.lane.b32.xlu0 %v1433, 64
        %v1449 = vpop.permute.xlu0 %1448
        %1452 = vrot.lane.b32.xlu0 %v1428, 64
        %v1453 = vpop.permute.xlu0 %1452
        %1454 = vrot.lane.b32.xlu0 %v1434, 64
        %v1455 = vpop.permute.xlu0 %1454
        %1460 = vrot.lane.b32.xlu0 %v1429, 64
        %v1461 = vpop.permute.xlu0 %1460
        %1462 = vrot.lane.b32.xlu0 %v1435, 64
        %v1463 = vpop.permute.xlu0 %1462
        %1468 = vrot.lane.b32.xlu0 %v1430, 64
        %v1469 = vpop.permute.xlu0 %1468
        %1470 = vrot.lane.b32.xlu0 %v1436, 64
        %v1471 = vpop.permute.xlu0 %1470
        %1475 = vrot.lane.b32.xlu0 %v1431, 64
        %v1476 = vpop.permute.xlu0 %1475
        %1477 = vrot.lane.b32.xlu0 %v1437, 64
        %v1478 = vpop.permute.xlu0 %1477
        %1480 = vxpose.xlu0.c.b16.start [1/8] %v1428, 128
        %1481 = vxpose.xlu0.c.b16.cont [2/8] %v1434, 128
        %1482 = vxpose.xlu0.c.b16.cont [3/8] 0, 128
        %1483 = vxpose.xlu0.c.b16.cont [4/8] 0, 128
        %1484 = vxpose.xlu0.c.b16.cont [5/8] 0, 128
        %1485 = vxpose.xlu0.c.b16.cont [6/8] 0, 128
        %1486 = vxpose.xlu0.c.b16.cont [7/8] 0, 128
        %1487 = vxpose.xlu0.c.b16.end [8/8] 0, 128
        %v1488 = vpop.trf.xlu0
        %v1489 = vpop.trf.xlu0
        %v1490 = vpop.trf.xlu0
        %v1491 = vpop.trf.xlu0
        %v1492 = vpop.trf.xlu0
        %v1493 = vpop.trf.xlu0
        %v1494 = vpop.trf.xlu0
        %v1495 = vpop.trf.xlu0
        %1496 = vxpose.xlu0.c.b16.start [1/8] %v1453, 128
        %1497 = vxpose.xlu0.c.b16.cont [2/8] %v1455, 128
        %1498 = vxpose.xlu0.c.b16.cont [3/8] 0, 128
        %1499 = vxpose.xlu0.c.b16.cont [4/8] 0, 128
        %1500 = vxpose.xlu0.c.b16.cont [5/8] 0, 128
        %1501 = vxpose.xlu0.c.b16.cont [6/8] 0, 128
        %1502 = vxpose.xlu0.c.b16.cont [7/8] 0, 128
        %1503 = vxpose.xlu0.c.b16.end [8/8] 0, 128
        %v1504 = vpop.trf.xlu0
        %v1505 = vpop.trf.xlu0
        %v1506 = vpop.trf.xlu0
        %v1507 = vpop.trf.xlu0
        %v1508 = vpop.trf.xlu0
        %v1509 = vpop.trf.xlu0
        %v1510 = vpop.trf.xlu0
        %v1511 = vpop.trf.xlu0
        %1512 = vxpose.xlu0.c.b16.start [1/8] %v1429, 128
        %1513 = vxpose.xlu0.c.b16.cont [2/8] %v1435, 128
        %1514 = vxpose.xlu0.c.b16.cont [3/8] 0, 128
        %1515 = vxpose.xlu0.c.b16.cont [4/8] 0, 128
        %1516 = vxpose.xlu0.c.b16.cont [5/8] 0, 128
        %1517 = vxpose.xlu0.c.b16.cont [6/8] 0, 128
        %1518 = vxpose.xlu0.c.b16.cont [7/8] 0, 128
        %1519 = vxpose.xlu0.c.b16.end [8/8] 0, 128
        %v1520 = vpop.trf.xlu0
        %v1521 = vpop.trf.xlu0
        %v1522 = vpop.trf.xlu0
        %v1523 = vpop.trf.xlu0
        %v1524 = vpop.trf.xlu0
        %v1525 = vpop.trf.xlu0
        %v1526 = vpop.trf.xlu0
        %v1527 = vpop.trf.xlu0
        %1528 = vxpose.xlu0.c.b16.start [1/8] %v1461, 128
        %1529 = vxpose.xlu0.c.b16.cont [2/8] %v1463, 128
        %1530 = vxpose.xlu0.c.b16.cont [3/8] 0, 128
        %1531 = vxpose.xlu0.c.b16.cont [4/8] 0, 128
        %1532 = vxpose.xlu0.c.b16.cont [5/8] 0, 128
        %1533 = vxpose.xlu0.c.b16.cont [6/8] 0, 128
        %1534 = vxpose.xlu0.c.b16.cont [7/8] 0, 128
        %1535 = vxpose.xlu0.c.b16.end [8/8] 0, 128
        %v1536 = vpop.trf.xlu0
        %v1537 = vpop.trf.xlu0
        %v1538 = vpop.trf.xlu0
        %v1539 = vpop.trf.xlu0
        %v1540 = vpop.trf.xlu0
        %v1541 = vpop.trf.xlu0
        %v1542 = vpop.trf.xlu0
        %v1543 = vpop.trf.xlu0
        %vm1544 = vcmask 523264
        %v1546 = vsel %vm1544, %v1426, 0
        %v1549 = vsel %vm1544, %v1432, 0
        %1551 = vmatprep.subr.bf16.mxu0 0
        %1552 = vmatpush1.bf16.msra.mxu0 %v1488
        %1553 = vmatprep.subr.bf16.mxu0 0
        %1554 = vmatpush1.bf16.msra.mxu0 %v1489
        %1555 = vmatprep.subr.bf16.mxu0 0
        %1556 = vmatpush1.bf16.msra.mxu0 %v1490
        %1557 = vmatprep.subr.bf16.mxu0 0
        %1558 = vmatpush1.bf16.msra.mxu0 %v1491
        %1559 = vmatprep.subr.bf16.mxu0 0
        %1560 = vmatpush1.bf16.msra.mxu0 0
        %1561 = vmatprep.subr.bf16.mxu0 0
        %1562 = vmatpush1.bf16.msra.mxu0 0
        %1563 = vmatprep.subr.bf16.mxu0 0
        %1564 = vmatpush1.bf16.msra.mxu0 0
        %1565 = vmatprep.subr.bf16.mxu0 0
        %1566 = vmatpush1.bf16.msra.mxu0 0
        %1567 = vmatprep.subr.bf16.mxu0 0
        %1568 = vmatpush1.bf16.msra.mxu0 0
        %1569 = vmatprep.subr.bf16.mxu0 0
        %1570 = vmatpush1.bf16.msra.mxu0 0
        %1571 = vmatprep.subr.bf16.mxu0 0
        %1572 = vmatpush1.bf16.msra.mxu0 0
        %1573 = vmatprep.subr.bf16.mxu0 0
        %1574 = vmatpush1.bf16.msra.mxu0 0
        %1575 = vmatprep.subr.bf16.mxu0 0
        %1576 = vmatpush1.bf16.msra.mxu0 0
        %1577 = vmatprep.subr.bf16.mxu0 0
        %1578 = vmatpush1.bf16.msra.mxu0 0
        %1579 = vmatprep.subr.bf16.mxu0 0
        %1580 = vmatpush1.bf16.msra.mxu0 0
        %1581 = vmatprep.subr.bf16.mxu0 0
        %1582 = vmatpush1.bf16.msra.mxu0 0
        %1583 = vmatprep.mubr.bf16.mxu0 0
        %1584 = vmatmul.mubr.bf16.gmra.mrb[0].mxu0 %v1546
        %v1585 = vpop.f32.mrb[0].mxu0
        %v1586 = vadd.f32 0.0, %v1585
        %v1587 = vpop.f32.mrb[0].mxu0
        %v1588 = vpop.f32.mrb[0].mxu0
        %v1589 = vadd.f32 0.0, %v1588
        %v1590 = vpop.f32.mrb[0].mxu0
        %1591 = vmatprep.mubr.bf16.mxu0 0
        %1592 = vmatmul.mubr.bf16.gmra.mrb[0].mxu0 %v1549
        %v1593 = vpop.f32.mrb[0].mxu0
        %v1594 = vadd.f32 0.0, %v1593
        %v1595 = vpop.f32.mrb[0].mxu0
        %v1596 = vpop.f32.mrb[0].mxu0
        %v1597 = vpop.f32.mrb[0].mxu0
        %1598 = vdwg.mxu0
        %v1600 = vsel %vm1544, %v1441, 0
        %v1603 = vsel %vm1544, %v1443, 0
        %1605 = vmatprep.subr.bf16.mxu0 0
        %1606 = vmatpush1.bf16.msra.mxu0 %v1504
        %1607 = vmatprep.subr.bf16.mxu0 0
        %1608 = vmatpush1.bf16.msra.mxu0 %v1505
        %1609 = vmatprep.subr.bf16.mxu0 0
        %1610 = vmatpush1.bf16.msra.mxu0 %v1506
        %1611 = vmatprep.subr.bf16.mxu0 0
        %1612 = vmatpush1.bf16.msra.mxu0 %v1507
        %1613 = vmatprep.subr.bf16.mxu0 0
        %1614 = vmatpush1.bf16.msra.mxu0 0
        %1615 = vmatprep.subr.bf16.mxu0 0
        %1616 = vmatpush1.bf16.msra.mxu0 0
        %1617 = vmatprep.subr.bf16.mxu0 0
        %1618 = vmatpush1.bf16.msra.mxu0 0
        %1619 = vmatprep.subr.bf16.mxu0 0
        %1620 = vmatpush1.bf16.msra.mxu0 0
        %1621 = vmatprep.subr.bf16.mxu0 0
        %1622 = vmatpush1.bf16.msra.mxu0 0
        %1623 = vmatprep.subr.bf16.mxu0 0
        %1624 = vmatpush1.bf16.msra.mxu0 0
        %1625 = vmatprep.subr.bf16.mxu0 0
        %1626 = vmatpush1.bf16.msra.mxu0 0
        %1627 = vmatprep.subr.bf16.mxu0 0
        %1628 = vmatpush1.bf16.msra.mxu0 0
        %1629 = vmatprep.subr.bf16.mxu0 0
        %1630 = vmatpush1.bf16.msra.mxu0 0
        %1631 = vmatprep.subr.bf16.mxu0 0
        %1632 = vmatpush1.bf16.msra.mxu0 0
        %1633 = vmatprep.subr.bf16.mxu0 0
        %1634 = vmatpush1.bf16.msra.mxu0 0
        %1635 = vmatprep.subr.bf16.mxu0 0
        %1636 = vmatpush1.bf16.msra.mxu0 0
        %1637 = vmatprep.mubr.bf16.mxu0 0
        %1638 = vmatmul.mubr.bf16.gmra.mrb[0].mxu0 %v1600
        %v1639 = vpop.f32.mrb[0].mxu0
        %v1640 = vadd.f32 0.0, %v1639
        %v1641 = vpop.f32.mrb[0].mxu0
        %v1642 = vpop.f32.mrb[0].mxu0
        %v1643 = vadd.f32 0.0, %v1642
        %v1644 = vpop.f32.mrb[0].mxu0
        %1645 = vmatprep.mubr.bf16.mxu0 0
        %1646 = vmatmul.mubr.bf16.gmra.mrb[0].mxu0 %v1603
        %v1647 = vpop.f32.mrb[0].mxu0
        %v1648 = vadd.f32 0.0, %v1647
        %v1649 = vpop.f32.mrb[0].mxu0
        %v1650 = vpop.f32.mrb[0].mxu0
        %v1651 = vpop.f32.mrb[0].mxu0
        %1652 = vdwg.mxu0
        %v1654 = vsel %vm1544, %v1427, 0
        %v1657 = vsel %vm1544, %v1433, 0
        %1659 = vmatprep.subr.bf16.mxu0 0
        %1660 = vmatpush1.bf16.msra.mxu0 %v1520
        %1661 = vmatprep.subr.bf16.mxu0 0
        %1662 = vmatpush1.bf16.msra.mxu0 %v1521
        %1663 = vmatprep.subr.bf16.mxu0 0
        %1664 = vmatpush1.bf16.msra.mxu0 %v1522
        %1665 = vmatprep.subr.bf16.mxu0 0
        %1666 = vmatpush1.bf16.msra.mxu0 %v1523
        %1667 = vmatprep.subr.bf16.mxu0 0
        %1668 = vmatpush1.bf16.msra.mxu0 0
        %1669 = vmatprep.subr.bf16.mxu0 0
        %1670 = vmatpush1.bf16.msra.mxu0 0
        %1671 = vmatprep.subr.bf16.mxu0 0
        %1672 = vmatpush1.bf16.msra.mxu0 0
        %1673 = vmatprep.subr.bf16.mxu0 0
        %1674 = vmatpush1.bf16.msra.mxu0 0
        %1675 = vmatprep.subr.bf16.mxu0 0
        %1676 = vmatpush1.bf16.msra.mxu0 0
        %1677 = vmatprep.subr.bf16.mxu0 0
        %1678 = vmatpush1.bf16.msra.mxu0 0
        %1679 = vmatprep.subr.bf16.mxu0 0
        %1680 = vmatpush1.bf16.msra.mxu0 0
        %1681 = vmatprep.subr.bf16.mxu0 0
        %1682 = vmatpush1.bf16.msra.mxu0 0
        %1683 = vmatprep.subr.bf16.mxu0 0
        %1684 = vmatpush1.bf16.msra.mxu0 0
        %1685 = vmatprep.subr.bf16.mxu0 0
        %1686 = vmatpush1.bf16.msra.mxu0 0
        %1687 = vmatprep.subr.bf16.mxu0 0
        %1688 = vmatpush1.bf16.msra.mxu0 0
        %1689 = vmatprep.subr.bf16.mxu0 0
        %1690 = vmatpush1.bf16.msra.mxu0 0
        %1691 = vmatprep.mubr.bf16.mxu0 0
        %1692 = vmatmul.mubr.bf16.gmra.mrb[0].mxu0 %v1654
        %v1693 = vpop.f32.mrb[0].mxu0
        %v1694 = vadd.f32 0.0, %v1693
        %v1695 = vpop.f32.mrb[0].mxu0
        %v1696 = vpop.f32.mrb[0].mxu0
        %v1697 = vadd.f32 0.0, %v1696
        %v1698 = vpop.f32.mrb[0].mxu0
        %1699 = vmatprep.mubr.bf16.mxu0 0
        %1700 = vmatmul.mubr.bf16.gmra.mrb[0].mxu0 %v1657
        %v1701 = vpop.f32.mrb[0].mxu0
        %v1702 = vadd.f32 0.0, %v1701
        %v1703 = vpop.f32.mrb[0].mxu0
        %v1704 = vpop.f32.mrb[0].mxu0
        %v1705 = vpop.f32.mrb[0].mxu0
        %1706 = vdwg.mxu0
        %v1708 = vsel %vm1544, %v1447, 0
        %v1711 = vsel %vm1544, %v1449, 0
        %1713 = vmatprep.subr.bf16.mxu0 0
        %1714 = vmatpush1.bf16.msra.mxu0 %v1536
        %1715 = vmatprep.subr.bf16.mxu0 0
        %1716 = vmatpush1.bf16.msra.mxu0 %v1537
        %1717 = vmatprep.subr.bf16.mxu0 0
        %1718 = vmatpush1.bf16.msra.mxu0 %v1538
        %1719 = vmatprep.subr.bf16.mxu0 0
        %1720 = vmatpush1.bf16.msra.mxu0 %v1539
        %1721 = vmatprep.subr.bf16.mxu0 0
        %1722 = vmatpush1.bf16.msra.mxu0 0
        %1723 = vmatprep.subr.bf16.mxu0 0
        %1724 = vmatpush1.bf16.msra.mxu0 0
        %1725 = vmatprep.subr.bf16.mxu0 0
        %1726 = vmatpush1.bf16.msra.mxu0 0
        %1727 = vmatprep.subr.bf16.mxu0 0
        %1728 = vmatpush1.bf16.msra.mxu0 0
        %1729 = vmatprep.subr.bf16.mxu0 0
        %1730 = vmatpush1.bf16.msra.mxu0 0
        %1731 = vmatprep.subr.bf16.mxu0 0
        %1732 = vmatpush1.bf16.msra.mxu0 0
        %1733 = vmatprep.subr.bf16.mxu0 0
        %1734 = vmatpush1.bf16.msra.mxu0 0
        %1735 = vmatprep.subr.bf16.mxu0 0
        %1736 = vmatpush1.bf16.msra.mxu0 0
        %1737 = vmatprep.subr.bf16.mxu0 0
        %1738 = vmatpush1.bf16.msra.mxu0 0
        %1739 = vmatprep.subr.bf16.mxu0 0
        %1740 = vmatpush1.bf16.msra.mxu0 0
        %1741 = vmatprep.subr.bf16.mxu0 0
        %1742 = vmatpush1.bf16.msra.mxu0 0
        %1743 = vmatprep.subr.bf16.mxu0 0
        %1744 = vmatpush1.bf16.msra.mxu0 0
        %1745 = vmatprep.mubr.bf16.mxu0 0
        %1746 = vmatmul.mubr.bf16.gmra.mrb[0].mxu0 %v1708
        %v1747 = vpop.f32.mrb[0].mxu0
        %v1748 = vadd.f32 0.0, %v1747
        %v1749 = vpop.f32.mrb[0].mxu0
        %v1750 = vpop.f32.mrb[0].mxu0
        %v1751 = vadd.f32 0.0, %v1750
        %v1752 = vpop.f32.mrb[0].mxu0
        %1753 = vmatprep.mubr.bf16.mxu0 0
        %1754 = vmatmul.mubr.bf16.gmra.mrb[0].mxu0 %v1711
        %v1755 = vpop.f32.mrb[0].mxu0
        %v1756 = vadd.f32 0.0, %v1755
        %v1757 = vpop.f32.mrb[0].mxu0
        %v1758 = vpop.f32.mrb[0].mxu0
        %v1759 = vpop.f32.mrb[0].mxu0
        %1760 = vdwg.mxu0
        %vm1761 = vcmask 138240
        %v1762 = vsel %vm1761, %v1586, -inf
        %1763 = vmax.xlane.f32.xlu0 %v1762
        %v1764 = vpop.xlane.xlu0 %1763
        %v1765 = vsel %vm1761, %v1589, -inf
        %1766 = vmax.xlane.f32.xlu0 %v1765
        %v1767 = vpop.xlane.xlu0 %1766
        %vm1768 = vcmask 131072
        %v1769 = vsel %vm1768, %v1594, -inf
        %1770 = vmax.xlane.f32.xlu0 %v1769
        %v1771 = vpop.xlane.xlu0 %1770
        %v1772 = vsel %vm1761, %v1640, -inf
        %1773 = vmax.xlane.f32.xlu0 %v1772
        %v1774 = vpop.xlane.xlu0 %1773
        %v1775 = vsel %vm1761, %v1643, -inf
        %1776 = vmax.xlane.f32.xlu0 %v1775
        %v1777 = vpop.xlane.xlu0 %1776
        %v1778 = vsel %vm1768, %v1648, -inf
        %1779 = vmax.xlane.f32.xlu0 %v1778
        %v1780 = vpop.xlane.xlu0 %1779
        %v1781 = vsel %vm1761, %v1694, -inf
        %1782 = vmax.xlane.f32.xlu0 %v1781
        %v1783 = vpop.xlane.xlu0 %1782
        %v1784 = vsel %vm1761, %v1697, -inf
        %1785 = vmax.xlane.f32.xlu0 %v1784
        %v1786 = vpop.xlane.xlu0 %1785
        %v1787 = vsel %vm1768, %v1702, -inf
        %1788 = vmax.xlane.f32.xlu0 %v1787
        %v1789 = vpop.xlane.xlu0 %1788
        %v1790 = vsel %vm1761, %v1748, -inf
        %1791 = vmax.xlane.f32.xlu0 %v1790
        %v1792 = vpop.xlane.xlu0 %1791
        %v1793 = vsel %vm1761, %v1751, -inf
        %1794 = vmax.xlane.f32.xlu0 %v1793
        %v1795 = vpop.xlane.xlu0 %1794
        %v1796 = vsel %vm1768, %v1756, -inf
        %1797 = vmax.xlane.f32.xlu0 %v1796
        %v1798 = vpop.xlane.xlu0 %1797
        %v1799 = vsub.f32 %v1586, %v1764
        %v1800 = vsub.f32 %v1589, %v1767
        %v1801 = vsub.f32 %v1594, %v1771
        %v1802 = vsub.f32 %v1640, %v1774
        %v1803 = vsub.f32 %v1643, %v1777
        %v1804 = vsub.f32 %v1648, %v1780
        %v1805 = vsub.f32 %v1694, %v1783
        %v1806 = vsub.f32 %v1697, %v1786
        %v1807 = vsub.f32 %v1702, %v1789
        %v1808 = vsub.f32 %v1748, %v1792
        %v1809 = vsub.f32 %v1751, %v1795
        %v1810 = vsub.f32 %v1756, %v1798
        %v1811 = vmul.f32 %v1799, 1.442695
        %v1812 = vpow.pop %v1811
        %v1813 = vmul.f32 %v1800, 1.442695
        %v1814 = vpow.pop %v1813
        %v1815 = vmul.f32 %v1801, 1.442695
        %v1816 = vpow.pop %v1815
        %v1817 = vmul.f32 %v1802, 1.442695
        %v1818 = vpow.pop %v1817
        %v1819 = vmul.f32 %v1803, 1.442695
        %v1820 = vpow.pop %v1819
        %v1821 = vmul.f32 %v1804, 1.442695
        %v1822 = vpow.pop %v1821
        %v1823 = vmul.f32 %v1805, 1.442695
        %v1824 = vpow.pop %v1823
        %v1825 = vmul.f32 %v1806, 1.442695
        %v1826 = vpow.pop %v1825
        %v1827 = vmul.f32 %v1807, 1.442695
        %v1828 = vpow.pop %v1827
        %v1829 = vmul.f32 %v1808, 1.442695
        %v1830 = vpow.pop %v1829
        %v1831 = vmul.f32 %v1809, 1.442695
        %v1832 = vpow.pop %v1831
        %v1833 = vmul.f32 %v1810, 1.442695
        %v1834 = vpow.pop %v1833
        %v1835 = vsel %vm1761, %v1812, 0.0
        %1836 = vadd.xlane.f32.xlu0 %v1835
        %v1837 = vpop.xlane.xlu0 %1836
        %v1838 = vsel %vm1761, %v1814, 0.0
        %1839 = vadd.xlane.f32.xlu0 %v1838
        %v1840 = vpop.xlane.xlu0 %1839
        %v1841 = vsel %vm1768, %v1816, 0.0
        %1842 = vadd.xlane.f32.xlu0 %v1841
        %v1843 = vpop.xlane.xlu0 %1842
        %v1844 = vsel %vm1761, %v1818, 0.0
        %1845 = vadd.xlane.f32.xlu0 %v1844
        %v1846 = vpop.xlane.xlu0 %1845
        %v1847 = vsel %vm1761, %v1820, 0.0
        %1848 = vadd.xlane.f32.xlu0 %v1847
        %v1849 = vpop.xlane.xlu0 %1848
        %v1850 = vsel %vm1768, %v1822, 0.0
        %1851 = vadd.xlane.f32.xlu0 %v1850
        %v1852 = vpop.xlane.xlu0 %1851
        %v1853 = vsel %vm1761, %v1824, 0.0
        %1854 = vadd.xlane.f32.xlu0 %v1853
        %v1855 = vpop.xlane.xlu0 %1854
        %v1856 = vsel %vm1761, %v1826, 0.0
        %1857 = vadd.xlane.f32.xlu0 %v1856
        %v1858 = vpop.xlane.xlu0 %1857
        %v1859 = vsel %vm1768, %v1828, 0.0
        %1860 = vadd.xlane.f32.xlu0 %v1859
        %v1861 = vpop.xlane.xlu0 %1860
        %v1862 = vsel %vm1761, %v1830, 0.0
        %1863 = vadd.xlane.f32.xlu0 %v1862
        %v1864 = vpop.xlane.xlu0 %1863
        %v1865 = vsel %vm1761, %v1832, 0.0
        %1866 = vadd.xlane.f32.xlu0 %v1865
        %v1867 = vpop.xlane.xlu0 %1866
        %v1868 = vsel %vm1768, %v1834, 0.0
        %1869 = vadd.xlane.f32.xlu0 %v1868
        %v1870 = vpop.xlane.xlu0 %1869
        %v1871 = vrcp.pop %v1837
        %v1872 = vmul.f32 %v1812, %v1871
        %v1873 = vrcp.pop %v1846
        %v1874 = vmul.f32 %v1818, %v1873
        %v1875 = vrcp.pop %v1855
        %v1876 = vmul.f32 %v1824, %v1875
        %v1877 = vrcp.pop %v1864
        %v1878 = vmul.f32 %v1830, %v1877
        %v1883 = vrot.slane %v1874, 7
        %vm1884 = vcmask 1041409
        %v1885 = vsel %vm1884, %v1883, %v1872
        %v1886 = vrot.slane %v1876, 6
        %vm1887 = vcmask 1042434
        %v1888 = vsel %vm1887, %v1886, %v1885
        %v1889 = vrot.slane %v1878, 5
        %vm1890 = vcmask 1043459
        %v1891 = vsel %vm1890, %v1889, %v1888
        %vm1893 = vcmask 134144
        %v1894 = vsel %vm1893, %v1891, 0.0
        %v1895 = vrot.slane %v1894, 4
        %v1896 = vadd.f32 %v1894, %v1895
        %v1897 = vrot.slane %v1896, 2
        %v1898 = vadd.f32 %v1896, %v1897
        %v1899 = vrot.slane %v1898, 1
        %v1900 = vadd.f32 %v1898, %v1899
        %v1901 = vadd.f32 %v1900, 0.0
        %v1902 = vrcp.pop %v1837
        %v1903 = vrcp.pop %v1840
        %v1904 = vrcp.pop %v1843
        %v1905 = vrcp.pop %v1846
        %v1906 = vrcp.pop %v1849
        %v1907 = vrcp.pop %v1852
        %v1908 = vrcp.pop %v1855
        %v1909 = vrcp.pop %v1858
        %v1910 = vrcp.pop %v1861
        %v1911 = vrcp.pop %v1864
        %v1912 = vrcp.pop %v1867
        %v1913 = vrcp.pop %v1870
        %v1914 = vmul.f32 %v1812, %v1902
        %v1915 = vmul.f32 %v1814, %v1903
        %v1916 = vmul.f32 %v1816, %v1904
        %v1917 = vmul.f32 %v1818, %v1905
        %v1918 = vmul.f32 %v1820, %v1906
        %v1919 = vmul.f32 %v1822, %v1907
        %v1920 = vmul.f32 %v1824, %v1908
        %v1921 = vmul.f32 %v1826, %v1909
        %v1922 = vmul.f32 %v1828, %v1910
        %v1923 = vmul.f32 %v1830, %v1911
        %v1924 = vmul.f32 %v1832, %v1912
        %v1925 = vmul.f32 %v1834, %v1913
        %v1926 = vpack.c.bf16 %v1915, %v1914
        %v1927 = vpack.c.bf16 %v1916, %v1916
        %v1928 = vpack.c.bf16 %v1918, %v1917
        %v1929 = vpack.c.bf16 %v1919, %v1919
        %v1930 = vpack.c.bf16 %v1921, %v1920
        %v1931 = vpack.c.bf16 %v1922, %v1922
        %v1932 = vpack.c.bf16 %v1924, %v1923
        %v1933 = vpack.c.bf16 %v1925, %v1925
        %v1935 = vsel %vm1761, %v1926, 0
        %v1938 = vsel %vm1761, %v1927, 0
        %v1940 = vsel 0, 4294967295, 65535
        %v1941 = vsel %vm579, %v1940, 0
        %v1943 = vand.u32 %v1436, %v1941
        %1945 = vmatprep.subr.bf16.mxu0 0
        %1946 = vmatpush1.bf16.msra.mxu0 %v1430
        %1947 = vmatprep.subr.bf16.mxu0 0
        %1948 = vmatpush1.bf16.msra.mxu0 %v1943
        %1949 = vmatprep.subr.bf16.mxu0 0
        %1950 = vmatpush1.bf16.msra.mxu0 0
        %1951 = vmatprep.subr.bf16.mxu0 0
        %1952 = vmatpush1.bf16.msra.mxu0 0
        %1953 = vmatprep.subr.bf16.mxu0 0
        %1954 = vmatpush1.bf16.msra.mxu0 0
        %1955 = vmatprep.subr.bf16.mxu0 0
        %1956 = vmatpush1.bf16.msra.mxu0 0
        %1957 = vmatprep.subr.bf16.mxu0 0
        %1958 = vmatpush1.bf16.msra.mxu0 0
        %1959 = vmatprep.subr.bf16.mxu0 0
        %1960 = vmatpush1.bf16.msra.mxu0 0
        %1961 = vmatprep.subr.bf16.mxu0 0
        %1962 = vmatpush1.bf16.msra.mxu0 0
        %1963 = vmatprep.subr.bf16.mxu0 0
        %1964 = vmatpush1.bf16.msra.mxu0 0
        %1965 = vmatprep.subr.bf16.mxu0 0
        %1966 = vmatpush1.bf16.msra.mxu0 0
        %1967 = vmatprep.subr.bf16.mxu0 0
        %1968 = vmatpush1.bf16.msra.mxu0 0
        %1969 = vmatprep.subr.bf16.mxu0 0
        %1970 = vmatpush1.bf16.msra.mxu0 0
        %1971 = vmatprep.subr.bf16.mxu0 0
        %1972 = vmatpush1.bf16.msra.mxu0 0
        %1973 = vmatprep.subr.bf16.mxu0 0
        %1974 = vmatpush1.bf16.msra.mxu0 0
        %1975 = vmatprep.subr.bf16.mxu0 0
        %1976 = vmatpush1.bf16.msra.mxu0 0
        %1977 = vmatprep.mubr.bf16.mxu0 0
        %1978 = vmatmul.mubr.bf16.gmra.mrb[0].mxu0 %v1935
        %v1979 = vpop.f32.mrb[0].mxu0
        %v1980 = vadd.f32 0.0, %v1979
        %v1981 = vpop.f32.mrb[0].mxu0
        %v1982 = vpop.f32.mrb[0].mxu0
        %v1983 = vadd.f32 0.0, %v1982
        %v1984 = vpop.f32.mrb[0].mxu0
        %1985 = vmatprep.mubr.bf16.mxu0 0
        %1986 = vmatmul.mubr.bf16.gmra.mrb[0].mxu0 %v1938
        %v1987 = vpop.f32.mrb[0].mxu0
        %v1988 = vadd.f32 0.0, %v1987
        %v1989 = vpop.f32.mrb[0].mxu0
        %v1990 = vpop.f32.mrb[0].mxu0
        %v1991 = vpop.f32.mrb[0].mxu0
        %1992 = vdwg.mxu0
        %v1994 = vsel %vm1761, %v1928, 0
        %v1997 = vsel %vm1761, %v1929, 0
        %v2000 = vand.u32 %v1471, %v1941
        %2002 = vmatprep.subr.bf16.mxu0 0
        %2003 = vmatpush1.bf16.msra.mxu0 %v1469
        %2004 = vmatprep.subr.bf16.mxu0 0
        %2005 = vmatpush1.bf16.msra.mxu0 %v2000
        %2006 = vmatprep.subr.bf16.mxu0 0
        %2007 = vmatpush1.bf16.msra.mxu0 0
        %2008 = vmatprep.subr.bf16.mxu0 0
        %2009 = vmatpush1.bf16.msra.mxu0 0
        %2010 = vmatprep.subr.bf16.mxu0 0
        %2011 = vmatpush1.bf16.msra.mxu0 0
        %2012 = vmatprep.subr.bf16.mxu0 0
        %2013 = vmatpush1.bf16.msra.mxu0 0
        %2014 = vmatprep.subr.bf16.mxu0 0
        %2015 = vmatpush1.bf16.msra.mxu0 0
        %2016 = vmatprep.subr.bf16.mxu0 0
        %2017 = vmatpush1.bf16.msra.mxu0 0
        %2018 = vmatprep.subr.bf16.mxu0 0
        %2019 = vmatpush1.bf16.msra.mxu0 0
        %2020 = vmatprep.subr.bf16.mxu0 0
        %2021 = vmatpush1.bf16.msra.mxu0 0
        %2022 = vmatprep.subr.bf16.mxu0 0
        %2023 = vmatpush1.bf16.msra.mxu0 0
        %2024 = vmatprep.subr.bf16.mxu0 0
        %2025 = vmatpush1.bf16.msra.mxu0 0
        %2026 = vmatprep.subr.bf16.mxu0 0
        %2027 = vmatpush1.bf16.msra.mxu0 0
        %2028 = vmatprep.subr.bf16.mxu0 0
        %2029 = vmatpush1.bf16.msra.mxu0 0
        %2030 = vmatprep.subr.bf16.mxu0 0
        %2031 = vmatpush1.bf16.msra.mxu0 0
        %2032 = vmatprep.subr.bf16.mxu0 0
        %2033 = vmatpush1.bf16.msra.mxu0 0
        %2034 = vmatprep.mubr.bf16.mxu0 0
        %2035 = vmatmul.mubr.bf16.gmra.mrb[0].mxu0 %v1994
        %v2036 = vpop.f32.mrb[0].mxu0
        %v2037 = vadd.f32 0.0, %v2036
        %v2038 = vpop.f32.mrb[0].mxu0
        %v2039 = vpop.f32.mrb[0].mxu0
        %v2040 = vadd.f32 0.0, %v2039
        %v2041 = vpop.f32.mrb[0].mxu0
        %2042 = vmatprep.mubr.bf16.mxu0 0
        %2043 = vmatmul.mubr.bf16.gmra.mrb[0].mxu0 %v1997
        %v2044 = vpop.f32.mrb[0].mxu0
        %v2045 = vadd.f32 0.0, %v2044
        %v2046 = vpop.f32.mrb[0].mxu0
        %v2047 = vpop.f32.mrb[0].mxu0
        %v2048 = vpop.f32.mrb[0].mxu0
        %2049 = vdwg.mxu0
        %v2051 = vsel %vm1761, %v1930, 0
        %v2054 = vsel %vm1761, %v1931, 0
        %v2057 = vand.u32 %v1437, %v1941
        %2059 = vmatprep.subr.bf16.mxu0 0
        %2060 = vmatpush1.bf16.msra.mxu0 %v1431
        %2061 = vmatprep.subr.bf16.mxu0 0
        %2062 = vmatpush1.bf16.msra.mxu0 %v2057
        %2063 = vmatprep.subr.bf16.mxu0 0
        %2064 = vmatpush1.bf16.msra.mxu0 0
        %2065 = vmatprep.subr.bf16.mxu0 0
        %2066 = vmatpush1.bf16.msra.mxu0 0
        %2067 = vmatprep.subr.bf16.mxu0 0
        %2068 = vmatpush1.bf16.msra.mxu0 0
        %2069 = vmatprep.subr.bf16.mxu0 0
        %2070 = vmatpush1.bf16.msra.mxu0 0
        %2071 = vmatprep.subr.bf16.mxu0 0
        %2072 = vmatpush1.bf16.msra.mxu0 0
        %2073 = vmatprep.subr.bf16.mxu0 0
        %2074 = vmatpush1.bf16.msra.mxu0 0
        %2075 = vmatprep.subr.bf16.mxu0 0
        %2076 = vmatpush1.bf16.msra.mxu0 0
        %2077 = vmatprep.subr.bf16.mxu0 0
        %2078 = vmatpush1.bf16.msra.mxu0 0
        %2079 = vmatprep.subr.bf16.mxu0 0
        %2080 = vmatpush1.bf16.msra.mxu0 0
        %2081 = vmatprep.subr.bf16.mxu0 0
        %2082 = vmatpush1.bf16.msra.mxu0 0
        %2083 = vmatprep.subr.bf16.mxu0 0
        %2084 = vmatpush1.bf16.msra.mxu0 0
        %2085 = vmatprep.subr.bf16.mxu0 0
        %2086 = vmatpush1.bf16.msra.mxu0 0
        %2087 = vmatprep.subr.bf16.mxu0 0
        %2088 = vmatpush1.bf16.msra.mxu0 0
        %2089 = vmatprep.subr.bf16.mxu0 0
        %2090 = vmatpush1.bf16.msra.mxu0 0
        %2091 = vmatprep.mubr.bf16.mxu0 0
        %2092 = vmatmul.mubr.bf16.gmra.mrb[0].mxu0 %v2051
        %v2093 = vpop.f32.mrb[0].mxu0
        %v2094 = vadd.f32 0.0, %v2093
        %v2095 = vpop.f32.mrb[0].mxu0
        %v2096 = vpop.f32.mrb[0].mxu0
        %v2097 = vadd.f32 0.0, %v2096
        %v2098 = vpop.f32.mrb[0].mxu0
        %2099 = vmatprep.mubr.bf16.mxu0 0
        %2100 = vmatmul.mubr.bf16.gmra.mrb[0].mxu0 %v2054
        %v2101 = vpop.f32.mrb[0].mxu0
        %v2102 = vadd.f32 0.0, %v2101
        %v2103 = vpop.f32.mrb[0].mxu0
        %v2104 = vpop.f32.mrb[0].mxu0
        %v2105 = vpop.f32.mrb[0].mxu0
        %2106 = vdwg.mxu0
        %v2108 = vsel %vm1761, %v1932, 0
        %v2111 = vsel %vm1761, %v1933, 0
        %v2114 = vand.u32 %v1478, %v1941
        %2116 = vmatprep.subr.bf16.mxu0 0
        %2117 = vmatpush1.bf16.msra.mxu0 %v1476
        %2118 = vmatprep.subr.bf16.mxu0 0
        %2119 = vmatpush1.bf16.msra.mxu0 %v2114
        %2120 = vmatprep.subr.bf16.mxu0 0
        %2121 = vmatpush1.bf16.msra.mxu0 0
        %2122 = vmatprep.subr.bf16.mxu0 0
        %2123 = vmatpush1.bf16.msra.mxu0 0
        %2124 = vmatprep.subr.bf16.mxu0 0
        %2125 = vmatpush1.bf16.msra.mxu0 0
        %2126 = vmatprep.subr.bf16.mxu0 0
        %2127 = vmatpush1.bf16.msra.mxu0 0
        %2128 = vmatprep.subr.bf16.mxu0 0
        %2129 = vmatpush1.bf16.msra.mxu0 0
        %2130 = vmatprep.subr.bf16.mxu0 0
        %2131 = vmatpush1.bf16.msra.mxu0 0
        %2132 = vmatprep.subr.bf16.mxu0 0
        %2133 = vmatpush1.bf16.msra.mxu0 0
        %2134 = vmatprep.subr.bf16.mxu0 0
        %2135 = vmatpush1.bf16.msra.mxu0 0
        %2136 = vmatprep.subr.bf16.mxu0 0
        %2137 = vmatpush1.bf16.msra.mxu0 0
        %2138 = vmatprep.subr.bf16.mxu0 0
        %2139 = vmatpush1.bf16.msra.mxu0 0
        %2140 = vmatprep.subr.bf16.mxu0 0
        %2141 = vmatpush1.bf16.msra.mxu0 0
        %2142 = vmatprep.subr.bf16.mxu0 0
        %2143 = vmatpush1.bf16.msra.mxu0 0
        %2144 = vmatprep.subr.bf16.mxu0 0
        %2145 = vmatpush1.bf16.msra.mxu0 0
        %2146 = vmatprep.subr.bf16.mxu0 0
        %2147 = vmatpush1.bf16.msra.mxu0 0
        %2148 = vmatprep.mubr.bf16.mxu0 0
        %2149 = vmatmul.mubr.bf16.gmra.mrb[0].mxu0 %v2108
        %v2150 = vpop.f32.mrb[0].mxu0
        %v2151 = vadd.f32 0.0, %v2150
        %v2152 = vpop.f32.mrb[0].mxu0
        %v2153 = vpop.f32.mrb[0].mxu0
        %v2154 = vadd.f32 0.0, %v2153
        %v2155 = vpop.f32.mrb[0].mxu0
        %2156 = vmatprep.mubr.bf16.mxu0 0
        %2157 = vmatmul.mubr.bf16.gmra.mrb[0].mxu0 %v2111
        %v2158 = vpop.f32.mrb[0].mxu0
        %v2159 = vadd.f32 0.0, %v2158
        %v2160 = vpop.f32.mrb[0].mxu0
        %v2161 = vpop.f32.mrb[0].mxu0
        %v2162 = vpop.f32.mrb[0].mxu0
        %2163 = vdwg.mxu0
        %v2164 = vld [vmem:[#allocation5] sm:$0xff]
        %v2165 = vld [vmem:[#allocation5 + $0x8] sm:$0xff]
        %v2166 = vld [vmem:[#allocation5 + $0x10] sm:$0xff]
        %v2167 = vld [vmem:[#allocation5 + $0x18] sm:$0xff]
        %v2168 = vld [vmem:[#allocation5 + $0x20] sm:$0xff]
        %v2169 = vld [vmem:[#allocation5 + $0x28] sm:$0xff]
        %v2170 = vld [vmem:[#allocation5 + $0x30] sm:$0xff]
        %v2171 = vld [vmem:[#allocation5 + $0x38] sm:$0xff]
        %v2172 = vld [vmem:[#allocation5 + $0x40] sm:$0xff]
        %v2173 = vld [vmem:[#allocation5 + $0x48] sm:$0xff]
        %v2174 = vld [vmem:[#allocation5 + $0x50] sm:$0xff]
        %v2175 = vld [vmem:[#allocation5 + $0x58] sm:$0xff]
        %v2176 = vld [vmem:[#allocation5 + $0x60] sm:$0xff]
        %v2177 = vld [vmem:[#allocation5 + $0x68] sm:$0xff]
        %v2178 = vld [vmem:[#allocation5 + $0x70] sm:$0xff]
        %v2179 = vld [vmem:[#allocation5 + $0x78] sm:$0xff]
        %v2180 = vld [vmem:[#allocation5 + $0x80] sm:$0xff]
        %v2181 = vld [vmem:[#allocation5 + $0x88] sm:$0xff]
        %v2182 = vld [vmem:[#allocation5 + $0x90] sm:$0xff]
        %v2183 = vld [vmem:[#allocation5 + $0x98] sm:$0xff]
        %v2184 = vld [vmem:[#allocation5 + $0xa0] sm:$0xff]
        %v2185 = vld [vmem:[#allocation5 + $0xa8] sm:$0xff]
        %v2186 = vld [vmem:[#allocation5 + $0xb0] sm:$0xff]
        %v2187 = vld [vmem:[#allocation5 + $0xb8] sm:$0xff]
        %v2188 = vld [vmem:[#allocation5 + $0xc0] sm:$0xff]
        %v2189 = vld [vmem:[#allocation5 + $0xc8] sm:$0xff]
        %v2190 = vld [vmem:[#allocation5 + $0xd0] sm:$0xff]
        %v2191 = vld [vmem:[#allocation5 + $0xd8] sm:$0xff]
        %v2192 = vld [vmem:[#allocation5 + $0xe0] sm:$0xff]
        %v2193 = vld [vmem:[#allocation5 + $0xe8] sm:$0xff]
        %v2194 = vld [vmem:[#allocation5 + $0xf0] sm:$0xff]
        %v2195 = vld [vmem:[#allocation5 + $0xf8] sm:$0xff]
        %v2196 = vpack.c.bf16 %v1983, %v1980
        %v2197 = vpack.c.bf16 %v1988, %v1988
        %v2198 = vpack.c.bf16 %v2040, %v2037
        %v2199 = vpack.c.bf16 %v2045, %v2045
        %v2200 = vpack.c.bf16 %v2097, %v2094
        %v2201 = vpack.c.bf16 %v2102, %v2102
        %v2202 = vpack.c.bf16 %v2154, %v2151
        %v2203 = vpack.c.bf16 %v2159, %v2159
        %v2212 = vunpack.c.l.b16 %v2164
        %v2213 = vunpack.c.h.b16 %v2164
        %v2214 = vunpack.c.l.b16 %v2165
        %v2215 = vunpack.c.h.b16 %v2165
        %v2216 = vunpack.c.l.b16 %v2166
        %v2217 = vunpack.c.h.b16 %v2166
        %v2218 = vunpack.c.l.b16 %v2167
        %v2219 = vunpack.c.h.b16 %v2167
        %v2220 = vunpack.c.l.b16 %v2168
        %v2221 = vunpack.c.h.b16 %v2168
        %v2222 = vunpack.c.l.b16 %v2169
        %v2223 = vunpack.c.h.b16 %v2169
        %v2224 = vunpack.c.l.b16 %v2170
        %v2225 = vunpack.c.h.b16 %v2170
        %v2226 = vunpack.c.l.b16 %v2171
        %v2227 = vunpack.c.h.b16 %v2171
        %v2228 = vpack.c.b16 %v2214, %v2212
        %v2229 = vpack.c.b16 %v2215, %v2213
        %v2230 = vpack.c.b16 %v2218, %v2216
        %v2231 = vpack.c.b16 %v2219, %v2217
        %v2232 = vpack.c.b16 %v2222, %v2220
        %v2233 = vpack.c.b16 %v2223, %v2221
        %v2234 = vpack.c.b16 %v2226, %v2224
        %v2235 = vpack.c.b16 %v2227, %v2225
        %v2245 = vsel %vm1544, %v2196, 0
        %v2248 = vsel %vm1544, %v2197, 0
        %2250 = vmatprep.subr.bf16.mxu0 %v2229
        %2251 = vmatpush1.bf16.msra.mxu0 %v2228
        %2252 = vmatprep.subr.bf16.mxu0 %v2231
        %2253 = vmatpush1.bf16.msra.mxu0 %v2230
        %2254 = vmatprep.subr.bf16.mxu0 %v2233
        %2255 = vmatpush1.bf16.msra.mxu0 %v2232
        %2256 = vmatprep.subr.bf16.mxu0 %v2235
        %2257 = vmatpush1.bf16.msra.mxu0 %v2234
        %2258 = vmatprep.subr.bf16.mxu0 0
        %2259 = vmatpush1.bf16.msra.mxu0 0
        %2260 = vmatprep.subr.bf16.mxu0 0
        %2261 = vmatpush1.bf16.msra.mxu0 0
        %2262 = vmatprep.subr.bf16.mxu0 0
        %2263 = vmatpush1.bf16.msra.mxu0 0
        %2264 = vmatprep.subr.bf16.mxu0 0
        %2265 = vmatpush1.bf16.msra.mxu0 0
        %2266 = vmatprep.subr.bf16.mxu0 0
        %2267 = vmatpush1.bf16.msra.mxu0 0
        %2268 = vmatprep.subr.bf16.mxu0 0
        %2269 = vmatpush1.bf16.msra.mxu0 0
        %2270 = vmatprep.subr.bf16.mxu0 0
        %2271 = vmatpush1.bf16.msra.mxu0 0
        %2272 = vmatprep.subr.bf16.mxu0 0
        %2273 = vmatpush1.bf16.msra.mxu0 0
        %2274 = vmatprep.subr.bf16.mxu0 0
        %2275 = vmatpush1.bf16.msra.mxu0 0
        %2276 = vmatprep.subr.bf16.mxu0 0
        %2277 = vmatpush1.bf16.msra.mxu0 0
        %2278 = vmatprep.subr.bf16.mxu0 0
        %2279 = vmatpush1.bf16.msra.mxu0 0
        %2280 = vmatprep.subr.bf16.mxu0 0
        %2281 = vmatpush1.bf16.msra.mxu0 0
        %2282 = vmatprep.mubr.bf16.mxu0 0
        %2283 = vmatmul.mubr.bf16.gmra.mrb[0].mxu0 %v2245
        %v2284 = vpop.f32.mrb[0].mxu0
        %v2285 = vadd.f32 0.0, %v2284
        %v2286 = vpop.f32.mrb[0].mxu0
        %v2287 = vadd.f32 0.0, %v2286
        %v2288 = vpop.f32.mrb[0].mxu0
        %v2289 = vadd.f32 0.0, %v2288
        %v2290 = vpop.f32.mrb[0].mxu0
        %v2291 = vadd.f32 0.0, %v2290
        %2292 = vmatprep.mubr.bf16.mxu0 0
        %2293 = vmatmul.mubr.bf16.gmra.mrb[0].mxu0 %v2248
        %v2294 = vpop.f32.mrb[0].mxu0
        %v2295 = vadd.f32 0.0, %v2294
        %v2296 = vpop.f32.mrb[0].mxu0
        %v2297 = vadd.f32 0.0, %v2296
        %v2298 = vpop.f32.mrb[0].mxu0
        %v2299 = vpop.f32.mrb[0].mxu0
        %2300 = vdwg.mxu0
        %v2309 = vunpack.c.l.b16 %v2172
        %v2310 = vunpack.c.h.b16 %v2172
        %v2311 = vunpack.c.l.b16 %v2173
        %v2312 = vunpack.c.h.b16 %v2173
        %v2313 = vunpack.c.l.b16 %v2174
        %v2314 = vunpack.c.h.b16 %v2174
        %v2315 = vunpack.c.l.b16 %v2175
        %v2316 = vunpack.c.h.b16 %v2175
        %v2317 = vunpack.c.l.b16 %v2176
        %v2318 = vunpack.c.h.b16 %v2176
        %v2319 = vunpack.c.l.b16 %v2177
        %v2320 = vunpack.c.h.b16 %v2177
        %v2321 = vunpack.c.l.b16 %v2178
        %v2322 = vunpack.c.h.b16 %v2178
        %v2323 = vunpack.c.l.b16 %v2179
        %v2324 = vunpack.c.h.b16 %v2179
        %v2325 = vpack.c.b16 %v2311, %v2309
        %v2326 = vpack.c.b16 %v2312, %v2310
        %v2327 = vpack.c.b16 %v2315, %v2313
        %v2328 = vpack.c.b16 %v2316, %v2314
        %v2329 = vpack.c.b16 %v2319, %v2317
        %v2330 = vpack.c.b16 %v2320, %v2318
        %v2331 = vpack.c.b16 %v2323, %v2321
        %v2332 = vpack.c.b16 %v2324, %v2322
        %v2342 = vsel %vm1544, %v2198, 0
        %v2345 = vsel %vm1544, %v2199, 0
        %2347 = vmatprep.subr.bf16.mxu0 %v2326
        %2348 = vmatpush1.bf16.msra.mxu0 %v2325
        %2349 = vmatprep.subr.bf16.mxu0 %v2328
        %2350 = vmatpush1.bf16.msra.mxu0 %v2327
        %2351 = vmatprep.subr.bf16.mxu0 %v2330
        %2352 = vmatpush1.bf16.msra.mxu0 %v2329
        %2353 = vmatprep.subr.bf16.mxu0 %v2332
        %2354 = vmatpush1.bf16.msra.mxu0 %v2331
        %2355 = vmatprep.subr.bf16.mxu0 0
        %2356 = vmatpush1.bf16.msra.mxu0 0
        %2357 = vmatprep.subr.bf16.mxu0 0
        %2358 = vmatpush1.bf16.msra.mxu0 0
        %2359 = vmatprep.subr.bf16.mxu0 0
        %2360 = vmatpush1.bf16.msra.mxu0 0
        %2361 = vmatprep.subr.bf16.mxu0 0
        %2362 = vmatpush1.bf16.msra.mxu0 0
        %2363 = vmatprep.subr.bf16.mxu0 0
        %2364 = vmatpush1.bf16.msra.mxu0 0
        %2365 = vmatprep.subr.bf16.mxu0 0
        %2366 = vmatpush1.bf16.msra.mxu0 0
        %2367 = vmatprep.subr.bf16.mxu0 0
        %2368 = vmatpush1.bf16.msra.mxu0 0
        %2369 = vmatprep.subr.bf16.mxu0 0
        %2370 = vmatpush1.bf16.msra.mxu0 0
        %2371 = vmatprep.subr.bf16.mxu0 0
        %2372 = vmatpush1.bf16.msra.mxu0 0
        %2373 = vmatprep.subr.bf16.mxu0 0
        %2374 = vmatpush1.bf16.msra.mxu0 0
        %2375 = vmatprep.subr.bf16.mxu0 0
        %2376 = vmatpush1.bf16.msra.mxu0 0
        %2377 = vmatprep.subr.bf16.mxu0 0
        %2378 = vmatpush1.bf16.msra.mxu0 0
        %2379 = vmatprep.mubr.bf16.mxu0 0
        %2380 = vmatmul.mubr.bf16.gmra.mrb[0].mxu0 %v2342
        %v2381 = vpop.f32.mrb[0].mxu0
        %v2382 = vadd.f32 0.0, %v2381
        %v2383 = vpop.f32.mrb[0].mxu0
        %v2384 = vadd.f32 0.0, %v2383
        %v2385 = vpop.f32.mrb[0].mxu0
        %v2386 = vadd.f32 0.0, %v2385
        %v2387 = vpop.f32.mrb[0].mxu0
        %v2388 = vadd.f32 0.0, %v2387
        %2389 = vmatprep.mubr.bf16.mxu0 0
        %2390 = vmatmul.mubr.bf16.gmra.mrb[0].mxu0 %v2345
        %v2391 = vpop.f32.mrb[0].mxu0
        %v2392 = vadd.f32 0.0, %v2391
        %v2393 = vpop.f32.mrb[0].mxu0
        %v2394 = vadd.f32 0.0, %v2393
        %v2395 = vpop.f32.mrb[0].mxu0
        %v2396 = vpop.f32.mrb[0].mxu0
        %2397 = vdwg.mxu0
        %v2406 = vunpack.c.l.b16 %v2180
        %v2407 = vunpack.c.h.b16 %v2180
        %v2408 = vunpack.c.l.b16 %v2181
        %v2409 = vunpack.c.h.b16 %v2181
        %v2410 = vunpack.c.l.b16 %v2182
        %v2411 = vunpack.c.h.b16 %v2182
        %v2412 = vunpack.c.l.b16 %v2183
        %v2413 = vunpack.c.h.b16 %v2183
        %v2414 = vunpack.c.l.b16 %v2184
        %v2415 = vunpack.c.h.b16 %v2184
        %v2416 = vunpack.c.l.b16 %v2185
        %v2417 = vunpack.c.h.b16 %v2185
        %v2418 = vunpack.c.l.b16 %v2186
        %v2419 = vunpack.c.h.b16 %v2186
        %v2420 = vunpack.c.l.b16 %v2187
        %v2421 = vunpack.c.h.b16 %v2187
        %v2422 = vpack.c.b16 %v2408, %v2406
        %v2423 = vpack.c.b16 %v2409, %v2407
        %v2424 = vpack.c.b16 %v2412, %v2410
        %v2425 = vpack.c.b16 %v2413, %v2411
        %v2426 = vpack.c.b16 %v2416, %v2414
        %v2427 = vpack.c.b16 %v2417, %v2415
        %v2428 = vpack.c.b16 %v2420, %v2418
        %v2429 = vpack.c.b16 %v2421, %v2419
        %v2439 = vsel %vm1544, %v2200, 0
        %v2442 = vsel %vm1544, %v2201, 0
        %2444 = vmatprep.subr.bf16.mxu0 %v2423
        %2445 = vmatpush1.bf16.msra.mxu0 %v2422
        %2446 = vmatprep.subr.bf16.mxu0 %v2425
        %2447 = vmatpush1.bf16.msra.mxu0 %v2424
        %2448 = vmatprep.subr.bf16.mxu0 %v2427
        %2449 = vmatpush1.bf16.msra.mxu0 %v2426
        %2450 = vmatprep.subr.bf16.mxu0 %v2429
        %2451 = vmatpush1.bf16.msra.mxu0 %v2428
        %2452 = vmatprep.subr.bf16.mxu0 0
        %2453 = vmatpush1.bf16.msra.mxu0 0
        %2454 = vmatprep.subr.bf16.mxu0 0
        %2455 = vmatpush1.bf16.msra.mxu0 0
        %2456 = vmatprep.subr.bf16.mxu0 0
        %2457 = vmatpush1.bf16.msra.mxu0 0
        %2458 = vmatprep.subr.bf16.mxu0 0
        %2459 = vmatpush1.bf16.msra.mxu0 0
        %2460 = vmatprep.subr.bf16.mxu0 0
        %2461 = vmatpush1.bf16.msra.mxu0 0
        %2462 = vmatprep.subr.bf16.mxu0 0
        %2463 = vmatpush1.bf16.msra.mxu0 0
        %2464 = vmatprep.subr.bf16.mxu0 0
        %2465 = vmatpush1.bf16.msra.mxu0 0
        %2466 = vmatprep.subr.bf16.mxu0 0
        %2467 = vmatpush1.bf16.msra.mxu0 0
        %2468 = vmatprep.subr.bf16.mxu0 0
        %2469 = vmatpush1.bf16.msra.mxu0 0
        %2470 = vmatprep.subr.bf16.mxu0 0
        %2471 = vmatpush1.bf16.msra.mxu0 0
        %2472 = vmatprep.subr.bf16.mxu0 0
        %2473 = vmatpush1.bf16.msra.mxu0 0
        %2474 = vmatprep.subr.bf16.mxu0 0
        %2475 = vmatpush1.bf16.msra.mxu0 0
        %2476 = vmatprep.mubr.bf16.mxu0 0
        %2477 = vmatmul.mubr.bf16.gmra.mrb[0].mxu0 %v2439
        %v2478 = vpop.f32.mrb[0].mxu0
        %v2479 = vadd.f32 0.0, %v2478
        %v2480 = vpop.f32.mrb[0].mxu0
        %v2481 = vadd.f32 0.0, %v2480
        %v2482 = vpop.f32.mrb[0].mxu0
        %v2483 = vadd.f32 0.0, %v2482
        %v2484 = vpop.f32.mrb[0].mxu0
        %v2485 = vadd.f32 0.0, %v2484
        %2486 = vmatprep.mubr.bf16.mxu0 0
        %2487 = vmatmul.mubr.bf16.gmra.mrb[0].mxu0 %v2442
        %v2488 = vpop.f32.mrb[0].mxu0
        %v2489 = vadd.f32 0.0, %v2488
        %v2490 = vpop.f32.mrb[0].mxu0
        %v2491 = vadd.f32 0.0, %v2490
        %v2492 = vpop.f32.mrb[0].mxu0
        %v2493 = vpop.f32.mrb[0].mxu0
        %2494 = vdwg.mxu0
        %v2503 = vunpack.c.l.b16 %v2188
        %v2504 = vunpack.c.h.b16 %v2188
        %v2505 = vunpack.c.l.b16 %v2189
        %v2506 = vunpack.c.h.b16 %v2189
        %v2507 = vunpack.c.l.b16 %v2190
        %v2508 = vunpack.c.h.b16 %v2190
        %v2509 = vunpack.c.l.b16 %v2191
        %v2510 = vunpack.c.h.b16 %v2191
        %v2511 = vunpack.c.l.b16 %v2192
        %v2512 = vunpack.c.h.b16 %v2192
        %v2513 = vunpack.c.l.b16 %v2193
        %v2514 = vunpack.c.h.b16 %v2193
        %v2515 = vunpack.c.l.b16 %v2194
        %v2516 = vunpack.c.h.b16 %v2194
        %v2517 = vunpack.c.l.b16 %v2195
        %v2518 = vunpack.c.h.b16 %v2195
        %v2519 = vpack.c.b16 %v2505, %v2503
        %v2520 = vpack.c.b16 %v2506, %v2504
        %v2521 = vpack.c.b16 %v2509, %v2507
        %v2522 = vpack.c.b16 %v2510, %v2508
        %v2523 = vpack.c.b16 %v2513, %v2511
        %v2524 = vpack.c.b16 %v2514, %v2512
        %v2525 = vpack.c.b16 %v2517, %v2515
        %v2526 = vpack.c.b16 %v2518, %v2516
        %v2536 = vsel %vm1544, %v2202, 0
        %v2539 = vsel %vm1544, %v2203, 0
        %2541 = vmatprep.subr.bf16.mxu0 %v2520
        %2542 = vmatpush1.bf16.msra.mxu0 %v2519
        %2543 = vmatprep.subr.bf16.mxu0 %v2522
        %2544 = vmatpush1.bf16.msra.mxu0 %v2521
        %2545 = vmatprep.subr.bf16.mxu0 %v2524
        %2546 = vmatpush1.bf16.msra.mxu0 %v2523
        %2547 = vmatprep.subr.bf16.mxu0 %v2526
        %2548 = vmatpush1.bf16.msra.mxu0 %v2525
        %2549 = vmatprep.subr.bf16.mxu0 0
        %2550 = vmatpush1.bf16.msra.mxu0 0
        %2551 = vmatprep.subr.bf16.mxu0 0
        %2552 = vmatpush1.bf16.msra.mxu0 0
        %2553 = vmatprep.subr.bf16.mxu0 0
        %2554 = vmatpush1.bf16.msra.mxu0 0
        %2555 = vmatprep.subr.bf16.mxu0 0
        %2556 = vmatpush1.bf16.msra.mxu0 0
        %2557 = vmatprep.subr.bf16.mxu0 0
        %2558 = vmatpush1.bf16.msra.mxu0 0
        %2559 = vmatprep.subr.bf16.mxu0 0
        %2560 = vmatpush1.bf16.msra.mxu0 0
        %2561 = vmatprep.subr.bf16.mxu0 0
        %2562 = vmatpush1.bf16.msra.mxu0 0
        %2563 = vmatprep.subr.bf16.mxu0 0
        %2564 = vmatpush1.bf16.msra.mxu0 0
        %2565 = vmatprep.subr.bf16.mxu0 0
        %2566 = vmatpush1.bf16.msra.mxu0 0
        %2567 = vmatprep.subr.bf16.mxu0 0
        %2568 = vmatpush1.bf16.msra.mxu0 0
        %2569 = vmatprep.subr.bf16.mxu0 0
        %2570 = vmatpush1.bf16.msra.mxu0 0
        %2571 = vmatprep.subr.bf16.mxu0 0
        %2572 = vmatpush1.bf16.msra.mxu0 0
        %2573 = vmatprep.mubr.bf16.mxu0 0
        %2574 = vmatmul.mubr.bf16.gmra.mrb[0].mxu0 %v2536
        %v2575 = vpop.f32.mrb[0].mxu0
        %v2576 = vadd.f32 0.0, %v2575
        %v2577 = vpop.f32.mrb[0].mxu0
        %v2578 = vadd.f32 0.0, %v2577
        %v2579 = vpop.f32.mrb[0].mxu0
        %v2580 = vadd.f32 0.0, %v2579
        %v2581 = vpop.f32.mrb[0].mxu0
        %v2582 = vadd.f32 0.0, %v2581
        %2583 = vmatprep.mubr.bf16.mxu0 0
        %2584 = vmatmul.mubr.bf16.gmra.mrb[0].mxu0 %v2539
        %v2585 = vpop.f32.mrb[0].mxu0
        %v2586 = vadd.f32 0.0, %v2585
        %v2587 = vpop.f32.mrb[0].mxu0
        %v2588 = vadd.f32 0.0, %v2587
        %v2589 = vpop.f32.mrb[0].mxu0
        %v2590 = vpop.f32.mrb[0].mxu0
        %2591 = vdwg.mxu0
        %v2592 = vadd.f32 %v2285, %v2382
        %v2593 = vadd.f32 %v2592, %v2479
        %v2594 = vadd.f32 %v2593, %v2576
        %v2595 = vadd.f32 %v2287, %v2384
        %v2596 = vadd.f32 %v2595, %v2481
        %v2597 = vadd.f32 %v2596, %v2578
        %v2598 = vadd.f32 %v2289, %v2386
        %v2599 = vadd.f32 %v2598, %v2483
        %v2600 = vadd.f32 %v2599, %v2580
        %v2601 = vadd.f32 %v2291, %v2388
        %v2602 = vadd.f32 %v2601, %v2485
        %v2603 = vadd.f32 %v2602, %v2582
        %v2604 = vsel %vm579, %v2295, 0.0
        %v2605 = vsel %vm579, %v2392, 0.0
        %v2606 = vadd.f32 %v2604, %v2605
        %v2607 = vsel %vm579, %v2489, 0.0
        %v2608 = vadd.f32 %v2606, %v2607
        %v2609 = vsel %vm579, %v2586, 0.0
        %v2610 = vadd.f32 %v2608, %v2609
        %v2611 = vsel %vm579, %v2297, 0.0
        %v2612 = vsel %vm579, %v2394, 0.0
        %v2613 = vadd.f32 %v2611, %v2612
        %v2614 = vsel %vm579, %v2491, 0.0
        %v2615 = vadd.f32 %v2613, %v2614
        %v2616 = vsel %vm579, %v2588, 0.0
        %v2617 = vadd.f32 %v2615, %v2616
        %v2618 = vadd.f32 %v2594, 0.0
        %v2619 = vadd.f32 %v2597, 0.0
        %v2620 = vadd.f32 %v2600, 0.0
        %v2621 = vadd.f32 %v2603, 0.0
        %v2622 = vadd.f32 %v2610, 0.0
        %v2623 = vadd.f32 %v2617, 0.0
        %v2624 = vmul.f32 %v1901, 0.25
        %2625 = vst.msk [vmem:[%s553] sm:$0x1] %vm1768, %v2624
        %v2626 = vadd.f32 %v565, %v2618
        %v2627 = vadd.f32 %v566, %v2619
        %v2628 = vadd.f32 %v567, %v2620
        %v2629 = vadd.f32 %v568, %v2621
        %v2630 = vadd.f32 %v569, %v2622
        %v2631 = vadd.f32 %v570, %v2623
        %v2632 = vld [vmem:[%s6] sm:$0x3]
        %v2634 = vlaneseq
        %v2635 = vshrl.u32 %v2634, 7
        %v2636 = vsub.s32 0, %v2635
        %v2637 = vrot.slane %v2632, %v2636
        %v2638 = vlaneseq
        %v2639 = vshrl.u32 %v2638, 7
        %v2640 = vsub.s32 1, %v2639
        %v2641 = vrot.slane %v2632, %v2640
        %v2644 = vadd.f32 %v2626, %v2637
        %v2645 = vadd.f32 %v2627, %v2641
        %v2646 = vadd.f32 %v2628, %v2637
        %v2647 = vadd.f32 %v2629, %v2641
        %v2648 = vadd.f32 %v2630, %v2637
        %v2649 = vadd.f32 %v2631, %v2641
        %v2650 = vld [vmem:[%s7] sm:$0x3]
        %v2651 = vld [vmem:[%s8] sm:$0x3]
        %v2652 = vadd.f32 %v2644, %v2645
        %2653 = vadd.xlane.f32.xlu0 %v2652
        %v2654 = vpop.xlane.xlu0 %2653
        %v2655 = vadd.f32 %v2646, %v2647
        %2656 = vadd.xlane.f32.xlu0 %v2655
        %v2657 = vpop.xlane.xlu0 %2656
        %v2658 = vsel %vm579, %v2648, 0.0
        %v2659 = vsel %vm579, %v2649, 0.0
        %v2660 = vadd.f32 %v2658, %v2659
        %2661 = vadd.xlane.f32.xlu0 %v2660
        %v2662 = vpop.xlane.xlu0 %2661
        %v2663 = vmul.f32 %v2654, %v585
        %v2664 = vmul.f32 %v2657, %v585
        %v2665 = vmul.f32 %v2662, %v585
        %v2666 = vsub.f32 %v2644, %v2663
        %v2667 = vsub.f32 %v2645, %v2663
        %v2668 = vsub.f32 %v2646, %v2664
        %v2669 = vsub.f32 %v2647, %v2664
        %v2670 = vsub.f32 %v2648, %v2665
        %v2671 = vsub.f32 %v2649, %v2665
        %v2672 = vmul.f32 %v2666, %v2666
        %v2673 = vmul.f32 %v2667, %v2667
        %v2674 = vmul.f32 %v2668, %v2668
        %v2675 = vmul.f32 %v2669, %v2669
        %v2676 = vmul.f32 %v2670, %v2670
        %v2677 = vmul.f32 %v2671, %v2671
        %v2678 = vadd.f32 %v2672, %v2673
        %2679 = vadd.xlane.f32.xlu0 %v2678
        %v2680 = vpop.xlane.xlu0 %2679
        %v2681 = vadd.f32 %v2674, %v2675
        %2682 = vadd.xlane.f32.xlu0 %v2681
        %v2683 = vpop.xlane.xlu0 %2682
        %v2684 = vsel %vm579, %v2676, 0.0
        %v2685 = vsel %vm579, %v2677, 0.0
        %v2686 = vadd.f32 %v2684, %v2685
        %2687 = vadd.xlane.f32.xlu0 %v2686
        %v2688 = vpop.xlane.xlu0 %2687
        %v2689 = vmul.f32 %v2680, %v585
        %v2690 = vmul.f32 %v2683, %v585
        %v2691 = vmul.f32 %v2688, %v585
        %v2692 = vadd.f32 %v2689, 1e-06
        %v2693 = vadd.f32 %v2690, 1e-06
        %v2694 = vadd.f32 %v2691, 1e-06
        %v2695 = vrsqrt.pop %v2692
        %v2696 = vrsqrt.pop %v2693
        %v2697 = vrsqrt.pop %v2694
        %v2698 = vmul.f32 %v2666, %v2695
        %v2699 = vmul.f32 %v2667, %v2695
        %v2700 = vmul.f32 %v2668, %v2696
        %v2701 = vmul.f32 %v2669, %v2696
        %v2702 = vmul.f32 %v2670, %v2697
        %v2703 = vmul.f32 %v2671, %v2697
        %v2705 = vlaneseq
        %v2706 = vshrl.u32 %v2705, 7
        %v2707 = vsub.s32 0, %v2706
        %v2708 = vrot.slane %v2650, %v2707
        %v2709 = vlaneseq
        %v2710 = vshrl.u32 %v2709, 7
        %v2711 = vsub.s32 1, %v2710
        %v2712 = vrot.slane %v2650, %v2711
        %v2715 = vmul.f32 %v2698, %v2708
        %v2716 = vmul.f32 %v2699, %v2712
        %v2717 = vmul.f32 %v2700, %v2708
        %v2718 = vmul.f32 %v2701, %v2712
        %v2719 = vmul.f32 %v2702, %v2708
        %v2720 = vmul.f32 %v2703, %v2712
        %v2722 = vlaneseq
        %v2723 = vshrl.u32 %v2722, 7
        %v2724 = vsub.s32 0, %v2723
        %v2725 = vrot.slane %v2651, %v2724
        %v2726 = vlaneseq
        %v2727 = vshrl.u32 %v2726, 7
        %v2728 = vsub.s32 1, %v2727
        %v2729 = vrot.slane %v2651, %v2728
        %v2732 = vadd.f32 %v2715, %v2725
        %v2733 = vadd.f32 %v2716, %v2729
        %v2734 = vadd.f32 %v2717, %v2725
        %v2735 = vadd.f32 %v2718, %v2729
        %v2736 = vadd.f32 %v2719, %v2725
        %v2737 = vadd.f32 %v2720, %v2729
        %v2738 = vpack.c.bf16 %v2734, %v2732
        %v2739 = vpack.c.bf16 %v2735, %v2733
        %v2740 = vpack.c.bf16 %v2736, %v2736
        %v2741 = vpack.c.bf16 %v2737, %v2737
        %v2742 = vld [vmem:[#allocation7] sm:$0xff]
        %v2743 = vld [vmem:[#allocation7 + $0x8] sm:$0xff]
        %v2744 = vld [vmem:[#allocation7 + $0x10] sm:$0xff]
        %v2745 = vld [vmem:[#allocation7 + $0x18] sm:$0xff]
        %v2746 = vld [vmem:[#allocation7 + $0x20] sm:$0xff]
        %v2747 = vld [vmem:[#allocation7 + $0x28] sm:$0xff]
        %v2748 = vld [vmem:[#allocation7 + $0x30] sm:$0xff]
        %v2749 = vld [vmem:[#allocation7 + $0x38] sm:$0xff]
        %v2750 = vld [vmem:[#allocation7 + $0x40] sm:$0xff]
        %v2751 = vld [vmem:[#allocation7 + $0x48] sm:$0xff]
        %v2752 = vld [vmem:[#allocation7 + $0x50] sm:$0xff]
        %v2753 = vld [vmem:[#allocation7 + $0x58] sm:$0xff]
        %v2754 = vld [vmem:[#allocation7 + $0x60] sm:$0xff]
        %v2755 = vld [vmem:[#allocation7 + $0x68] sm:$0xff]
        %v2756 = vld [vmem:[#allocation7 + $0x70] sm:$0xff]
        %v2757 = vld [vmem:[#allocation7 + $0x78] sm:$0xff]
        %v2758 = vld [vmem:[#allocation7 + $0x80] sm:$0xff]
        %v2759 = vld [vmem:[#allocation7 + $0x88] sm:$0xff]
        %v2760 = vld [vmem:[#allocation7 + $0x90] sm:$0xff]
        %v2761 = vld [vmem:[#allocation7 + $0x98] sm:$0xff]
        %v2762 = vld [vmem:[#allocation7 + $0xa0] sm:$0xff]
        %v2763 = vld [vmem:[#allocation7 + $0xa8] sm:$0xff]
        %v2764 = vld [vmem:[#allocation7 + $0xb0] sm:$0xff]
        %v2765 = vld [vmem:[#allocation7 + $0xb8] sm:$0xff]
        %v2766 = vld [vmem:[#allocation7 + $0xc0] sm:$0xff]
        %v2767 = vld [vmem:[#allocation7 + $0xc8] sm:$0xff]
        %v2768 = vld [vmem:[#allocation7 + $0xd0] sm:$0xff]
        %v2769 = vld [vmem:[#allocation7 + $0xd8] sm:$0xff]
        %v2770 = vld [vmem:[#allocation7 + $0xe0] sm:$0xff]
        %v2771 = vld [vmem:[#allocation7 + $0xe8] sm:$0xff]
        %v2772 = vld [vmem:[#allocation7 + $0xf0] sm:$0xff]
        %v2773 = vld [vmem:[#allocation7 + $0xf8] sm:$0xff]
        %v2774 = vld [vmem:[#allocation7 + $0x100] sm:$0xff]
        %v2775 = vld [vmem:[#allocation7 + $0x108] sm:$0xff]
        %v2776 = vld [vmem:[#allocation7 + $0x110] sm:$0xff]
        %v2777 = vld [vmem:[#allocation7 + $0x118] sm:$0xff]
        %v2778 = vld [vmem:[#allocation7 + $0x120] sm:$0xff]
        %v2779 = vld [vmem:[#allocation7 + $0x128] sm:$0xff]
        %v2780 = vld [vmem:[#allocation7 + $0x130] sm:$0xff]
        %v2781 = vld [vmem:[#allocation7 + $0x138] sm:$0xff]
        %v2782 = vld [vmem:[#allocation7 + $0x140] sm:$0xff]
        %v2783 = vld [vmem:[#allocation7 + $0x148] sm:$0xff]
        %v2784 = vld [vmem:[#allocation7 + $0x150] sm:$0xff]
        %v2785 = vld [vmem:[#allocation7 + $0x158] sm:$0xff]
        %v2786 = vld [vmem:[#allocation7 + $0x160] sm:$0xff]
        %v2787 = vld [vmem:[#allocation7 + $0x168] sm:$0xff]
        %v2788 = vld [vmem:[#allocation7 + $0x170] sm:$0xff]
        %v2789 = vld [vmem:[#allocation7 + $0x178] sm:$0xff]
        %v2790 = vld [vmem:[#allocation7 + $0x180] sm:$0xff]
        %v2791 = vld [vmem:[#allocation7 + $0x188] sm:$0xff]
        %v2792 = vld [vmem:[#allocation7 + $0x190] sm:$0xff]
        %v2793 = vld [vmem:[#allocation7 + $0x198] sm:$0xff]
        %v2794 = vld [vmem:[#allocation7 + $0x1a0] sm:$0xff]
        %v2795 = vld [vmem:[#allocation7 + $0x1a8] sm:$0xff]
        %v2796 = vld [vmem:[#allocation7 + $0x1b0] sm:$0xff]
        %v2797 = vld [vmem:[#allocation7 + $0x1b8] sm:$0xff]
        %v2798 = vld [vmem:[#allocation7 + $0x1c0] sm:$0xff]
        %v2799 = vld [vmem:[#allocation7 + $0x1c8] sm:$0xff]
        %v2800 = vld [vmem:[#allocation7 + $0x1d0] sm:$0xff]
        %v2801 = vld [vmem:[#allocation7 + $0x1d8] sm:$0xff]
        %v2802 = vld [vmem:[#allocation7 + $0x1e0] sm:$0xff]
        %v2803 = vld [vmem:[#allocation7 + $0x1e8] sm:$0xff]
        %v2804 = vld [vmem:[#allocation7 + $0x1f0] sm:$0xff]
        %v2805 = vld [vmem:[#allocation7 + $0x1f8] sm:$0xff]
        %v2806 = vld [vmem:[#allocation7 + $0x200] sm:$0xff]
        %v2807 = vld [vmem:[#allocation7 + $0x208] sm:$0xff]
        %v2808 = vld [vmem:[#allocation7 + $0x210] sm:$0xff]
        %v2809 = vld [vmem:[#allocation7 + $0x218] sm:$0xff]
        %v2810 = vld [vmem:[#allocation7 + $0x220] sm:$0xff]
        %v2811 = vld [vmem:[#allocation7 + $0x228] sm:$0xff]
        %v2812 = vld [vmem:[#allocation7 + $0x230] sm:$0xff]
        %v2813 = vld [vmem:[#allocation7 + $0x238] sm:$0xff]
        %v2814 = vld [vmem:[#allocation7 + $0x240] sm:$0xff]
        %v2815 = vld [vmem:[#allocation7 + $0x248] sm:$0xff]
        %v2816 = vld [vmem:[#allocation7 + $0x250] sm:$0xff]
        %v2817 = vld [vmem:[#allocation7 + $0x258] sm:$0xff]
        %v2818 = vld [vmem:[#allocation7 + $0x260] sm:$0xff]
        %v2819 = vld [vmem:[#allocation7 + $0x268] sm:$0xff]
        %v2820 = vld [vmem:[#allocation7 + $0x270] sm:$0xff]
        %v2821 = vld [vmem:[#allocation7 + $0x278] sm:$0xff]
        %v2822 = vld [vmem:[#allocation7 + $0x280] sm:$0xff]
        %v2823 = vld [vmem:[#allocation7 + $0x288] sm:$0xff]
        %v2824 = vld [vmem:[#allocation7 + $0x290] sm:$0xff]
        %v2825 = vld [vmem:[#allocation7 + $0x298] sm:$0xff]
        %v2826 = vld [vmem:[#allocation7 + $0x2a0] sm:$0xff]
        %v2827 = vld [vmem:[#allocation7 + $0x2a8] sm:$0xff]
        %v2828 = vld [vmem:[#allocation7 + $0x2b0] sm:$0xff]
        %v2829 = vld [vmem:[#allocation7 + $0x2b8] sm:$0xff]
        %v2830 = vld [vmem:[#allocation7 + $0x2c0] sm:$0xff]
        %v2831 = vld [vmem:[#allocation7 + $0x2c8] sm:$0xff]
        %v2832 = vld [vmem:[#allocation7 + $0x2d0] sm:$0xff]
        %v2833 = vld [vmem:[#allocation7 + $0x2d8] sm:$0xff]
        %v2834 = vld [vmem:[#allocation7 + $0x2e0] sm:$0xff]
        %v2835 = vld [vmem:[#allocation7 + $0x2e8] sm:$0xff]
        %v2836 = vld [vmem:[#allocation7 + $0x2f0] sm:$0xff]
        %v2837 = vld [vmem:[#allocation7 + $0x2f8] sm:$0xff]
        %v2838 = vld [vmem:[#allocation7 + $0x300] sm:$0xff]
        %v2839 = vld [vmem:[#allocation7 + $0x308] sm:$0xff]
        %v2840 = vld [vmem:[#allocation7 + $0x310] sm:$0xff]
        %v2841 = vld [vmem:[#allocation7 + $0x318] sm:$0xff]
        %v2842 = vld [vmem:[#allocation7 + $0x320] sm:$0xff]
        %v2843 = vld [vmem:[#allocation7 + $0x328] sm:$0xff]
        %v2844 = vld [vmem:[#allocation7 + $0x330] sm:$0xff]
        %v2845 = vld [vmem:[#allocation7 + $0x338] sm:$0xff]
        %v2846 = vld [vmem:[#allocation7 + $0x340] sm:$0xff]
        %v2847 = vld [vmem:[#allocation7 + $0x348] sm:$0xff]
        %v2848 = vld [vmem:[#allocation7 + $0x350] sm:$0xff]
        %v2849 = vld [vmem:[#allocation7 + $0x358] sm:$0xff]
        %v2850 = vld [vmem:[#allocation7 + $0x360] sm:$0xff]
        %v2851 = vld [vmem:[#allocation7 + $0x368] sm:$0xff]
        %v2852 = vld [vmem:[#allocation7 + $0x370] sm:$0xff]
        %v2853 = vld [vmem:[#allocation7 + $0x378] sm:$0xff]
        %v2854 = vld [vmem:[#allocation7 + $0x380] sm:$0xff]
        %v2855 = vld [vmem:[#allocation7 + $0x388] sm:$0xff]
        %v2856 = vld [vmem:[#allocation7 + $0x390] sm:$0xff]
        %v2857 = vld [vmem:[#allocation7 + $0x398] sm:$0xff]
        %v2858 = vld [vmem:[#allocation7 + $0x3a0] sm:$0xff]
        %v2859 = vld [vmem:[#allocation7 + $0x3a8] sm:$0xff]
        %v2860 = vld [vmem:[#allocation7 + $0x3b0] sm:$0xff]
        %v2861 = vld [vmem:[#allocation7 + $0x3b8] sm:$0xff]
        %v2862 = vld [vmem:[#allocation7 + $0x3c0] sm:$0xff]
        %v2863 = vld [vmem:[#allocation7 + $0x3c8] sm:$0xff]
        %v2864 = vld [vmem:[#allocation7 + $0x3d0] sm:$0xff]
        %v2865 = vld [vmem:[#allocation7 + $0x3d8] sm:$0xff]
        %v2866 = vld [vmem:[#allocation7 + $0x3e0] sm:$0xff]
        %v2867 = vld [vmem:[#allocation7 + $0x3e8] sm:$0xff]
        %v2868 = vld [vmem:[#allocation7 + $0x3f0] sm:$0xff]
        %v2869 = vld [vmem:[#allocation7 + $0x3f8] sm:$0xff]
        %v2870 = vld [vmem:[%s10] sm:$0xff]
        %v2872 = vlaneseq
        %v2873 = vshrl.u32 %v2872, 7
        %v2874 = vsub.s32 0, %v2873
        %v2875 = vrot.slane %v2870, %v2874
        %v2876 = vlaneseq
        %v2877 = vshrl.u32 %v2876, 7
        %v2878 = vsub.s32 1, %v2877
        %v2879 = vrot.slane %v2870, %v2878
        %v2880 = vlaneseq
        %v2881 = vshrl.u32 %v2880, 7
        %v2882 = vsub.s32 2, %v2881
        %v2883 = vrot.slane %v2870, %v2882
        %v2884 = vlaneseq
        %v2885 = vshrl.u32 %v2884, 7
        %v2886 = vsub.s32 3, %v2885
        %v2887 = vrot.slane %v2870, %v2886
        %v2888 = vlaneseq
        %v2889 = vshrl.u32 %v2888, 7
        %v2890 = vsub.s32 4, %v2889
        %v2891 = vrot.slane %v2870, %v2890
        %v2892 = vlaneseq
        %v2893 = vshrl.u32 %v2892, 7
        %v2894 = vsub.s32 5, %v2893
        %v2895 = vrot.slane %v2870, %v2894
        %v2896 = vlaneseq
        %v2897 = vshrl.u32 %v2896, 7
        %v2898 = vsub.s32 6, %v2897
        %v2899 = vrot.slane %v2870, %v2898
        %v2900 = vlaneseq
        %v2901 = vshrl.u32 %v2900, 7
        %v2902 = vsub.s32 7, %v2901
        %v2903 = vrot.slane %v2870, %v2902
        %v3040 = vunpack.c.l.b16 %v2742
        %v3041 = vunpack.c.h.b16 %v2742
        %v3042 = vunpack.c.l.b16 %v2743
        %v3043 = vunpack.c.h.b16 %v2743
        %v3044 = vunpack.c.l.b16 %v2744
        %v3045 = vunpack.c.h.b16 %v2744
        %v3046 = vunpack.c.l.b16 %v2745
        %v3047 = vunpack.c.h.b16 %v2745
        %v3048 = vunpack.c.l.b16 %v2746
        %v3049 = vunpack.c.h.b16 %v2746
        %v3050 = vunpack.c.l.b16 %v2747
        %v3051 = vunpack.c.h.b16 %v2747
        %v3052 = vunpack.c.l.b16 %v2748
        %v3053 = vunpack.c.h.b16 %v2748
        %v3054 = vunpack.c.l.b16 %v2749
        %v3055 = vunpack.c.h.b16 %v2749
        %v3056 = vunpack.c.l.b16 %v2750
        %v3057 = vunpack.c.h.b16 %v2750
        %v3058 = vunpack.c.l.b16 %v2751
        %v3059 = vunpack.c.h.b16 %v2751
        %v3060 = vunpack.c.l.b16 %v2752
        %v3061 = vunpack.c.h.b16 %v2752
        %v3062 = vunpack.c.l.b16 %v2753
        %v3063 = vunpack.c.h.b16 %v2753
        %v3064 = vunpack.c.l.b16 %v2754
        %v3065 = vunpack.c.h.b16 %v2754
        %v3066 = vunpack.c.l.b16 %v2755
        %v3067 = vunpack.c.h.b16 %v2755
        %v3068 = vunpack.c.l.b16 %v2756
        %v3069 = vunpack.c.h.b16 %v2756
        %v3070 = vunpack.c.l.b16 %v2757
        %v3071 = vunpack.c.h.b16 %v2757
        %v3072 = vunpack.c.l.b16 %v2758
        %v3073 = vunpack.c.h.b16 %v2758
        %v3074 = vunpack.c.l.b16 %v2759
        %v3075 = vunpack.c.h.b16 %v2759
        %v3076 = vunpack.c.l.b16 %v2760
        %v3077 = vunpack.c.h.b16 %v2760
        %v3078 = vunpack.c.l.b16 %v2761
        %v3079 = vunpack.c.h.b16 %v2761
        %v3080 = vunpack.c.l.b16 %v2762
        %v3081 = vunpack.c.h.b16 %v2762
        %v3082 = vunpack.c.l.b16 %v2763
        %v3083 = vunpack.c.h.b16 %v2763
        %v3084 = vunpack.c.l.b16 %v2764
        %v3085 = vunpack.c.h.b16 %v2764
        %v3086 = vunpack.c.l.b16 %v2765
        %v3087 = vunpack.c.h.b16 %v2765
        %v3088 = vunpack.c.l.b16 %v2766
        %v3089 = vunpack.c.h.b16 %v2766
        %v3090 = vunpack.c.l.b16 %v2767
        %v3091 = vunpack.c.h.b16 %v2767
        %v3092 = vunpack.c.l.b16 %v2768
        %v3093 = vunpack.c.h.b16 %v2768
        %v3094 = vunpack.c.l.b16 %v2769
        %v3095 = vunpack.c.h.b16 %v2769
        %v3096 = vunpack.c.l.b16 %v2770
        %v3097 = vunpack.c.h.b16 %v2770
        %v3098 = vunpack.c.l.b16 %v2771
        %v3099 = vunpack.c.h.b16 %v2771
        %v3100 = vunpack.c.l.b16 %v2772
        %v3101 = vunpack.c.h.b16 %v2772
        %v3102 = vunpack.c.l.b16 %v2773
        %v3103 = vunpack.c.h.b16 %v2773
        %v3104 = vunpack.c.l.b16 %v2774
        %v3105 = vunpack.c.h.b16 %v2774
        %v3106 = vunpack.c.l.b16 %v2775
        %v3107 = vunpack.c.h.b16 %v2775
        %v3108 = vunpack.c.l.b16 %v2776
        %v3109 = vunpack.c.h.b16 %v2776
        %v3110 = vunpack.c.l.b16 %v2777
        %v3111 = vunpack.c.h.b16 %v2777
        %v3112 = vunpack.c.l.b16 %v2778
        %v3113 = vunpack.c.h.b16 %v2778
        %v3114 = vunpack.c.l.b16 %v2779
        %v3115 = vunpack.c.h.b16 %v2779
        %v3116 = vunpack.c.l.b16 %v2780
        %v3117 = vunpack.c.h.b16 %v2780
        %v3118 = vunpack.c.l.b16 %v2781
        %v3119 = vunpack.c.h.b16 %v2781
        %v3120 = vunpack.c.l.b16 %v2782
        %v3121 = vunpack.c.h.b16 %v2782
        %v3122 = vunpack.c.l.b16 %v2783
        %v3123 = vunpack.c.h.b16 %v2783
        %v3124 = vunpack.c.l.b16 %v2784
        %v3125 = vunpack.c.h.b16 %v2784
        %v3126 = vunpack.c.l.b16 %v2785
        %v3127 = vunpack.c.h.b16 %v2785
        %v3128 = vunpack.c.l.b16 %v2786
        %v3129 = vunpack.c.h.b16 %v2786
        %v3130 = vunpack.c.l.b16 %v2787
        %v3131 = vunpack.c.h.b16 %v2787
        %v3132 = vunpack.c.l.b16 %v2788
        %v3133 = vunpack.c.h.b16 %v2788
        %v3134 = vunpack.c.l.b16 %v2789
        %v3135 = vunpack.c.h.b16 %v2789
        %v3136 = vunpack.c.l.b16 %v2790
        %v3137 = vunpack.c.h.b16 %v2790
        %v3138 = vunpack.c.l.b16 %v2791
        %v3139 = vunpack.c.h.b16 %v2791
        %v3140 = vunpack.c.l.b16 %v2792
        %v3141 = vunpack.c.h.b16 %v2792
        %v3142 = vunpack.c.l.b16 %v2793
        %v3143 = vunpack.c.h.b16 %v2793
        %v3144 = vunpack.c.l.b16 %v2794
        %v3145 = vunpack.c.h.b16 %v2794
        %v3146 = vunpack.c.l.b16 %v2795
        %v3147 = vunpack.c.h.b16 %v2795
        %v3148 = vunpack.c.l.b16 %v2796
        %v3149 = vunpack.c.h.b16 %v2796
        %v3150 = vunpack.c.l.b16 %v2797
        %v3151 = vunpack.c.h.b16 %v2797
        %v3152 = vunpack.c.l.b16 %v2798
        %v3153 = vunpack.c.h.b16 %v2798
        %v3154 = vunpack.c.l.b16 %v2799
        %v3155 = vunpack.c.h.b16 %v2799
        %v3156 = vunpack.c.l.b16 %v2800
        %v3157 = vunpack.c.h.b16 %v2800
        %v3158 = vunpack.c.l.b16 %v2801
        %v3159 = vunpack.c.h.b16 %v2801
        %v3160 = vunpack.c.l.b16 %v2802
        %v3161 = vunpack.c.h.b16 %v2802
        %v3162 = vunpack.c.l.b16 %v2803
        %v3163 = vunpack.c.h.b16 %v2803
        %v3164 = vunpack.c.l.b16 %v2804
        %v3165 = vunpack.c.h.b16 %v2804
        %v3166 = vunpack.c.l.b16 %v2805
        %v3167 = vunpack.c.h.b16 %v2805
        %v3168 = vunpack.c.l.b16 %v2806
        %v3169 = vunpack.c.h.b16 %v2806
        %v3170 = vunpack.c.l.b16 %v2807
        %v3171 = vunpack.c.h.b16 %v2807
        %v3172 = vunpack.c.l.b16 %v2808
        %v3173 = vunpack.c.h.b16 %v2808
        %v3174 = vunpack.c.l.b16 %v2809
        %v3175 = vunpack.c.h.b16 %v2809
        %v3176 = vunpack.c.l.b16 %v2810
        %v3177 = vunpack.c.h.b16 %v2810
        %v3178 = vunpack.c.l.b16 %v2811
        %v3179 = vunpack.c.h.b16 %v2811
        %v3180 = vunpack.c.l.b16 %v2812
        %v3181 = vunpack.c.h.b16 %v2812
        %v3182 = vunpack.c.l.b16 %v2813
        %v3183 = vunpack.c.h.b16 %v2813
        %v3184 = vunpack.c.l.b16 %v2814
        %v3185 = vunpack.c.h.b16 %v2814
        %v3186 = vunpack.c.l.b16 %v2815
        %v3187 = vunpack.c.h.b16 %v2815
        %v3188 = vunpack.c.l.b16 %v2816
        %v3189 = vunpack.c.h.b16 %v2816
        %v3190 = vunpack.c.l.b16 %v2817
        %v3191 = vunpack.c.h.b16 %v2817
        %v3192 = vunpack.c.l.b16 %v2818
        %v3193 = vunpack.c.h.b16 %v2818
        %v3194 = vunpack.c.l.b16 %v2819
        %v3195 = vunpack.c.h.b16 %v2819
        %v3196 = vunpack.c.l.b16 %v2820
        %v3197 = vunpack.c.h.b16 %v2820
        %v3198 = vunpack.c.l.b16 %v2821
        %v3199 = vunpack.c.h.b16 %v2821
        %v3200 = vunpack.c.l.b16 %v2822
        %v3201 = vunpack.c.h.b16 %v2822
        %v3202 = vunpack.c.l.b16 %v2823
        %v3203 = vunpack.c.h.b16 %v2823
        %v3204 = vunpack.c.l.b16 %v2824
        %v3205 = vunpack.c.h.b16 %v2824
        %v3206 = vunpack.c.l.b16 %v2825
        %v3207 = vunpack.c.h.b16 %v2825
        %v3208 = vunpack.c.l.b16 %v2826
        %v3209 = vunpack.c.h.b16 %v2826
        %v3210 = vunpack.c.l.b16 %v2827
        %v3211 = vunpack.c.h.b16 %v2827
        %v3212 = vunpack.c.l.b16 %v2828
        %v3213 = vunpack.c.h.b16 %v2828
        %v3214 = vunpack.c.l.b16 %v2829
        %v3215 = vunpack.c.h.b16 %v2829
        %v3216 = vunpack.c.l.b16 %v2830
        %v3217 = vunpack.c.h.b16 %v2830
        %v3218 = vunpack.c.l.b16 %v2831
        %v3219 = vunpack.c.h.b16 %v2831
        %v3220 = vunpack.c.l.b16 %v2832
        %v3221 = vunpack.c.h.b16 %v2832
        %v3222 = vunpack.c.l.b16 %v2833
        %v3223 = vunpack.c.h.b16 %v2833
        %v3224 = vunpack.c.l.b16 %v2834
        %v3225 = vunpack.c.h.b16 %v2834
        %v3226 = vunpack.c.l.b16 %v2835
        %v3227 = vunpack.c.h.b16 %v2835
        %v3228 = vunpack.c.l.b16 %v2836
        %v3229 = vunpack.c.h.b16 %v2836
        %v3230 = vunpack.c.l.b16 %v2837
        %v3231 = vunpack.c.h.b16 %v2837
        %v3232 = vunpack.c.l.b16 %v2838
        %v3233 = vunpack.c.h.b16 %v2838
        %v3234 = vunpack.c.l.b16 %v2839
        %v3235 = vunpack.c.h.b16 %v2839
        %v3236 = vunpack.c.l.b16 %v2840
        %v3237 = vunpack.c.h.b16 %v2840
        %v3238 = vunpack.c.l.b16 %v2841
        %v3239 = vunpack.c.h.b16 %v2841
        %v3240 = vunpack.c.l.b16 %v2842
        %v3241 = vunpack.c.h.b16 %v2842
        %v3242 = vunpack.c.l.b16 %v2843
        %v3243 = vunpack.c.h.b16 %v2843
        %v3244 = vunpack.c.l.b16 %v2844
        %v3245 = vunpack.c.h.b16 %v2844
        %v3246 = vunpack.c.l.b16 %v2845
        %v3247 = vunpack.c.h.b16 %v2845
        %v3248 = vunpack.c.l.b16 %v2846
        %v3249 = vunpack.c.h.b16 %v2846
        %v3250 = vunpack.c.l.b16 %v2847
        %v3251 = vunpack.c.h.b16 %v2847
        %v3252 = vunpack.c.l.b16 %v2848
        %v3253 = vunpack.c.h.b16 %v2848
        %v3254 = vunpack.c.l.b16 %v2849
        %v3255 = vunpack.c.h.b16 %v2849
        %v3256 = vunpack.c.l.b16 %v2850
        %v3257 = vunpack.c.h.b16 %v2850
        %v3258 = vunpack.c.l.b16 %v2851
        %v3259 = vunpack.c.h.b16 %v2851
        %v3260 = vunpack.c.l.b16 %v2852
        %v3261 = vunpack.c.h.b16 %v2852
        %v3262 = vunpack.c.l.b16 %v2853
        %v3263 = vunpack.c.h.b16 %v2853
        %v3264 = vunpack.c.l.b16 %v2854
        %v3265 = vunpack.c.h.b16 %v2854
        %v3266 = vunpack.c.l.b16 %v2855
        %v3267 = vunpack.c.h.b16 %v2855
        %v3268 = vunpack.c.l.b16 %v2856
        %v3269 = vunpack.c.h.b16 %v2856
        %v3270 = vunpack.c.l.b16 %v2857
        %v3271 = vunpack.c.h.b16 %v2857
        %v3272 = vunpack.c.l.b16 %v2858
        %v3273 = vunpack.c.h.b16 %v2858
        %v3274 = vunpack.c.l.b16 %v2859
        %v3275 = vunpack.c.h.b16 %v2859
        %v3276 = vunpack.c.l.b16 %v2860
        %v3277 = vunpack.c.h.b16 %v2860
        %v3278 = vunpack.c.l.b16 %v2861
        %v3279 = vunpack.c.h.b16 %v2861
        %v3280 = vunpack.c.l.b16 %v2862
        %v3281 = vunpack.c.h.b16 %v2862
        %v3282 = vunpack.c.l.b16 %v2863
        %v3283 = vunpack.c.h.b16 %v2863
        %v3284 = vunpack.c.l.b16 %v2864
        %v3285 = vunpack.c.h.b16 %v2864
        %v3286 = vunpack.c.l.b16 %v2865
        %v3287 = vunpack.c.h.b16 %v2865
        %v3288 = vunpack.c.l.b16 %v2866
        %v3289 = vunpack.c.h.b16 %v2866
        %v3290 = vunpack.c.l.b16 %v2867
        %v3291 = vunpack.c.h.b16 %v2867
        %v3292 = vunpack.c.l.b16 %v2868
        %v3293 = vunpack.c.h.b16 %v2868
        %v3294 = vunpack.c.l.b16 %v2869
        %v3295 = vunpack.c.h.b16 %v2869
        %v3296 = vpack.c.b16 %v3048, %v3040
        %v3297 = vpack.c.b16 %v3049, %v3041
        %v3298 = vpack.c.b16 %v3050, %v3042
        %v3299 = vpack.c.b16 %v3051, %v3043
        %v3300 = vpack.c.b16 %v3052, %v3044
        %v3301 = vpack.c.b16 %v3053, %v3045
        %v3302 = vpack.c.b16 %v3054, %v3046
        %v3303 = vpack.c.b16 %v3055, %v3047
        %v3304 = vpack.c.b16 %v3064, %v3056
        %v3305 = vpack.c.b16 %v3065, %v3057
        %v3306 = vpack.c.b16 %v3066, %v3058
        %v3307 = vpack.c.b16 %v3067, %v3059
        %v3308 = vpack.c.b16 %v3068, %v3060
        %v3309 = vpack.c.b16 %v3069, %v3061
        %v3310 = vpack.c.b16 %v3070, %v3062
        %v3311 = vpack.c.b16 %v3071, %v3063
        %v3312 = vpack.c.b16 %v3080, %v3072
        %v3313 = vpack.c.b16 %v3081, %v3073
        %v3314 = vpack.c.b16 %v3082, %v3074
        %v3315 = vpack.c.b16 %v3083, %v3075
        %v3316 = vpack.c.b16 %v3084, %v3076
        %v3317 = vpack.c.b16 %v3085, %v3077
        %v3318 = vpack.c.b16 %v3086, %v3078
        %v3319 = vpack.c.b16 %v3087, %v3079
        %v3320 = vpack.c.b16 %v3096, %v3088
        %v3321 = vpack.c.b16 %v3097, %v3089
        %v3322 = vpack.c.b16 %v3098, %v3090
        %v3323 = vpack.c.b16 %v3099, %v3091
        %v3324 = vpack.c.b16 %v3100, %v3092
        %v3325 = vpack.c.b16 %v3101, %v3093
        %v3326 = vpack.c.b16 %v3102, %v3094
        %v3327 = vpack.c.b16 %v3103, %v3095
        %v3328 = vpack.c.b16 %v3112, %v3104
        %v3329 = vpack.c.b16 %v3113, %v3105
        %v3330 = vpack.c.b16 %v3114, %v3106
        %v3331 = vpack.c.b16 %v3115, %v3107
        %v3332 = vpack.c.b16 %v3116, %v3108
        %v3333 = vpack.c.b16 %v3117, %v3109
        %v3334 = vpack.c.b16 %v3118, %v3110
        %v3335 = vpack.c.b16 %v3119, %v3111
        %v3336 = vpack.c.b16 %v3128, %v3120
        %v3337 = vpack.c.b16 %v3129, %v3121
        %v3338 = vpack.c.b16 %v3130, %v3122
        %v3339 = vpack.c.b16 %v3131, %v3123
        %v3340 = vpack.c.b16 %v3132, %v3124
        %v3341 = vpack.c.b16 %v3133, %v3125
        %v3342 = vpack.c.b16 %v3134, %v3126
        %v3343 = vpack.c.b16 %v3135, %v3127
        %v3344 = vpack.c.b16 %v3144, %v3136
        %v3345 = vpack.c.b16 %v3145, %v3137
        %v3346 = vpack.c.b16 %v3146, %v3138
        %v3347 = vpack.c.b16 %v3147, %v3139
        %v3348 = vpack.c.b16 %v3148, %v3140
        %v3349 = vpack.c.b16 %v3149, %v3141
        %v3350 = vpack.c.b16 %v3150, %v3142
        %v3351 = vpack.c.b16 %v3151, %v3143
        %v3352 = vpack.c.b16 %v3160, %v3152
        %v3353 = vpack.c.b16 %v3161, %v3153
        %v3354 = vpack.c.b16 %v3162, %v3154
        %v3355 = vpack.c.b16 %v3163, %v3155
        %v3356 = vpack.c.b16 %v3164, %v3156
        %v3357 = vpack.c.b16 %v3165, %v3157
        %v3358 = vpack.c.b16 %v3166, %v3158
        %v3359 = vpack.c.b16 %v3167, %v3159
        %v3360 = vpack.c.b16 %v3176, %v3168
        %v3361 = vpack.c.b16 %v3177, %v3169
        %v3362 = vpack.c.b16 %v3178, %v3170
        %v3363 = vpack.c.b16 %v3179, %v3171
        %v3364 = vpack.c.b16 %v3180, %v3172
        %v3365 = vpack.c.b16 %v3181, %v3173
        %v3366 = vpack.c.b16 %v3182, %v3174
        %v3367 = vpack.c.b16 %v3183, %v3175
        %v3368 = vpack.c.b16 %v3192, %v3184
        %v3369 = vpack.c.b16 %v3193, %v3185
        %v3370 = vpack.c.b16 %v3194, %v3186
        %v3371 = vpack.c.b16 %v3195, %v3187
        %v3372 = vpack.c.b16 %v3196, %v3188
        %v3373 = vpack.c.b16 %v3197, %v3189
        %v3374 = vpack.c.b16 %v3198, %v3190
        %v3375 = vpack.c.b16 %v3199, %v3191
        %v3376 = vpack.c.b16 %v3208, %v3200
        %v3377 = vpack.c.b16 %v3209, %v3201
        %v3378 = vpack.c.b16 %v3210, %v3202
        %v3379 = vpack.c.b16 %v3211, %v3203
        %v3380 = vpack.c.b16 %v3212, %v3204
        %v3381 = vpack.c.b16 %v3213, %v3205
        %v3382 = vpack.c.b16 %v3214, %v3206
        %v3383 = vpack.c.b16 %v3215, %v3207
        %v3384 = vpack.c.b16 %v3224, %v3216
        %v3385 = vpack.c.b16 %v3225, %v3217
        %v3386 = vpack.c.b16 %v3226, %v3218
        %v3387 = vpack.c.b16 %v3227, %v3219
        %v3388 = vpack.c.b16 %v3228, %v3220
        %v3389 = vpack.c.b16 %v3229, %v3221
        %v3390 = vpack.c.b16 %v3230, %v3222
        %v3391 = vpack.c.b16 %v3231, %v3223
        %v3392 = vpack.c.b16 %v3240, %v3232
        %v3393 = vpack.c.b16 %v3241, %v3233
        %v3394 = vpack.c.b16 %v3242, %v3234
        %v3395 = vpack.c.b16 %v3243, %v3235
        %v3396 = vpack.c.b16 %v3244, %v3236
        %v3397 = vpack.c.b16 %v3245, %v3237
        %v3398 = vpack.c.b16 %v3246, %v3238
        %v3399 = vpack.c.b16 %v3247, %v3239
        %v3400 = vpack.c.b16 %v3256, %v3248
        %v3401 = vpack.c.b16 %v3257, %v3249
        %v3402 = vpack.c.b16 %v3258, %v3250
        %v3403 = vpack.c.b16 %v3259, %v3251
        %v3404 = vpack.c.b16 %v3260, %v3252
        %v3405 = vpack.c.b16 %v3261, %v3253
        %v3406 = vpack.c.b16 %v3262, %v3254
        %v3407 = vpack.c.b16 %v3263, %v3255
        %v3408 = vpack.c.b16 %v3272, %v3264
        %v3409 = vpack.c.b16 %v3273, %v3265
        %v3410 = vpack.c.b16 %v3274, %v3266
        %v3411 = vpack.c.b16 %v3275, %v3267
        %v3412 = vpack.c.b16 %v3276, %v3268
        %v3413 = vpack.c.b16 %v3277, %v3269
        %v3414 = vpack.c.b16 %v3278, %v3270
        %v3415 = vpack.c.b16 %v3279, %v3271
        %v3416 = vpack.c.b16 %v3288, %v3280
        %v3417 = vpack.c.b16 %v3289, %v3281
        %v3418 = vpack.c.b16 %v3290, %v3282
        %v3419 = vpack.c.b16 %v3291, %v3283
        %v3420 = vpack.c.b16 %v3292, %v3284
        %v3421 = vpack.c.b16 %v3293, %v3285
        %v3422 = vpack.c.b16 %v3294, %v3286
        %v3423 = vpack.c.b16 %v3295, %v3287
        %3552 = vmatprep.subr.bf16.mxu0 %v3297
        %3553 = vmatpush1.bf16.msra.mxu0 %v3296
        %3554 = vmatprep.subr.bf16.mxu0 %v3305
        %3555 = vmatpush1.bf16.msra.mxu0 %v3304
        %3556 = vmatprep.subr.bf16.mxu0 %v3313
        %3557 = vmatpush1.bf16.msra.mxu0 %v3312
        %3558 = vmatprep.subr.bf16.mxu0 %v3321
        %3559 = vmatpush1.bf16.msra.mxu0 %v3320
        %3560 = vmatprep.subr.bf16.mxu0 %v3329
        %3561 = vmatpush1.bf16.msra.mxu0 %v3328
        %3562 = vmatprep.subr.bf16.mxu0 %v3337
        %3563 = vmatpush1.bf16.msra.mxu0 %v3336
        %3564 = vmatprep.subr.bf16.mxu0 %v3345
        %3565 = vmatpush1.bf16.msra.mxu0 %v3344
        %3566 = vmatprep.subr.bf16.mxu0 %v3353
        %3567 = vmatpush1.bf16.msra.mxu0 %v3352
        %3568 = vmatprep.subr.bf16.mxu0 %v3361
        %3569 = vmatpush1.bf16.msra.mxu0 %v3360
        %3570 = vmatprep.subr.bf16.mxu0 %v3369
        %3571 = vmatpush1.bf16.msra.mxu0 %v3368
        %3572 = vmatprep.subr.bf16.mxu0 %v3377
        %3573 = vmatpush1.bf16.msra.mxu0 %v3376
        %3574 = vmatprep.subr.bf16.mxu0 %v3385
        %3575 = vmatpush1.bf16.msra.mxu0 %v3384
        %3576 = vmatprep.subr.bf16.mxu0 %v3393
        %3577 = vmatpush1.bf16.msra.mxu0 %v3392
        %3578 = vmatprep.subr.bf16.mxu0 %v3401
        %3579 = vmatpush1.bf16.msra.mxu0 %v3400
        %3580 = vmatprep.subr.bf16.mxu0 %v3409
        %3581 = vmatpush1.bf16.msra.mxu0 %v3408
        %3582 = vmatprep.subr.bf16.mxu0 %v3417
        %3583 = vmatpush1.bf16.msra.mxu0 %v3416
        %3584 = vmatprep.mubr.bf16.mxu0 %v2739
        %3585 = vmatmul.mubr.bf16.gmra.mrb[0].mxu0 %v2738
        %v3586 = vpop.f32.mrb[0].mxu0
        %v3587 = vadd.f32 %v2875, %v3586
        %v3588 = vpop.f32.mrb[0].mxu0
        %v3589 = vadd.f32 %v2879, %v3588
        %v3590 = vpop.f32.mrb[0].mxu0
        %v3591 = vadd.f32 %v2875, %v3590
        %v3592 = vpop.f32.mrb[0].mxu0
        %v3593 = vadd.f32 %v2879, %v3592
        %3594 = vmatprep.mubr.bf16.mxu0 %v2741
        %3595 = vmatmul.mubr.bf16.gmra.mrb[0].mxu0 %v2740
        %v3596 = vpop.f32.mrb[0].mxu0
        %v3597 = vadd.f32 %v2875, %v3596
        %v3598 = vpop.f32.mrb[0].mxu0
        %v3599 = vadd.f32 %v2879, %v3598
        %v3600 = vpop.f32.mrb[0].mxu0
        %v3601 = vpop.f32.mrb[0].mxu0
        %3602 = vdwg.mxu0
        %3603 = vmatprep.subr.bf16.mxu0 %v3299
        %3604 = vmatpush1.bf16.msra.mxu0 %v3298
        %3605 = vmatprep.subr.bf16.mxu0 %v3307
        %3606 = vmatpush1.bf16.msra.mxu0 %v3306
        %3607 = vmatprep.subr.bf16.mxu0 %v3315
        %3608 = vmatpush1.bf16.msra.mxu0 %v3314
        %3609 = vmatprep.subr.bf16.mxu0 %v3323
        %3610 = vmatpush1.bf16.msra.mxu0 %v3322
        %3611 = vmatprep.subr.bf16.mxu0 %v3331
        %3612 = vmatpush1.bf16.msra.mxu0 %v3330
        %3613 = vmatprep.subr.bf16.mxu0 %v3339
        %3614 = vmatpush1.bf16.msra.mxu0 %v3338
        %3615 = vmatprep.subr.bf16.mxu0 %v3347
        %3616 = vmatpush1.bf16.msra.mxu0 %v3346
        %3617 = vmatprep.subr.bf16.mxu0 %v3355
        %3618 = vmatpush1.bf16.msra.mxu0 %v3354
        %3619 = vmatprep.subr.bf16.mxu0 %v3363
        %3620 = vmatpush1.bf16.msra.mxu0 %v3362
        %3621 = vmatprep.subr.bf16.mxu0 %v3371
        %3622 = vmatpush1.bf16.msra.mxu0 %v3370
        %3623 = vmatprep.subr.bf16.mxu0 %v3379
        %3624 = vmatpush1.bf16.msra.mxu0 %v3378
        %3625 = vmatprep.subr.bf16.mxu0 %v3387
        %3626 = vmatpush1.bf16.msra.mxu0 %v3386
        %3627 = vmatprep.subr.bf16.mxu0 %v3395
        %3628 = vmatpush1.bf16.msra.mxu0 %v3394
        %3629 = vmatprep.subr.bf16.mxu0 %v3403
        %3630 = vmatpush1.bf16.msra.mxu0 %v3402
        %3631 = vmatprep.subr.bf16.mxu0 %v3411
        %3632 = vmatpush1.bf16.msra.mxu0 %v3410
        %3633 = vmatprep.subr.bf16.mxu0 %v3419
        %3634 = vmatpush1.bf16.msra.mxu0 %v3418
        %3635 = vmatprep.mubr.bf16.mxu0 %v2739
        %3636 = vmatmul.mubr.bf16.gmra.mrb[0].mxu0 %v2738
        %v3637 = vpop.f32.mrb[0].mxu0
        %v3638 = vadd.f32 %v2883, %v3637
        %v3639 = vpop.f32.mrb[0].mxu0
        %v3640 = vadd.f32 %v2887, %v3639
        %v3641 = vpop.f32.mrb[0].mxu0
        %v3642 = vadd.f32 %v2883, %v3641
        %v3643 = vpop.f32.mrb[0].mxu0
        %v3644 = vadd.f32 %v2887, %v3643
        %3645 = vmatprep.mubr.bf16.mxu0 %v2741
        %3646 = vmatmul.mubr.bf16.gmra.mrb[0].mxu0 %v2740
        %v3647 = vpop.f32.mrb[0].mxu0
        %v3648 = vadd.f32 %v2883, %v3647
        %v3649 = vpop.f32.mrb[0].mxu0
        %v3650 = vadd.f32 %v2887, %v3649
        %v3651 = vpop.f32.mrb[0].mxu0
        %v3652 = vpop.f32.mrb[0].mxu0
        %3653 = vdwg.mxu0
        %3654 = vmatprep.subr.bf16.mxu0 %v3301
        %3655 = vmatpush1.bf16.msra.mxu0 %v3300
        %3656 = vmatprep.subr.bf16.mxu0 %v3309
        %3657 = vmatpush1.bf16.msra.mxu0 %v3308
        %3658 = vmatprep.subr.bf16.mxu0 %v3317
        %3659 = vmatpush1.bf16.msra.mxu0 %v3316
        %3660 = vmatprep.subr.bf16.mxu0 %v3325
        %3661 = vmatpush1.bf16.msra.mxu0 %v3324
        %3662 = vmatprep.subr.bf16.mxu0 %v3333
        %3663 = vmatpush1.bf16.msra.mxu0 %v3332
        %3664 = vmatprep.subr.bf16.mxu0 %v3341
        %3665 = vmatpush1.bf16.msra.mxu0 %v3340
        %3666 = vmatprep.subr.bf16.mxu0 %v3349
        %3667 = vmatpush1.bf16.msra.mxu0 %v3348
        %3668 = vmatprep.subr.bf16.mxu0 %v3357
        %3669 = vmatpush1.bf16.msra.mxu0 %v3356
        %3670 = vmatprep.subr.bf16.mxu0 %v3365
        %3671 = vmatpush1.bf16.msra.mxu0 %v3364
        %3672 = vmatprep.subr.bf16.mxu0 %v3373
        %3673 = vmatpush1.bf16.msra.mxu0 %v3372
        %3674 = vmatprep.subr.bf16.mxu0 %v3381
        %3675 = vmatpush1.bf16.msra.mxu0 %v3380
        %3676 = vmatprep.subr.bf16.mxu0 %v3389
        %3677 = vmatpush1.bf16.msra.mxu0 %v3388
        %3678 = vmatprep.subr.bf16.mxu0 %v3397
        %3679 = vmatpush1.bf16.msra.mxu0 %v3396
        %3680 = vmatprep.subr.bf16.mxu0 %v3405
        %3681 = vmatpush1.bf16.msra.mxu0 %v3404
        %3682 = vmatprep.subr.bf16.mxu0 %v3413
        %3683 = vmatpush1.bf16.msra.mxu0 %v3412
        %3684 = vmatprep.subr.bf16.mxu0 %v3421
        %3685 = vmatpush1.bf16.msra.mxu0 %v3420
        %3686 = vmatprep.mubr.bf16.mxu0 %v2739
        %3687 = vmatmul.mubr.bf16.gmra.mrb[0].mxu0 %v2738
        %v3688 = vpop.f32.mrb[0].mxu0
        %v3689 = vadd.f32 %v2891, %v3688
        %v3690 = vpop.f32.mrb[0].mxu0
        %v3691 = vadd.f32 %v2895, %v3690
        %v3692 = vpop.f32.mrb[0].mxu0
        %v3693 = vadd.f32 %v2891, %v3692
        %v3694 = vpop.f32.mrb[0].mxu0
        %v3695 = vadd.f32 %v2895, %v3694
        %3696 = vmatprep.mubr.bf16.mxu0 %v2741
        %3697 = vmatmul.mubr.bf16.gmra.mrb[0].mxu0 %v2740
        %v3698 = vpop.f32.mrb[0].mxu0
        %v3699 = vadd.f32 %v2891, %v3698
        %v3700 = vpop.f32.mrb[0].mxu0
        %v3701 = vadd.f32 %v2895, %v3700
        %v3702 = vpop.f32.mrb[0].mxu0
        %v3703 = vpop.f32.mrb[0].mxu0
        %3704 = vdwg.mxu0
        %3705 = vmatprep.subr.bf16.mxu0 %v3303
        %3706 = vmatpush1.bf16.msra.mxu0 %v3302
        %3707 = vmatprep.subr.bf16.mxu0 %v3311
        %3708 = vmatpush1.bf16.msra.mxu0 %v3310
        %3709 = vmatprep.subr.bf16.mxu0 %v3319
        %3710 = vmatpush1.bf16.msra.mxu0 %v3318
        %3711 = vmatprep.subr.bf16.mxu0 %v3327
        %3712 = vmatpush1.bf16.msra.mxu0 %v3326
        %3713 = vmatprep.subr.bf16.mxu0 %v3335
        %3714 = vmatpush1.bf16.msra.mxu0 %v3334
        %3715 = vmatprep.subr.bf16.mxu0 %v3343
        %3716 = vmatpush1.bf16.msra.mxu0 %v3342
        %3717 = vmatprep.subr.bf16.mxu0 %v3351
        %3718 = vmatpush1.bf16.msra.mxu0 %v3350
        %3719 = vmatprep.subr.bf16.mxu0 %v3359
        %3720 = vmatpush1.bf16.msra.mxu0 %v3358
        %3721 = vmatprep.subr.bf16.mxu0 %v3367
        %3722 = vmatpush1.bf16.msra.mxu0 %v3366
        %3723 = vmatprep.subr.bf16.mxu0 %v3375
        %3724 = vmatpush1.bf16.msra.mxu0 %v3374
        %3725 = vmatprep.subr.bf16.mxu0 %v3383
        %3726 = vmatpush1.bf16.msra.mxu0 %v3382
        %3727 = vmatprep.subr.bf16.mxu0 %v3391
        %3728 = vmatpush1.bf16.msra.mxu0 %v3390
        %3729 = vmatprep.subr.bf16.mxu0 %v3399
        %3730 = vmatpush1.bf16.msra.mxu0 %v3398
        %3731 = vmatprep.subr.bf16.mxu0 %v3407
        %3732 = vmatpush1.bf16.msra.mxu0 %v3406
        %3733 = vmatprep.subr.bf16.mxu0 %v3415
        %3734 = vmatpush1.bf16.msra.mxu0 %v3414
        %3735 = vmatprep.subr.bf16.mxu0 %v3423
        %3736 = vmatpush1.bf16.msra.mxu0 %v3422
        %3737 = vmatprep.mubr.bf16.mxu0 %v2739
        %3738 = vmatmul.mubr.bf16.gmra.mrb[0].mxu0 %v2738
        %v3739 = vpop.f32.mrb[0].mxu0
        %v3740 = vadd.f32 %v2899, %v3739
        %v3741 = vpop.f32.mrb[0].mxu0
        %v3742 = vadd.f32 %v2903, %v3741
        %v3743 = vpop.f32.mrb[0].mxu0
        %v3744 = vadd.f32 %v2899, %v3743
        %v3745 = vpop.f32.mrb[0].mxu0
        %v3746 = vadd.f32 %v2903, %v3745
        %3747 = vmatprep.mubr.bf16.mxu0 %v2741
        %3748 = vmatmul.mubr.bf16.gmra.mrb[0].mxu0 %v2740
        %v3749 = vpop.f32.mrb[0].mxu0
        %v3750 = vadd.f32 %v2899, %v3749
        %v3751 = vpop.f32.mrb[0].mxu0
        %v3752 = vadd.f32 %v2903, %v3751
        %v3753 = vpop.f32.mrb[0].mxu0
        %v3754 = vpop.f32.mrb[0].mxu0
        %3755 = vdwg.mxu0
        %v3756 = vmul.f32 %v3587, %v3587
        %v3757 = vmul.f32 %v3589, %v3589
        %v3758 = vmul.f32 %v3638, %v3638
        %v3759 = vmul.f32 %v3640, %v3640
        %v3760 = vmul.f32 %v3689, %v3689
        %v3761 = vmul.f32 %v3691, %v3691
        %v3762 = vmul.f32 %v3740, %v3740
        %v3763 = vmul.f32 %v3742, %v3742
        %v3764 = vmul.f32 %v3591, %v3591
        %v3765 = vmul.f32 %v3593, %v3593
        %v3766 = vmul.f32 %v3642, %v3642
        %v3767 = vmul.f32 %v3644, %v3644
        %v3768 = vmul.f32 %v3693, %v3693
        %v3769 = vmul.f32 %v3695, %v3695
        %v3770 = vmul.f32 %v3744, %v3744
        %v3771 = vmul.f32 %v3746, %v3746
        %v3772 = vmul.f32 %v3597, %v3597
        %v3773 = vmul.f32 %v3599, %v3599
        %v3774 = vmul.f32 %v3648, %v3648
        %v3775 = vmul.f32 %v3650, %v3650
        %v3776 = vmul.f32 %v3699, %v3699
        %v3777 = vmul.f32 %v3701, %v3701
        %v3778 = vmul.f32 %v3750, %v3750
        %v3779 = vmul.f32 %v3752, %v3752
        %v3780 = vmul.f32 %v3587, %v3756
        %v3781 = vmul.f32 %v3589, %v3757
        %v3782 = vmul.f32 %v3638, %v3758
        %v3783 = vmul.f32 %v3640, %v3759
        %v3784 = vmul.f32 %v3689, %v3760
        %v3785 = vmul.f32 %v3691, %v3761
        %v3786 = vmul.f32 %v3740, %v3762
        %v3787 = vmul.f32 %v3742, %v3763
        %v3788 = vmul.f32 %v3591, %v3764
        %v3789 = vmul.f32 %v3593, %v3765
        %v3790 = vmul.f32 %v3642, %v3766
        %v3791 = vmul.f32 %v3644, %v3767
        %v3792 = vmul.f32 %v3693, %v3768
        %v3793 = vmul.f32 %v3695, %v3769
        %v3794 = vmul.f32 %v3744, %v3770
        %v3795 = vmul.f32 %v3746, %v3771
        %v3796 = vmul.f32 %v3597, %v3772
        %v3797 = vmul.f32 %v3599, %v3773
        %v3798 = vmul.f32 %v3648, %v3774
        %v3799 = vmul.f32 %v3650, %v3775
        %v3800 = vmul.f32 %v3699, %v3776
        %v3801 = vmul.f32 %v3701, %v3777
        %v3802 = vmul.f32 %v3750, %v3778
        %v3803 = vmul.f32 %v3752, %v3779
        %v3804 = vmul.f32 %v3780, 0.044715
        %v3805 = vmul.f32 %v3781, 0.044715
        %v3806 = vmul.f32 %v3782, 0.044715
        %v3807 = vmul.f32 %v3783, 0.044715
        %v3808 = vmul.f32 %v3784, 0.044715
        %v3809 = vmul.f32 %v3785, 0.044715
        %v3810 = vmul.f32 %v3786, 0.044715
        %v3811 = vmul.f32 %v3787, 0.044715
        %v3812 = vmul.f32 %v3788, 0.044715
        %v3813 = vmul.f32 %v3789, 0.044715
        %v3814 = vmul.f32 %v3790, 0.044715
        %v3815 = vmul.f32 %v3791, 0.044715
        %v3816 = vmul.f32 %v3792, 0.044715
        %v3817 = vmul.f32 %v3793, 0.044715
        %v3818 = vmul.f32 %v3794, 0.044715
        %v3819 = vmul.f32 %v3795, 0.044715
        %v3820 = vmul.f32 %v3796, 0.044715
        %v3821 = vmul.f32 %v3797, 0.044715
        %v3822 = vmul.f32 %v3798, 0.044715
        %v3823 = vmul.f32 %v3799, 0.044715
        %v3824 = vmul.f32 %v3800, 0.044715
        %v3825 = vmul.f32 %v3801, 0.044715
        %v3826 = vmul.f32 %v3802, 0.044715
        %v3827 = vmul.f32 %v3803, 0.044715
        %v3828 = vadd.f32 %v3587, %v3804
        %v3829 = vadd.f32 %v3589, %v3805
        %v3830 = vadd.f32 %v3638, %v3806
        %v3831 = vadd.f32 %v3640, %v3807
        %v3832 = vadd.f32 %v3689, %v3808
        %v3833 = vadd.f32 %v3691, %v3809
        %v3834 = vadd.f32 %v3740, %v3810
        %v3835 = vadd.f32 %v3742, %v3811
        %v3836 = vadd.f32 %v3591, %v3812
        %v3837 = vadd.f32 %v3593, %v3813
        %v3838 = vadd.f32 %v3642, %v3814
        %v3839 = vadd.f32 %v3644, %v3815
        %v3840 = vadd.f32 %v3693, %v3816
        %v3841 = vadd.f32 %v3695, %v3817
        %v3842 = vadd.f32 %v3744, %v3818
        %v3843 = vadd.f32 %v3746, %v3819
        %v3844 = vadd.f32 %v3597, %v3820
        %v3845 = vadd.f32 %v3599, %v3821
        %v3846 = vadd.f32 %v3648, %v3822
        %v3847 = vadd.f32 %v3650, %v3823
        %v3848 = vadd.f32 %v3699, %v3824
        %v3849 = vadd.f32 %v3701, %v3825
        %v3850 = vadd.f32 %v3750, %v3826
        %v3851 = vadd.f32 %v3752, %v3827
        %v3852 = vmul.f32 %v3828, 0.7978846
        %v3853 = vmul.f32 %v3829, 0.7978846
        %v3854 = vmul.f32 %v3830, 0.7978846
        %v3855 = vmul.f32 %v3831, 0.7978846
        %v3856 = vmul.f32 %v3832, 0.7978846
        %v3857 = vmul.f32 %v3833, 0.7978846
        %v3858 = vmul.f32 %v3834, 0.7978846
        %v3859 = vmul.f32 %v3835, 0.7978846
        %v3860 = vmul.f32 %v3836, 0.7978846
        %v3861 = vmul.f32 %v3837, 0.7978846
        %v3862 = vmul.f32 %v3838, 0.7978846
        %v3863 = vmul.f32 %v3839, 0.7978846
        %v3864 = vmul.f32 %v3840, 0.7978846
        %v3865 = vmul.f32 %v3841, 0.7978846
        %v3866 = vmul.f32 %v3842, 0.7978846
        %v3867 = vmul.f32 %v3843, 0.7978846
        %v3868 = vmul.f32 %v3844, 0.7978846
        %v3869 = vmul.f32 %v3845, 0.7978846
        %v3870 = vmul.f32 %v3846, 0.7978846
        %v3871 = vmul.f32 %v3847, 0.7978846
        %v3872 = vmul.f32 %v3848, 0.7978846
        %v3873 = vmul.f32 %v3849, 0.7978846
        %v3874 = vmul.f32 %v3850, 0.7978846
        %v3875 = vmul.f32 %v3851, 0.7978846
        %v3876 = vtanh.pop %v3852
        %v3877 = vtanh.pop %v3853
        %v3878 = vtanh.pop %v3854
        %v3879 = vtanh.pop %v3855
        %v3880 = vtanh.pop %v3856
        %v3881 = vtanh.pop %v3857
        %v3882 = vtanh.pop %v3858
        %v3883 = vtanh.pop %v3859
        %v3884 = vtanh.pop %v3860
        %v3885 = vtanh.pop %v3861
        %v3886 = vtanh.pop %v3862
        %v3887 = vtanh.pop %v3863
        %v3888 = vtanh.pop %v3864
        %v3889 = vtanh.pop %v3865
        %v3890 = vtanh.pop %v3866
        %v3891 = vtanh.pop %v3867
        %v3892 = vtanh.pop %v3868
        %v3893 = vtanh.pop %v3869
        %v3894 = vtanh.pop %v3870
        %v3895 = vtanh.pop %v3871
        %v3896 = vtanh.pop %v3872
        %v3897 = vtanh.pop %v3873
        %v3898 = vtanh.pop %v3874
        %v3899 = vtanh.pop %v3875
        %v3900 = vadd.f32 %v3876, 1.0
        %v3901 = vadd.f32 %v3877, 1.0
        %v3902 = vadd.f32 %v3878, 1.0
        %v3903 = vadd.f32 %v3879, 1.0
        %v3904 = vadd.f32 %v3880, 1.0
        %v3905 = vadd.f32 %v3881, 1.0
        %v3906 = vadd.f32 %v3882, 1.0
        %v3907 = vadd.f32 %v3883, 1.0
        %v3908 = vadd.f32 %v3884, 1.0
        %v3909 = vadd.f32 %v3885, 1.0
        %v3910 = vadd.f32 %v3886, 1.0
        %v3911 = vadd.f32 %v3887, 1.0
        %v3912 = vadd.f32 %v3888, 1.0
        %v3913 = vadd.f32 %v3889, 1.0
        %v3914 = vadd.f32 %v3890, 1.0
        %v3915 = vadd.f32 %v3891, 1.0
        %v3916 = vadd.f32 %v3892, 1.0
        %v3917 = vadd.f32 %v3893, 1.0
        %v3918 = vadd.f32 %v3894, 1.0
        %v3919 = vadd.f32 %v3895, 1.0
        %v3920 = vadd.f32 %v3896, 1.0
        %v3921 = vadd.f32 %v3897, 1.0
        %v3922 = vadd.f32 %v3898, 1.0
        %v3923 = vadd.f32 %v3899, 1.0
        %v3924 = vmul.f32 %v3900, 0.5
        %v3925 = vmul.f32 %v3901, 0.5
        %v3926 = vmul.f32 %v3902, 0.5
        %v3927 = vmul.f32 %v3903, 0.5
        %v3928 = vmul.f32 %v3904, 0.5
        %v3929 = vmul.f32 %v3905, 0.5
        %v3930 = vmul.f32 %v3906, 0.5
        %v3931 = vmul.f32 %v3907, 0.5
        %v3932 = vmul.f32 %v3908, 0.5
        %v3933 = vmul.f32 %v3909, 0.5
        %v3934 = vmul.f32 %v3910, 0.5
        %v3935 = vmul.f32 %v3911, 0.5
        %v3936 = vmul.f32 %v3912, 0.5
        %v3937 = vmul.f32 %v3913, 0.5
        %v3938 = vmul.f32 %v3914, 0.5
        %v3939 = vmul.f32 %v3915, 0.5
        %v3940 = vmul.f32 %v3916, 0.5
        %v3941 = vmul.f32 %v3917, 0.5
        %v3942 = vmul.f32 %v3918, 0.5
        %v3943 = vmul.f32 %v3919, 0.5
        %v3944 = vmul.f32 %v3920, 0.5
        %v3945 = vmul.f32 %v3921, 0.5
        %v3946 = vmul.f32 %v3922, 0.5
        %v3947 = vmul.f32 %v3923, 0.5
        %v3948 = vmul.f32 %v3587, %v3924
        %v3949 = vmul.f32 %v3589, %v3925
        %v3950 = vmul.f32 %v3638, %v3926
        %v3951 = vmul.f32 %v3640, %v3927
        %v3952 = vmul.f32 %v3689, %v3928
        %v3953 = vmul.f32 %v3691, %v3929
        %v3954 = vmul.f32 %v3740, %v3930
        %v3955 = vmul.f32 %v3742, %v3931
        %v3956 = vmul.f32 %v3591, %v3932
        %v3957 = vmul.f32 %v3593, %v3933
        %v3958 = vmul.f32 %v3642, %v3934
        %v3959 = vmul.f32 %v3644, %v3935
        %v3960 = vmul.f32 %v3693, %v3936
        %v3961 = vmul.f32 %v3695, %v3937
        %v3962 = vmul.f32 %v3744, %v3938
        %v3963 = vmul.f32 %v3746, %v3939
        %v3964 = vmul.f32 %v3597, %v3940
        %v3965 = vmul.f32 %v3599, %v3941
        %v3966 = vmul.f32 %v3648, %v3942
        %v3967 = vmul.f32 %v3650, %v3943
        %v3968 = vmul.f32 %v3699, %v3944
        %v3969 = vmul.f32 %v3701, %v3945
        %v3970 = vmul.f32 %v3750, %v3946
        %v3971 = vmul.f32 %v3752, %v3947
        %v3972 = vpack.c.bf16 %v3956, %v3948
        %v3973 = vpack.c.bf16 %v3957, %v3949
        %v3974 = vpack.c.bf16 %v3958, %v3950
        %v3975 = vpack.c.bf16 %v3959, %v3951
        %v3976 = vpack.c.bf16 %v3960, %v3952
        %v3977 = vpack.c.bf16 %v3961, %v3953
        %v3978 = vpack.c.bf16 %v3962, %v3954
        %v3979 = vpack.c.bf16 %v3963, %v3955
        %v3980 = vpack.c.bf16 %v3964, %v3964
        %v3981 = vpack.c.bf16 %v3965, %v3965
        %v3982 = vpack.c.bf16 %v3966, %v3966
        %v3983 = vpack.c.bf16 %v3967, %v3967
        %v3984 = vpack.c.bf16 %v3968, %v3968
        %v3985 = vpack.c.bf16 %v3969, %v3969
        %v3986 = vpack.c.bf16 %v3970, %v3970
        %v3987 = vpack.c.bf16 %v3971, %v3971
        %v3988 = vld [vmem:[#allocation8] sm:$0xff]
        %v3989 = vld [vmem:[#allocation8 + $0x8] sm:$0xff]
        %v3990 = vld [vmem:[#allocation8 + $0x10] sm:$0xff]
        %v3991 = vld [vmem:[#allocation8 + $0x18] sm:$0xff]
        %v3992 = vld [vmem:[#allocation8 + $0x20] sm:$0xff]
        %v3993 = vld [vmem:[#allocation8 + $0x28] sm:$0xff]
        %v3994 = vld [vmem:[#allocation8 + $0x30] sm:$0xff]
        %v3995 = vld [vmem:[#allocation8 + $0x38] sm:$0xff]
        %v3996 = vld [vmem:[#allocation8 + $0x40] sm:$0xff]
        %v3997 = vld [vmem:[#allocation8 + $0x48] sm:$0xff]
        %v3998 = vld [vmem:[#allocation8 + $0x50] sm:$0xff]
        %v3999 = vld [vmem:[#allocation8 + $0x58] sm:$0xff]
        %v4000 = vld [vmem:[#allocation8 + $0x60] sm:$0xff]
        %v4001 = vld [vmem:[#allocation8 + $0x68] sm:$0xff]
        %v4002 = vld [vmem:[#allocation8 + $0x70] sm:$0xff]
        %v4003 = vld [vmem:[#allocation8 + $0x78] sm:$0xff]
        %v4004 = vld [vmem:[#allocation8 + $0x80] sm:$0xff]
        %v4005 = vld [vmem:[#allocation8 + $0x88] sm:$0xff]
        %v4006 = vld [vmem:[#allocation8 + $0x90] sm:$0xff]
        %v4007 = vld [vmem:[#allocation8 + $0x98] sm:$0xff]
        %v4008 = vld [vmem:[#allocation8 + $0xa0] sm:$0xff]
        %v4009 = vld [vmem:[#allocation8 + $0xa8] sm:$0xff]
        %v4010 = vld [vmem:[#allocation8 + $0xb0] sm:$0xff]
        %v4011 = vld [vmem:[#allocation8 + $0xb8] sm:$0xff]
        %v4012 = vld [vmem:[#allocation8 + $0xc0] sm:$0xff]
        %v4013 = vld [vmem:[#allocation8 + $0xc8] sm:$0xff]
        %v4014 = vld [vmem:[#allocation8 + $0xd0] sm:$0xff]
        %v4015 = vld [vmem:[#allocation8 + $0xd8] sm:$0xff]
        %v4016 = vld [vmem:[#allocation8 + $0xe0] sm:$0xff]
        %v4017 = vld [vmem:[#allocation8 + $0xe8] sm:$0xff]
        %v4018 = vld [vmem:[#allocation8 + $0xf0] sm:$0xff]
        %v4019 = vld [vmem:[#allocation8 + $0xf8] sm:$0xff]
        %v4020 = vld [vmem:[#allocation8 + $0x100] sm:$0xff]
        %v4021 = vld [vmem:[#allocation8 + $0x108] sm:$0xff]
        %v4022 = vld [vmem:[#allocation8 + $0x110] sm:$0xff]
        %v4023 = vld [vmem:[#allocation8 + $0x118] sm:$0xff]
        %v4024 = vld [vmem:[#allocation8 + $0x120] sm:$0xff]
        %v4025 = vld [vmem:[#allocation8 + $0x128] sm:$0xff]
        %v4026 = vld [vmem:[#allocation8 + $0x130] sm:$0xff]
        %v4027 = vld [vmem:[#allocation8 + $0x138] sm:$0xff]
        %v4028 = vld [vmem:[#allocation8 + $0x140] sm:$0xff]
        %v4029 = vld [vmem:[#allocation8 + $0x148] sm:$0xff]
        %v4030 = vld [vmem:[#allocation8 + $0x150] sm:$0xff]
        %v4031 = vld [vmem:[#allocation8 + $0x158] sm:$0xff]
        %v4032 = vld [vmem:[#allocation8 + $0x160] sm:$0xff]
        %v4033 = vld [vmem:[#allocation8 + $0x168] sm:$0xff]
        %v4034 = vld [vmem:[#allocation8 + $0x170] sm:$0xff]
        %v4035 = vld [vmem:[#allocation8 + $0x178] sm:$0xff]
        %v4036 = vld [vmem:[#allocation8 + $0x180] sm:$0xff]
        %v4037 = vld [vmem:[#allocation8 + $0x188] sm:$0xff]
        %v4038 = vld [vmem:[#allocation8 + $0x190] sm:$0xff]
        %v4039 = vld [vmem:[#allocation8 + $0x198] sm:$0xff]
        %v4040 = vld [vmem:[#allocation8 + $0x1a0] sm:$0xff]
        %v4041 = vld [vmem:[#allocation8 + $0x1a8] sm:$0xff]
        %v4042 = vld [vmem:[#allocation8 + $0x1b0] sm:$0xff]
        %v4043 = vld [vmem:[#allocation8 + $0x1b8] sm:$0xff]
        %v4044 = vld [vmem:[#allocation8 + $0x1c0] sm:$0xff]
        %v4045 = vld [vmem:[#allocation8 + $0x1c8] sm:$0xff]
        %v4046 = vld [vmem:[#allocation8 + $0x1d0] sm:$0xff]
        %v4047 = vld [vmem:[#allocation8 + $0x1d8] sm:$0xff]
        %v4048 = vld [vmem:[#allocation8 + $0x1e0] sm:$0xff]
        %v4049 = vld [vmem:[#allocation8 + $0x1e8] sm:$0xff]
        %v4050 = vld [vmem:[#allocation8 + $0x1f0] sm:$0xff]
        %v4051 = vld [vmem:[#allocation8 + $0x1f8] sm:$0xff]
        %v4052 = vld [vmem:[#allocation8 + $0x200] sm:$0xff]
        %v4053 = vld [vmem:[#allocation8 + $0x208] sm:$0xff]
        %v4054 = vld [vmem:[#allocation8 + $0x210] sm:$0xff]
        %v4055 = vld [vmem:[#allocation8 + $0x218] sm:$0xff]
        %v4056 = vld [vmem:[#allocation8 + $0x220] sm:$0xff]
        %v4057 = vld [vmem:[#allocation8 + $0x228] sm:$0xff]
        %v4058 = vld [vmem:[#allocation8 + $0x230] sm:$0xff]
        %v4059 = vld [vmem:[#allocation8 + $0x238] sm:$0xff]
        %v4060 = vld [vmem:[#allocation8 + $0x240] sm:$0xff]
        %v4061 = vld [vmem:[#allocation8 + $0x248] sm:$0xff]
        %v4062 = vld [vmem:[#allocation8 + $0x250] sm:$0xff]
        %v4063 = vld [vmem:[#allocation8 + $0x258] sm:$0xff]
        %v4064 = vld [vmem:[#allocation8 + $0x260] sm:$0xff]
        %v4065 = vld [vmem:[#allocation8 + $0x268] sm:$0xff]
        %v4066 = vld [vmem:[#allocation8 + $0x270] sm:$0xff]
        %v4067 = vld [vmem:[#allocation8 + $0x278] sm:$0xff]
        %v4068 = vld [vmem:[#allocation8 + $0x280] sm:$0xff]
        %v4069 = vld [vmem:[#allocation8 + $0x288] sm:$0xff]
        %v4070 = vld [vmem:[#allocation8 + $0x290] sm:$0xff]
        %v4071 = vld [vmem:[#allocation8 + $0x298] sm:$0xff]
        %v4072 = vld [vmem:[#allocation8 + $0x2a0] sm:$0xff]
        %v4073 = vld [vmem:[#allocation8 + $0x2a8] sm:$0xff]
        %v4074 = vld [vmem:[#allocation8 + $0x2b0] sm:$0xff]
        %v4075 = vld [vmem:[#allocation8 + $0x2b8] sm:$0xff]
        %v4076 = vld [vmem:[#allocation8 + $0x2c0] sm:$0xff]
        %v4077 = vld [vmem:[#allocation8 + $0x2c8] sm:$0xff]
        %v4078 = vld [vmem:[#allocation8 + $0x2d0] sm:$0xff]
        %v4079 = vld [vmem:[#allocation8 + $0x2d8] sm:$0xff]
        %v4080 = vld [vmem:[#allocation8 + $0x2e0] sm:$0xff]
        %v4081 = vld [vmem:[#allocation8 + $0x2e8] sm:$0xff]
        %v4082 = vld [vmem:[#allocation8 + $0x2f0] sm:$0xff]
        %v4083 = vld [vmem:[#allocation8 + $0x2f8] sm:$0xff]
        %v4084 = vld [vmem:[#allocation8 + $0x300] sm:$0xff]
        %v4085 = vld [vmem:[#allocation8 + $0x308] sm:$0xff]
        %v4086 = vld [vmem:[#allocation8 + $0x310] sm:$0xff]
        %v4087 = vld [vmem:[#allocation8 + $0x318] sm:$0xff]
        %v4088 = vld [vmem:[#allocation8 + $0x320] sm:$0xff]
        %v4089 = vld [vmem:[#allocation8 + $0x328] sm:$0xff]
        %v4090 = vld [vmem:[#allocation8 + $0x330] sm:$0xff]
        %v4091 = vld [vmem:[#allocation8 + $0x338] sm:$0xff]
        %v4092 = vld [vmem:[#allocation8 + $0x340] sm:$0xff]
        %v4093 = vld [vmem:[#allocation8 + $0x348] sm:$0xff]
        %v4094 = vld [vmem:[#allocation8 + $0x350] sm:$0xff]
        %v4095 = vld [vmem:[#allocation8 + $0x358] sm:$0xff]
        %v4096 = vld [vmem:[#allocation8 + $0x360] sm:$0xff]
        %v4097 = vld [vmem:[#allocation8 + $0x368] sm:$0xff]
        %v4098 = vld [vmem:[#allocation8 + $0x370] sm:$0xff]
        %v4099 = vld [vmem:[#allocation8 + $0x378] sm:$0xff]
        %v4100 = vld [vmem:[#allocation8 + $0x380] sm:$0xff]
        %v4101 = vld [vmem:[#allocation8 + $0x388] sm:$0xff]
        %v4102 = vld [vmem:[#allocation8 + $0x390] sm:$0xff]
        %v4103 = vld [vmem:[#allocation8 + $0x398] sm:$0xff]
        %v4104 = vld [vmem:[#allocation8 + $0x3a0] sm:$0xff]
        %v4105 = vld [vmem:[#allocation8 + $0x3a8] sm:$0xff]
        %v4106 = vld [vmem:[#allocation8 + $0x3b0] sm:$0xff]
        %v4107 = vld [vmem:[#allocation8 + $0x3b8] sm:$0xff]
        %v4108 = vld [vmem:[#allocation8 + $0x3c0] sm:$0xff]
        %v4109 = vld [vmem:[#allocation8 + $0x3c8] sm:$0xff]
        %v4110 = vld [vmem:[#allocation8 + $0x3d0] sm:$0xff]
        %v4111 = vld [vmem:[#allocation8 + $0x3d8] sm:$0xff]
        %v4112 = vld [vmem:[#allocation8 + $0x3e0] sm:$0xff]
        %v4113 = vld [vmem:[#allocation8 + $0x3e8] sm:$0xff]
        %v4114 = vld [vmem:[#allocation8 + $0x3f0] sm:$0xff]
        %v4115 = vld [vmem:[#allocation8 + $0x3f8] sm:$0xff]
        %v4116 = vld [vmem:[%s12] sm:$0x3]
        %v4118 = vlaneseq
        %v4119 = vshrl.u32 %v4118, 7
        %v4120 = vsub.s32 0, %v4119
        %v4121 = vrot.slane %v4116, %v4120
        %v4122 = vlaneseq
        %v4123 = vshrl.u32 %v4122, 7
        %v4124 = vsub.s32 1, %v4123
        %v4125 = vrot.slane %v4116, %v4124
        %v4256 = vunpack.c.l.b16 %v3988
        %v4257 = vunpack.c.h.b16 %v3988
        %v4258 = vunpack.c.l.b16 %v3989
        %v4259 = vunpack.c.h.b16 %v3989
        %v4260 = vunpack.c.l.b16 %v3990
        %v4261 = vunpack.c.h.b16 %v3990
        %v4262 = vunpack.c.l.b16 %v3991
        %v4263 = vunpack.c.h.b16 %v3991
        %v4264 = vunpack.c.l.b16 %v3992
        %v4265 = vunpack.c.h.b16 %v3992
        %v4266 = vunpack.c.l.b16 %v3993
        %v4267 = vunpack.c.h.b16 %v3993
        %v4268 = vunpack.c.l.b16 %v3994
        %v4269 = vunpack.c.h.b16 %v3994
        %v4270 = vunpack.c.l.b16 %v3995
        %v4271 = vunpack.c.h.b16 %v3995
        %v4272 = vunpack.c.l.b16 %v3996
        %v4273 = vunpack.c.h.b16 %v3996
        %v4274 = vunpack.c.l.b16 %v3997
        %v4275 = vunpack.c.h.b16 %v3997
        %v4276 = vunpack.c.l.b16 %v3998
        %v4277 = vunpack.c.h.b16 %v3998
        %v4278 = vunpack.c.l.b16 %v3999
        %v4279 = vunpack.c.h.b16 %v3999
        %v4280 = vunpack.c.l.b16 %v4000
        %v4281 = vunpack.c.h.b16 %v4000
        %v4282 = vunpack.c.l.b16 %v4001
        %v4283 = vunpack.c.h.b16 %v4001
        %v4284 = vunpack.c.l.b16 %v4002
        %v4285 = vunpack.c.h.b16 %v4002
        %v4286 = vunpack.c.l.b16 %v4003
        %v4287 = vunpack.c.h.b16 %v4003
        %v4288 = vunpack.c.l.b16 %v4004
        %v4289 = vunpack.c.h.b16 %v4004
        %v4290 = vunpack.c.l.b16 %v4005
        %v4291 = vunpack.c.h.b16 %v4005
        %v4292 = vunpack.c.l.b16 %v4006
        %v4293 = vunpack.c.h.b16 %v4006
        %v4294 = vunpack.c.l.b16 %v4007
        %v4295 = vunpack.c.h.b16 %v4007
        %v4296 = vunpack.c.l.b16 %v4008
        %v4297 = vunpack.c.h.b16 %v4008
        %v4298 = vunpack.c.l.b16 %v4009
        %v4299 = vunpack.c.h.b16 %v4009
        %v4300 = vunpack.c.l.b16 %v4010
        %v4301 = vunpack.c.h.b16 %v4010
        %v4302 = vunpack.c.l.b16 %v4011
        %v4303 = vunpack.c.h.b16 %v4011
        %v4304 = vunpack.c.l.b16 %v4012
        %v4305 = vunpack.c.h.b16 %v4012
        %v4306 = vunpack.c.l.b16 %v4013
        %v4307 = vunpack.c.h.b16 %v4013
        %v4308 = vunpack.c.l.b16 %v4014
        %v4309 = vunpack.c.h.b16 %v4014
        %v4310 = vunpack.c.l.b16 %v4015
        %v4311 = vunpack.c.h.b16 %v4015
        %v4312 = vunpack.c.l.b16 %v4016
        %v4313 = vunpack.c.h.b16 %v4016
        %v4314 = vunpack.c.l.b16 %v4017
        %v4315 = vunpack.c.h.b16 %v4017
        %v4316 = vunpack.c.l.b16 %v4018
        %v4317 = vunpack.c.h.b16 %v4018
        %v4318 = vunpack.c.l.b16 %v4019
        %v4319 = vunpack.c.h.b16 %v4019
        %v4320 = vunpack.c.l.b16 %v4020
        %v4321 = vunpack.c.h.b16 %v4020
        %v4322 = vunpack.c.l.b16 %v4021
        %v4323 = vunpack.c.h.b16 %v4021
        %v4324 = vunpack.c.l.b16 %v4022
        %v4325 = vunpack.c.h.b16 %v4022
        %v4326 = vunpack.c.l.b16 %v4023
        %v4327 = vunpack.c.h.b16 %v4023
        %v4328 = vunpack.c.l.b16 %v4024
        %v4329 = vunpack.c.h.b16 %v4024
        %v4330 = vunpack.c.l.b16 %v4025
        %v4331 = vunpack.c.h.b16 %v4025
        %v4332 = vunpack.c.l.b16 %v4026
        %v4333 = vunpack.c.h.b16 %v4026
        %v4334 = vunpack.c.l.b16 %v4027
        %v4335 = vunpack.c.h.b16 %v4027
        %v4336 = vunpack.c.l.b16 %v4028
        %v4337 = vunpack.c.h.b16 %v4028
        %v4338 = vunpack.c.l.b16 %v4029
        %v4339 = vunpack.c.h.b16 %v4029
        %v4340 = vunpack.c.l.b16 %v4030
        %v4341 = vunpack.c.h.b16 %v4030
        %v4342 = vunpack.c.l.b16 %v4031
        %v4343 = vunpack.c.h.b16 %v4031
        %v4344 = vunpack.c.l.b16 %v4032
        %v4345 = vunpack.c.h.b16 %v4032
        %v4346 = vunpack.c.l.b16 %v4033
        %v4347 = vunpack.c.h.b16 %v4033
        %v4348 = vunpack.c.l.b16 %v4034
        %v4349 = vunpack.c.h.b16 %v4034
        %v4350 = vunpack.c.l.b16 %v4035
        %v4351 = vunpack.c.h.b16 %v4035
        %v4352 = vunpack.c.l.b16 %v4036
        %v4353 = vunpack.c.h.b16 %v4036
        %v4354 = vunpack.c.l.b16 %v4037
        %v4355 = vunpack.c.h.b16 %v4037
        %v4356 = vunpack.c.l.b16 %v4038
        %v4357 = vunpack.c.h.b16 %v4038
        %v4358 = vunpack.c.l.b16 %v4039
        %v4359 = vunpack.c.h.b16 %v4039
        %v4360 = vunpack.c.l.b16 %v4040
        %v4361 = vunpack.c.h.b16 %v4040
        %v4362 = vunpack.c.l.b16 %v4041
        %v4363 = vunpack.c.h.b16 %v4041
        %v4364 = vunpack.c.l.b16 %v4042
        %v4365 = vunpack.c.h.b16 %v4042
        %v4366 = vunpack.c.l.b16 %v4043
        %v4367 = vunpack.c.h.b16 %v4043
        %v4368 = vunpack.c.l.b16 %v4044
        %v4369 = vunpack.c.h.b16 %v4044
        %v4370 = vunpack.c.l.b16 %v4045
        %v4371 = vunpack.c.h.b16 %v4045
        %v4372 = vunpack.c.l.b16 %v4046
        %v4373 = vunpack.c.h.b16 %v4046
        %v4374 = vunpack.c.l.b16 %v4047
        %v4375 = vunpack.c.h.b16 %v4047
        %v4376 = vunpack.c.l.b16 %v4048
        %v4377 = vunpack.c.h.b16 %v4048
        %v4378 = vunpack.c.l.b16 %v4049
        %v4379 = vunpack.c.h.b16 %v4049
        %v4380 = vunpack.c.l.b16 %v4050
        %v4381 = vunpack.c.h.b16 %v4050
        %v4382 = vunpack.c.l.b16 %v4051
        %v4383 = vunpack.c.h.b16 %v4051
        %v4384 = vunpack.c.l.b16 %v4052
        %v4385 = vunpack.c.h.b16 %v4052
        %v4386 = vunpack.c.l.b16 %v4053
        %v4387 = vunpack.c.h.b16 %v4053
        %v4388 = vunpack.c.l.b16 %v4054
        %v4389 = vunpack.c.h.b16 %v4054
        %v4390 = vunpack.c.l.b16 %v4055
        %v4391 = vunpack.c.h.b16 %v4055
        %v4392 = vunpack.c.l.b16 %v4056
        %v4393 = vunpack.c.h.b16 %v4056
        %v4394 = vunpack.c.l.b16 %v4057
        %v4395 = vunpack.c.h.b16 %v4057
        %v4396 = vunpack.c.l.b16 %v4058
        %v4397 = vunpack.c.h.b16 %v4058
        %v4398 = vunpack.c.l.b16 %v4059
        %v4399 = vunpack.c.h.b16 %v4059
        %v4400 = vunpack.c.l.b16 %v4060
        %v4401 = vunpack.c.h.b16 %v4060
        %v4402 = vunpack.c.l.b16 %v4061
        %v4403 = vunpack.c.h.b16 %v4061
        %v4404 = vunpack.c.l.b16 %v4062
        %v4405 = vunpack.c.h.b16 %v4062
        %v4406 = vunpack.c.l.b16 %v4063
        %v4407 = vunpack.c.h.b16 %v4063
        %v4408 = vunpack.c.l.b16 %v4064
        %v4409 = vunpack.c.h.b16 %v4064
        %v4410 = vunpack.c.l.b16 %v4065
        %v4411 = vunpack.c.h.b16 %v4065
        %v4412 = vunpack.c.l.b16 %v4066
        %v4413 = vunpack.c.h.b16 %v4066
        %v4414 = vunpack.c.l.b16 %v4067
        %v4415 = vunpack.c.h.b16 %v4067
        %v4416 = vunpack.c.l.b16 %v4068
        %v4417 = vunpack.c.h.b16 %v4068
        %v4418 = vunpack.c.l.b16 %v4069
        %v4419 = vunpack.c.h.b16 %v4069
        %v4420 = vunpack.c.l.b16 %v4070
        %v4421 = vunpack.c.h.b16 %v4070
        %v4422 = vunpack.c.l.b16 %v4071
        %v4423 = vunpack.c.h.b16 %v4071
        %v4424 = vunpack.c.l.b16 %v4072
        %v4425 = vunpack.c.h.b16 %v4072
        %v4426 = vunpack.c.l.b16 %v4073
        %v4427 = vunpack.c.h.b16 %v4073
        %v4428 = vunpack.c.l.b16 %v4074
        %v4429 = vunpack.c.h.b16 %v4074
        %v4430 = vunpack.c.l.b16 %v4075
        %v4431 = vunpack.c.h.b16 %v4075
        %v4432 = vunpack.c.l.b16 %v4076
        %v4433 = vunpack.c.h.b16 %v4076
        %v4434 = vunpack.c.l.b16 %v4077
        %v4435 = vunpack.c.h.b16 %v4077
        %v4436 = vunpack.c.l.b16 %v4078
        %v4437 = vunpack.c.h.b16 %v4078
        %v4438 = vunpack.c.l.b16 %v4079
        %v4439 = vunpack.c.h.b16 %v4079
        %v4440 = vunpack.c.l.b16 %v4080
        %v4441 = vunpack.c.h.b16 %v4080
        %v4442 = vunpack.c.l.b16 %v4081
        %v4443 = vunpack.c.h.b16 %v4081
        %v4444 = vunpack.c.l.b16 %v4082
        %v4445 = vunpack.c.h.b16 %v4082
        %v4446 = vunpack.c.l.b16 %v4083
        %v4447 = vunpack.c.h.b16 %v4083
        %v4448 = vunpack.c.l.b16 %v4084
        %v4449 = vunpack.c.h.b16 %v4084
        %v4450 = vunpack.c.l.b16 %v4085
        %v4451 = vunpack.c.h.b16 %v4085
        %v4452 = vunpack.c.l.b16 %v4086
        %v4453 = vunpack.c.h.b16 %v4086
        %v4454 = vunpack.c.l.b16 %v4087
        %v4455 = vunpack.c.h.b16 %v4087
        %v4456 = vunpack.c.l.b16 %v4088
        %v4457 = vunpack.c.h.b16 %v4088
        %v4458 = vunpack.c.l.b16 %v4089
        %v4459 = vunpack.c.h.b16 %v4089
        %v4460 = vunpack.c.l.b16 %v4090
        %v4461 = vunpack.c.h.b16 %v4090
        %v4462 = vunpack.c.l.b16 %v4091
        %v4463 = vunpack.c.h.b16 %v4091
        %v4464 = vunpack.c.l.b16 %v4092
        %v4465 = vunpack.c.h.b16 %v4092
        %v4466 = vunpack.c.l.b16 %v4093
        %v4467 = vunpack.c.h.b16 %v4093
        %v4468 = vunpack.c.l.b16 %v4094
        %v4469 = vunpack.c.h.b16 %v4094
        %v4470 = vunpack.c.l.b16 %v4095
        %v4471 = vunpack.c.h.b16 %v4095
        %v4472 = vunpack.c.l.b16 %v4096
        %v4473 = vunpack.c.h.b16 %v4096
        %v4474 = vunpack.c.l.b16 %v4097
        %v4475 = vunpack.c.h.b16 %v4097
        %v4476 = vunpack.c.l.b16 %v4098
        %v4477 = vunpack.c.h.b16 %v4098
        %v4478 = vunpack.c.l.b16 %v4099
        %v4479 = vunpack.c.h.b16 %v4099
        %v4480 = vunpack.c.l.b16 %v4100
        %v4481 = vunpack.c.h.b16 %v4100
        %v4482 = vunpack.c.l.b16 %v4101
        %v4483 = vunpack.c.h.b16 %v4101
        %v4484 = vunpack.c.l.b16 %v4102
        %v4485 = vunpack.c.h.b16 %v4102
        %v4486 = vunpack.c.l.b16 %v4103
        %v4487 = vunpack.c.h.b16 %v4103
        %v4488 = vunpack.c.l.b16 %v4104
        %v4489 = vunpack.c.h.b16 %v4104
        %v4490 = vunpack.c.l.b16 %v4105
        %v4491 = vunpack.c.h.b16 %v4105
        %v4492 = vunpack.c.l.b16 %v4106
        %v4493 = vunpack.c.h.b16 %v4106
        %v4494 = vunpack.c.l.b16 %v4107
        %v4495 = vunpack.c.h.b16 %v4107
        %v4496 = vunpack.c.l.b16 %v4108
        %v4497 = vunpack.c.h.b16 %v4108
        %v4498 = vunpack.c.l.b16 %v4109
        %v4499 = vunpack.c.h.b16 %v4109
        %v4500 = vunpack.c.l.b16 %v4110
        %v4501 = vunpack.c.h.b16 %v4110
        %v4502 = vunpack.c.l.b16 %v4111
        %v4503 = vunpack.c.h.b16 %v4111
        %v4504 = vunpack.c.l.b16 %v4112
        %v4505 = vunpack.c.h.b16 %v4112
        %v4506 = vunpack.c.l.b16 %v4113
        %v4507 = vunpack.c.h.b16 %v4113
        %v4508 = vunpack.c.l.b16 %v4114
        %v4509 = vunpack.c.h.b16 %v4114
        %v4510 = vunpack.c.l.b16 %v4115
        %v4511 = vunpack.c.h.b16 %v4115
        %v4512 = vpack.c.b16 %v4258, %v4256
        %v4513 = vpack.c.b16 %v4259, %v4257
        %v4514 = vpack.c.b16 %v4262, %v4260
        %v4515 = vpack.c.b16 %v4263, %v4261
        %v4516 = vpack.c.b16 %v4266, %v4264
        %v4517 = vpack.c.b16 %v4267, %v4265
        %v4518 = vpack.c.b16 %v4270, %v4268
        %v4519 = vpack.c.b16 %v4271, %v4269
        %v4520 = vpack.c.b16 %v4274, %v4272
        %v4521 = vpack.c.b16 %v4275, %v4273
        %v4522 = vpack.c.b16 %v4278, %v4276
        %v4523 = vpack.c.b16 %v4279, %v4277
        %v4524 = vpack.c.b16 %v4282, %v4280
        %v4525 = vpack.c.b16 %v4283, %v4281
        %v4526 = vpack.c.b16 %v4286, %v4284
        %v4527 = vpack.c.b16 %v4287, %v4285
        %v4528 = vpack.c.b16 %v4290, %v4288
        %v4529 = vpack.c.b16 %v4291, %v4289
        %v4530 = vpack.c.b16 %v4294, %v4292
        %v4531 = vpack.c.b16 %v4295, %v4293
        %v4532 = vpack.c.b16 %v4298, %v4296
        %v4533 = vpack.c.b16 %v4299, %v4297
        %v4534 = vpack.c.b16 %v4302, %v4300
        %v4535 = vpack.c.b16 %v4303, %v4301
        %v4536 = vpack.c.b16 %v4306, %v4304
        %v4537 = vpack.c.b16 %v4307, %v4305
        %v4538 = vpack.c.b16 %v4310, %v4308
        %v4539 = vpack.c.b16 %v4311, %v4309
        %v4540 = vpack.c.b16 %v4314, %v4312
        %v4541 = vpack.c.b16 %v4315, %v4313
        %v4542 = vpack.c.b16 %v4318, %v4316
        %v4543 = vpack.c.b16 %v4319, %v4317
        %v4544 = vpack.c.b16 %v4322, %v4320
        %v4545 = vpack.c.b16 %v4323, %v4321
        %v4546 = vpack.c.b16 %v4326, %v4324
        %v4547 = vpack.c.b16 %v4327, %v4325
        %v4548 = vpack.c.b16 %v4330, %v4328
        %v4549 = vpack.c.b16 %v4331, %v4329
        %v4550 = vpack.c.b16 %v4334, %v4332
        %v4551 = vpack.c.b16 %v4335, %v4333
        %v4552 = vpack.c.b16 %v4338, %v4336
        %v4553 = vpack.c.b16 %v4339, %v4337
        %v4554 = vpack.c.b16 %v4342, %v4340
        %v4555 = vpack.c.b16 %v4343, %v4341
        %v4556 = vpack.c.b16 %v4346, %v4344
        %v4557 = vpack.c.b16 %v4347, %v4345
        %v4558 = vpack.c.b16 %v4350, %v4348
        %v4559 = vpack.c.b16 %v4351, %v4349
        %v4560 = vpack.c.b16 %v4354, %v4352
        %v4561 = vpack.c.b16 %v4355, %v4353
        %v4562 = vpack.c.b16 %v4358, %v4356
        %v4563 = vpack.c.b16 %v4359, %v4357
        %v4564 = vpack.c.b16 %v4362, %v4360
        %v4565 = vpack.c.b16 %v4363, %v4361
        %v4566 = vpack.c.b16 %v4366, %v4364
        %v4567 = vpack.c.b16 %v4367, %v4365
        %v4568 = vpack.c.b16 %v4370, %v4368
        %v4569 = vpack.c.b16 %v4371, %v4369
        %v4570 = vpack.c.b16 %v4374, %v4372
        %v4571 = vpack.c.b16 %v4375, %v4373
        %v4572 = vpack.c.b16 %v4378, %v4376
        %v4573 = vpack.c.b16 %v4379, %v4377
        %v4574 = vpack.c.b16 %v4382, %v4380
        %v4575 = vpack.c.b16 %v4383, %v4381
        %v4576 = vpack.c.b16 %v4386, %v4384
        %v4577 = vpack.c.b16 %v4387, %v4385
        %v4578 = vpack.c.b16 %v4390, %v4388
        %v4579 = vpack.c.b16 %v4391, %v4389
        %v4580 = vpack.c.b16 %v4394, %v4392
        %v4581 = vpack.c.b16 %v4395, %v4393
        %v4582 = vpack.c.b16 %v4398, %v4396
        %v4583 = vpack.c.b16 %v4399, %v4397
        %v4584 = vpack.c.b16 %v4402, %v4400
        %v4585 = vpack.c.b16 %v4403, %v4401
        %v4586 = vpack.c.b16 %v4406, %v4404
        %v4587 = vpack.c.b16 %v4407, %v4405
        %v4588 = vpack.c.b16 %v4410, %v4408
        %v4589 = vpack.c.b16 %v4411, %v4409
        %v4590 = vpack.c.b16 %v4414, %v4412
        %v4591 = vpack.c.b16 %v4415, %v4413
        %v4592 = vpack.c.b16 %v4418, %v4416
        %v4593 = vpack.c.b16 %v4419, %v4417
        %v4594 = vpack.c.b16 %v4422, %v4420
        %v4595 = vpack.c.b16 %v4423, %v4421
        %v4596 = vpack.c.b16 %v4426, %v4424
        %v4597 = vpack.c.b16 %v4427, %v4425
        %v4598 = vpack.c.b16 %v4430, %v4428
        %v4599 = vpack.c.b16 %v4431, %v4429
        %v4600 = vpack.c.b16 %v4434, %v4432
        %v4601 = vpack.c.b16 %v4435, %v4433
        %v4602 = vpack.c.b16 %v4438, %v4436
        %v4603 = vpack.c.b16 %v4439, %v4437
        %v4604 = vpack.c.b16 %v4442, %v4440
        %v4605 = vpack.c.b16 %v4443, %v4441
        %v4606 = vpack.c.b16 %v4446, %v4444
        %v4607 = vpack.c.b16 %v4447, %v4445
        %v4608 = vpack.c.b16 %v4450, %v4448
        %v4609 = vpack.c.b16 %v4451, %v4449
        %v4610 = vpack.c.b16 %v4454, %v4452
        %v4611 = vpack.c.b16 %v4455, %v4453
        %v4612 = vpack.c.b16 %v4458, %v4456
        %v4613 = vpack.c.b16 %v4459, %v4457
        %v4614 = vpack.c.b16 %v4462, %v4460
        %v4615 = vpack.c.b16 %v4463, %v4461
        %v4616 = vpack.c.b16 %v4466, %v4464
        %v4617 = vpack.c.b16 %v4467, %v4465
        %v4618 = vpack.c.b16 %v4470, %v4468
        %v4619 = vpack.c.b16 %v4471, %v4469
        %v4620 = vpack.c.b16 %v4474, %v4472
        %v4621 = vpack.c.b16 %v4475, %v4473
        %v4622 = vpack.c.b16 %v4478, %v4476
        %v4623 = vpack.c.b16 %v4479, %v4477
        %v4624 = vpack.c.b16 %v4482, %v4480
        %v4625 = vpack.c.b16 %v4483, %v4481
        %v4626 = vpack.c.b16 %v4486, %v4484
        %v4627 = vpack.c.b16 %v4487, %v4485
        %v4628 = vpack.c.b16 %v4490, %v4488
        %v4629 = vpack.c.b16 %v4491, %v4489
        %v4630 = vpack.c.b16 %v4494, %v4492
        %v4631 = vpack.c.b16 %v4495, %v4493
        %v4632 = vpack.c.b16 %v4498, %v4496
        %v4633 = vpack.c.b16 %v4499, %v4497
        %v4634 = vpack.c.b16 %v4502, %v4500
        %v4635 = vpack.c.b16 %v4503, %v4501
        %v4636 = vpack.c.b16 %v4506, %v4504
        %v4637 = vpack.c.b16 %v4507, %v4505
        %v4638 = vpack.c.b16 %v4510, %v4508
        %v4639 = vpack.c.b16 %v4511, %v4509
        %4768 = vmatprep.subr.bf16.mxu0 %v4513
        %4769 = vmatpush1.bf16.msra.mxu0 %v4512
        %4770 = vmatprep.subr.bf16.mxu0 %v4515
        %4771 = vmatpush1.bf16.msra.mxu0 %v4514
        %4772 = vmatprep.subr.bf16.mxu0 %v4517
        %4773 = vmatpush1.bf16.msra.mxu0 %v4516
        %4774 = vmatprep.subr.bf16.mxu0 %v4519
        %4775 = vmatpush1.bf16.msra.mxu0 %v4518
        %4776 = vmatprep.subr.bf16.mxu0 %v4521
        %4777 = vmatpush1.bf16.msra.mxu0 %v4520
        %4778 = vmatprep.subr.bf16.mxu0 %v4523
        %4779 = vmatpush1.bf16.msra.mxu0 %v4522
        %4780 = vmatprep.subr.bf16.mxu0 %v4525
        %4781 = vmatpush1.bf16.msra.mxu0 %v4524
        %4782 = vmatprep.subr.bf16.mxu0 %v4527
        %4783 = vmatpush1.bf16.msra.mxu0 %v4526
        %4784 = vmatprep.subr.bf16.mxu0 %v4529
        %4785 = vmatpush1.bf16.msra.mxu0 %v4528
        %4786 = vmatprep.subr.bf16.mxu0 %v4531
        %4787 = vmatpush1.bf16.msra.mxu0 %v4530
        %4788 = vmatprep.subr.bf16.mxu0 %v4533
        %4789 = vmatpush1.bf16.msra.mxu0 %v4532
        %4790 = vmatprep.subr.bf16.mxu0 %v4535
        %4791 = vmatpush1.bf16.msra.mxu0 %v4534
        %4792 = vmatprep.subr.bf16.mxu0 %v4537
        %4793 = vmatpush1.bf16.msra.mxu0 %v4536
        %4794 = vmatprep.subr.bf16.mxu0 %v4539
        %4795 = vmatpush1.bf16.msra.mxu0 %v4538
        %4796 = vmatprep.subr.bf16.mxu0 %v4541
        %4797 = vmatpush1.bf16.msra.mxu0 %v4540
        %4798 = vmatprep.subr.bf16.mxu0 %v4543
        %4799 = vmatpush1.bf16.msra.mxu0 %v4542
        %4800 = vmatprep.mubr.bf16.mxu0 %v3973
        %4801 = vmatmul.mubr.bf16.gmra.mrb[0].mxu0 %v3972
        %v4802 = vpop.f32.mrb[0].mxu0
        %v4803 = vadd.f32 %v4121, %v4802
        %v4804 = vpop.f32.mrb[0].mxu0
        %v4805 = vadd.f32 %v4125, %v4804
        %v4806 = vpop.f32.mrb[0].mxu0
        %v4807 = vadd.f32 %v4121, %v4806
        %v4808 = vpop.f32.mrb[0].mxu0
        %v4809 = vadd.f32 %v4125, %v4808
        %4810 = vmatprep.mubr.bf16.mxu0 %v3981
        %4811 = vmatmul.mubr.bf16.gmra.mrb[0].mxu0 %v3980
        %v4812 = vpop.f32.mrb[0].mxu0
        %v4813 = vadd.f32 %v4121, %v4812
        %v4814 = vpop.f32.mrb[0].mxu0
        %v4815 = vadd.f32 %v4125, %v4814
        %v4816 = vpop.f32.mrb[0].mxu0
        %v4817 = vpop.f32.mrb[0].mxu0
        %4818 = vdwg.mxu0
        %4819 = vmatprep.subr.bf16.mxu0 %v4545
        %4820 = vmatpush1.bf16.msra.mxu0 %v4544
        %4821 = vmatprep.subr.bf16.mxu0 %v4547
        %4822 = vmatpush1.bf16.msra.mxu0 %v4546
        %4823 = vmatprep.subr.bf16.mxu0 %v4549
        %4824 = vmatpush1.bf16.msra.mxu0 %v4548
        %4825 = vmatprep.subr.bf16.mxu0 %v4551
        %4826 = vmatpush1.bf16.msra.mxu0 %v4550
        %4827 = vmatprep.subr.bf16.mxu0 %v4553
        %4828 = vmatpush1.bf16.msra.mxu0 %v4552
        %4829 = vmatprep.subr.bf16.mxu0 %v4555
        %4830 = vmatpush1.bf16.msra.mxu0 %v4554
        %4831 = vmatprep.subr.bf16.mxu0 %v4557
        %4832 = vmatpush1.bf16.msra.mxu0 %v4556
        %4833 = vmatprep.subr.bf16.mxu0 %v4559
        %4834 = vmatpush1.bf16.msra.mxu0 %v4558
        %4835 = vmatprep.subr.bf16.mxu0 %v4561
        %4836 = vmatpush1.bf16.msra.mxu0 %v4560
        %4837 = vmatprep.subr.bf16.mxu0 %v4563
        %4838 = vmatpush1.bf16.msra.mxu0 %v4562
        %4839 = vmatprep.subr.bf16.mxu0 %v4565
        %4840 = vmatpush1.bf16.msra.mxu0 %v4564
        %4841 = vmatprep.subr.bf16.mxu0 %v4567
        %4842 = vmatpush1.bf16.msra.mxu0 %v4566
        %4843 = vmatprep.subr.bf16.mxu0 %v4569
        %4844 = vmatpush1.bf16.msra.mxu0 %v4568
        %4845 = vmatprep.subr.bf16.mxu0 %v4571
        %4846 = vmatpush1.bf16.msra.mxu0 %v4570
        %4847 = vmatprep.subr.bf16.mxu0 %v4573
        %4848 = vmatpush1.bf16.msra.mxu0 %v4572
        %4849 = vmatprep.subr.bf16.mxu0 %v4575
        %4850 = vmatpush1.bf16.msra.mxu0 %v4574
        %4851 = vmatprep.mubr.bf16.mxu0 %v3975
        %4852 = vmatmul.mubr.bf16.gmra.mrb[0].mxu0 %v3974
        %v4853 = vpop.f32.mrb[0].mxu0
        %v4854 = vadd.f32 %v4803, %v4853
        %v4855 = vpop.f32.mrb[0].mxu0
        %v4856 = vadd.f32 %v4805, %v4855
        %v4857 = vpop.f32.mrb[0].mxu0
        %v4858 = vadd.f32 %v4807, %v4857
        %v4859 = vpop.f32.mrb[0].mxu0
        %v4860 = vadd.f32 %v4809, %v4859
        %4861 = vmatprep.mubr.bf16.mxu0 %v3983
        %4862 = vmatmul.mubr.bf16.gmra.mrb[0].mxu0 %v3982
        %v4863 = vpop.f32.mrb[0].mxu0
        %v4864 = vadd.f32 %v4813, %v4863
        %v4865 = vpop.f32.mrb[0].mxu0
        %v4866 = vadd.f32 %v4815, %v4865
        %v4867 = vpop.f32.mrb[0].mxu0
        %v4868 = vpop.f32.mrb[0].mxu0
        %4869 = vdwg.mxu0
        %4870 = vmatprep.subr.bf16.mxu0 %v4577
        %4871 = vmatpush1.bf16.msra.mxu0 %v4576
        %4872 = vmatprep.subr.bf16.mxu0 %v4579
        %4873 = vmatpush1.bf16.msra.mxu0 %v4578
        %4874 = vmatprep.subr.bf16.mxu0 %v4581
        %4875 = vmatpush1.bf16.msra.mxu0 %v4580
        %4876 = vmatprep.subr.bf16.mxu0 %v4583
        %4877 = vmatpush1.bf16.msra.mxu0 %v4582
        %4878 = vmatprep.subr.bf16.mxu0 %v4585
        %4879 = vmatpush1.bf16.msra.mxu0 %v4584
        %4880 = vmatprep.subr.bf16.mxu0 %v4587
        %4881 = vmatpush1.bf16.msra.mxu0 %v4586
        %4882 = vmatprep.subr.bf16.mxu0 %v4589
        %4883 = vmatpush1.bf16.msra.mxu0 %v4588
        %4884 = vmatprep.subr.bf16.mxu0 %v4591
        %4885 = vmatpush1.bf16.msra.mxu0 %v4590
        %4886 = vmatprep.subr.bf16.mxu0 %v4593
        %4887 = vmatpush1.bf16.msra.mxu0 %v4592
        %4888 = vmatprep.subr.bf16.mxu0 %v4595
        %4889 = vmatpush1.bf16.msra.mxu0 %v4594
        %4890 = vmatprep.subr.bf16.mxu0 %v4597
        %4891 = vmatpush1.bf16.msra.mxu0 %v4596
        %4892 = vmatprep.subr.bf16.mxu0 %v4599
        %4893 = vmatpush1.bf16.msra.mxu0 %v4598
        %4894 = vmatprep.subr.bf16.mxu0 %v4601
        %4895 = vmatpush1.bf16.msra.mxu0 %v4600
        %4896 = vmatprep.subr.bf16.mxu0 %v4603
        %4897 = vmatpush1.bf16.msra.mxu0 %v4602
        %4898 = vmatprep.subr.bf16.mxu0 %v4605
        %4899 = vmatpush1.bf16.msra.mxu0 %v4604
        %4900 = vmatprep.subr.bf16.mxu0 %v4607
        %4901 = vmatpush1.bf16.msra.mxu0 %v4606
        %4902 = vmatprep.mubr.bf16.mxu0 %v3977
        %4903 = vmatmul.mubr.bf16.gmra.mrb[0].mxu0 %v3976
        %v4904 = vpop.f32.mrb[0].mxu0
        %v4905 = vadd.f32 %v4854, %v4904
        %v4906 = vpop.f32.mrb[0].mxu0
        %v4907 = vadd.f32 %v4856, %v4906
        %v4908 = vpop.f32.mrb[0].mxu0
        %v4909 = vadd.f32 %v4858, %v4908
        %v4910 = vpop.f32.mrb[0].mxu0
        %v4911 = vadd.f32 %v4860, %v4910
        %4912 = vmatprep.mubr.bf16.mxu0 %v3985
        %4913 = vmatmul.mubr.bf16.gmra.mrb[0].mxu0 %v3984
        %v4914 = vpop.f32.mrb[0].mxu0
        %v4915 = vadd.f32 %v4864, %v4914
        %v4916 = vpop.f32.mrb[0].mxu0
        %v4917 = vadd.f32 %v4866, %v4916
        %v4918 = vpop.f32.mrb[0].mxu0
        %v4919 = vpop.f32.mrb[0].mxu0
        %4920 = vdwg.mxu0
        %4921 = vmatprep.subr.bf16.mxu0 %v4609
        %4922 = vmatpush1.bf16.msra.mxu0 %v4608
        %4923 = vmatprep.subr.bf16.mxu0 %v4611
        %4924 = vmatpush1.bf16.msra.mxu0 %v4610
        %4925 = vmatprep.subr.bf16.mxu0 %v4613
        %4926 = vmatpush1.bf16.msra.mxu0 %v4612
        %4927 = vmatprep.subr.bf16.mxu0 %v4615
        %4928 = vmatpush1.bf16.msra.mxu0 %v4614
        %4929 = vmatprep.subr.bf16.mxu0 %v4617
        %4930 = vmatpush1.bf16.msra.mxu0 %v4616
        %4931 = vmatprep.subr.bf16.mxu0 %v4619
        %4932 = vmatpush1.bf16.msra.mxu0 %v4618
        %4933 = vmatprep.subr.bf16.mxu0 %v4621
        %4934 = vmatpush1.bf16.msra.mxu0 %v4620
        %4935 = vmatprep.subr.bf16.mxu0 %v4623
        %4936 = vmatpush1.bf16.msra.mxu0 %v4622
        %4937 = vmatprep.subr.bf16.mxu0 %v4625
        %4938 = vmatpush1.bf16.msra.mxu0 %v4624
        %4939 = vmatprep.subr.bf16.mxu0 %v4627
        %4940 = vmatpush1.bf16.msra.mxu0 %v4626
        %4941 = vmatprep.subr.bf16.mxu0 %v4629
        %4942 = vmatpush1.bf16.msra.mxu0 %v4628
        %4943 = vmatprep.subr.bf16.mxu0 %v4631
        %4944 = vmatpush1.bf16.msra.mxu0 %v4630
        %4945 = vmatprep.subr.bf16.mxu0 %v4633
        %4946 = vmatpush1.bf16.msra.mxu0 %v4632
        %4947 = vmatprep.subr.bf16.mxu0 %v4635
        %4948 = vmatpush1.bf16.msra.mxu0 %v4634
        %4949 = vmatprep.subr.bf16.mxu0 %v4637
        %4950 = vmatpush1.bf16.msra.mxu0 %v4636
        %4951 = vmatprep.subr.bf16.mxu0 %v4639
        %4952 = vmatpush1.bf16.msra.mxu0 %v4638
        %4953 = vmatprep.mubr.bf16.mxu0 %v3979
        %4954 = vmatmul.mubr.bf16.gmra.mrb[0].mxu0 %v3978
        %v4955 = vpop.f32.mrb[0].mxu0
        %v4956 = vadd.f32 %v4905, %v4955
        %v4957 = vpop.f32.mrb[0].mxu0
        %v4958 = vadd.f32 %v4907, %v4957
        %v4959 = vpop.f32.mrb[0].mxu0
        %v4960 = vadd.f32 %v4909, %v4959
        %v4961 = vpop.f32.mrb[0].mxu0
        %v4962 = vadd.f32 %v4911, %v4961
        %4963 = vmatprep.mubr.bf16.mxu0 %v3987
        %4964 = vmatmul.mubr.bf16.gmra.mrb[0].mxu0 %v3986
        %v4965 = vpop.f32.mrb[0].mxu0
        %v4966 = vadd.f32 %v4915, %v4965
        %v4967 = vpop.f32.mrb[0].mxu0
        %v4968 = vadd.f32 %v4917, %v4967
        %v4969 = vpop.f32.mrb[0].mxu0
        %v4970 = vpop.f32.mrb[0].mxu0
        %4971 = vdwg.mxu0
        %v4972 = vadd.f32 %v2644, %v4956
        %v4973 = vadd.f32 %v2645, %v4958
        %v4974 = vadd.f32 %v2646, %v4960
        %v4975 = vadd.f32 %v2647, %v4962
        %v4976 = vadd.f32 %v2648, %v4966
        %v4977 = vadd.f32 %v2649, %v4968
        %v4978 = vld [vmem:[%s13] sm:$0x3]
        %v4980 = vlaneseq
        %v4981 = vshrl.u32 %v4980, 7
        %v4982 = vsub.s32 0, %v4981
        %v4983 = vrot.slane %v4978, %v4982
        %v4984 = vlaneseq
        %v4985 = vshrl.u32 %v4984, 7
        %v4986 = vsub.s32 1, %v4985
        %v4987 = vrot.slane %v4978, %v4986
        %v4990 = vadd.f32 %v4972, %v4983
        %v4991 = vadd.f32 %v4973, %v4987
        %v4992 = vadd.f32 %v4974, %v4983
        %v4993 = vadd.f32 %v4975, %v4987
        %v4994 = vadd.f32 %v4976, %v4983
        %v4995 = vadd.f32 %v4977, %v4987
        %4996 = vst [vmem:[%s563] sm:$0xff] %v4990
        %4997 = vst [vmem:[%s563 + $0x8] sm:$0xff] %v4991
        %4998 = vst [vmem:[%s563 + $0x10] sm:$0xff] %v4992
        %4999 = vst [vmem:[%s563 + $0x18] sm:$0xff] %v4993
        %5000 = vst [vmem:[%s563 + $0x20] sm:$0x1] %v4994
        %5001 = vst [vmem:[%s563 + $0x28] sm:$0x1] %v4995
        %p5002 = scmp.lt.s32.totalorder %s33, 1
        %s5003 = scalar_select %p5002, %s33, 1
        %s5004 = smul.addr %s5003, 6
        %s5005 = smul.addr %s5004, 8
        %s5006 = scalar_lea.vmem %s14, %s5005
        %s5007 = sand.u32 %s366, 1
        %s5008 = scalar_lea.sflag [#allocation4], %s5007
        %s5009 = sand.u32 %s366, 1
        %s5010 = scalar_lea.vmem [#allocation10], %s5009
        // Predicated region
        $region93: #{tpu_custom_call.1} parent=75 // pred_check
          %p5011 = pneg %p350
        $region94: #{tpu_custom_call.1} parent=75 // pred_check_branch
          %5013 = sbr.rel (%p5011) target = $region96
        $region95: #{tpu_custom_call.1} parent=75 // pred_region
          _
        $region96: #{tpu_custom_call.1} parent=75 // pred_fallthru
          _
        // Predicated region
        $region97: #{tpu_custom_call.1} parent=75 // pred_check
          %p5014 = pneg %p376
        $region98: #{tpu_custom_call.1} parent=75 // pred_check_branch
          %5016 = sbr.rel (%p5014) target = $region100
        $region99: #{tpu_custom_call.1} parent=75 // pred_region
          %s5018 = ssub.s32 16, 16
          %5019 = vsyncadd %s5008, %s5018
          %s5020 = smul.addr %s33, 16
          %s5021 = scalar_lea.hbm %s15, %s5020
          %s5023 = sshll.u32 %s5010, 4
          %s5024 = int_to_ptr.vmem [resolvable:$true] %s5023
          %5026 = dma.vmem_to_hbm [thread:$0]  %s5024, 16, %s5021, %s5008
        $region100: #{tpu_custom_call.1} parent=75 // pred_fallthru
          _
      $region76: #{tpu_custom_call.1} parent=5 // pred_fallthru
        _
      %p5027 = scmp.le.s32.totalorder 2, %s28
      // Predicated region
      $region101: #{tpu_custom_call.1} parent=5 // pred_check
        %p5028 = pneg %p5027
      $region102: #{tpu_custom_call.1} parent=5 // pred_check_branch
        %5030 = sbr.rel (%p5028) target = $region104
      $region103: #{tpu_custom_call.1} parent=5 // pred_region
        %s5031 = ssub.s32 %s28, 2
        // Predicated region
        $region105: #{tpu_custom_call.1} parent=103 // pred_check
          %p5032 = pneg %p356
        $region106: #{tpu_custom_call.1} parent=103 // pred_check_branch
          %5034 = sbr.rel (%p5032) target = $region108
        $region107: #{tpu_custom_call.1} parent=103 // pred_region
          %p5035 = scmp.lt.s32.totalorder %s34, 1
          %s5036 = scalar_select %p5035, %s34, 1
          %s5037 = smul.addr %s5036, 6
          %s5038 = smul.addr %s5037, 8
          %s5039 = scalar_lea.vmem %s14, %s5038
        $region108: #{tpu_custom_call.1} parent=103 // pred_fallthru
          _
        // Predicated region
        $region109: #{tpu_custom_call.1} parent=103 // pred_check
          %p5040 = pneg %p382
        $region110: #{tpu_custom_call.1} parent=103 // pred_check_branch
          %5042 = sbr.rel (%p5040) target = $region112
        $region111: #{tpu_custom_call.1} parent=103 // pred_region
          %s5043 = sand.u32 %s367, 1
          %s5044 = scalar_lea.sflag [#allocation4], %s5043
          %s5045 = sand.u32 %s367, 1
          %s5046 = scalar_lea.vmem [#allocation10], %s5045
          %5047 = dma.done %s5044, 16
        $region112: #{tpu_custom_call.1} parent=103 // pred_fallthru
          _
      $region104: #{tpu_custom_call.1} parent=5 // pred_fallthru
        _
    $region6: #{tpu_custom_call.1} parent=1 // loop_footer
      %s32 = sadd.s32 1, %s28
    $region7: #{tpu_custom_call.1} parent=1 // loop_footer_branch
      %27 = sbr.rel target = $region3
    $region8: #{tpu_custom_call.1} parent=1 // loop_exit
      _
    %5048 = vsyncpa [#allocation3], 1
    %s5049 = scalar_lea.sflag [#allocation3], 1
    %5050 = vsyncpa %s5049, 1
    %5051 = vsyncpa [#allocation6], 1
    %5052 = vsyncpa [#allocation9], 1
    %5053 = vsyncpa [#allocation4], 1
    %s5054 = scalar_lea.sflag [#allocation4], 1
    %5055 = vsyncpa %s5054, 1

</llo_original>
